<compile_context>
chip_gen: v7x
topology: tpu7x:2x2x1
jax: 0.10.0
libtpu: 0.0.40
codegen_flags: <defaults>
</compile_context>

<pallas_src>
import functools

import jax
import jax.numpy as jnp
from jax import lax
from jax.experimental import pallas as pl
from jax.experimental.pallas import tpu as pltpu


def _s2c_kernel(x_ref, o_ref, *, n):
    """Space-to-channel for one (batch, channel, row, col) tile.

    x_ref: (1, CBLK, HOB*n, WOB*n)        input tile (NCHW)
    o_ref: (1, CBLK, n, n, HOB, WOB)      output tile (dy, dx split out)
    """
    cblk = x_ref.shape[1]
    hob = o_ref.shape[4]
    wob = o_ref.shape[5]
    dt = x_ref.dtype

    # Right permutation P: (WOB*n, WOB*n), P[w, dx*WOB + j] = (w == j*n + dx)
    w_i = lax.broadcasted_iota(jnp.int32, (wob * n, wob), 0)
    j_i = lax.broadcasted_iota(jnp.int32, (wob * n, wob), 1)
    P = jnp.concatenate(
        [(w_i == j_i * n + dx).astype(dt) for dx in range(n)], axis=1)

    # Left permutation L: (HOB*n, HOB*n), L[dy*HOB + i, r] = (r == i*n + dy)
    i_i = lax.broadcasted_iota(jnp.int32, (hob, hob * n), 0)
    r_i = lax.broadcasted_iota(jnp.int32, (hob, hob * n), 1)
    L = jnp.concatenate(
        [(r_i == i_i * n + dy).astype(dt) for dy in range(n)], axis=0)

    for c in range(cblk):                      # small, statically unrolled
        x = x_ref[0, c]                        # (HOB*n, WOB*n), lane-dense load
        y = jnp.dot(L, x, precision=lax.Precision.HIGHEST,
                    preferred_element_type=jnp.float32).astype(dt)
        y = jnp.dot(y, P, precision=lax.Precision.HIGHEST,
                    preferred_element_type=jnp.float32).astype(dt)
        # y[dy*HOB + i, dx*WOB + j] == x[i*n + dy, j*n + dx]
        for dy in range(n):
            for dx in range(n):
                o_ref[0, c, dy, dx] = y[dy * hob:(dy + 1) * hob,
                                        dx * wob:(dx + 1) * wob]


def _largest_divisor(extent, align, limit):
    """Largest d | extent with (d % align == 0 or d == extent) and d <= limit.

    Falls back to the smallest valid divisor (always exists: extent itself),
    so the (8, 128)-or-full-extent BlockSpec rule is always satisfied."""
    valid = [d for d in range(1, extent + 1)
             if extent % d == 0 and (d % align == 0 or d == extent)]
    under = [d for d in valid if d <= limit]
    return max(under) if under else min(valid)


def space_to_channel(x, n=2):
    """Pallas implementation of SpaceToChannel.forward for NCHW input."""
    b, c, h, w = x.shape
    assert h % n == 0 and w % n == 0, "H and W must be divisible by n"
    ho, wo = h // n, w // n
    itemsize = jnp.dtype(x.dtype).itemsize

    # Column block: keep the permutation matrix (WOB*n)^2 modest, lane aligned.
    wob = _largest_divisor(wo, 128, 256)
    # Row block: keep a single-channel input block under ~1 MiB.
    row_budget = max(1, (1 << 20) // max(1, n * n * wob * itemsize))
    hob = _largest_divisor(ho, 8, row_budget)
    # Channel block: short unroll, <= ~1 MiB per input block in total.
    blk_bytes = n * n * hob * wob * itemsize
    cblk = _largest_divisor(c, 1, max(1, min(8, (1 << 20) // max(1, blk_bytes))))

    grid = (b, c // cblk, ho // hob, wo // wob)
    kern = functools.partial(_s2c_kernel, n=n)

    out6 = pl.pallas_call(
        kern,
        out_shape=jax.ShapeDtypeStruct((b, c, n, n, ho, wo), x.dtype),
        grid=grid,
        in_specs=[pl.BlockSpec((1, cblk, hob * n, wob * n),
                               lambda bi, ci, hi, wi: (bi, ci, hi, wi))],
        out_specs=pl.BlockSpec((1, cblk, n, n, hob, wob),
                               lambda bi, ci, hi, wi: (bi, ci, 0, 0, hi, wi)),
        compiler_params=pltpu.CompilerParams(
            dimension_semantics=("parallel", "parallel", "parallel", "parallel")),
    )(x)

    # Merging leading dims only -> layout-preserving (free) reshape.
    return out6.reshape(b, c * n * n, ho, wo)


def space_to_channel_ref(x, n=2):
    """Pure-JAX reference mirroring the PyTorch module exactly."""
    b, c, h, w = x.shape
    y = x.reshape(b, c, h // n, n, w // n, n)
    y = jnp.transpose(y, (0, 1, 3, 5, 2, 4))
    return y.reshape(b, c * n * n, h // n, w // n)


if __name__ == "__main__":
    key = jax.random.PRNGKey(0)
    batch, channels, spatial, n = 2, 4, 16, 2
    x = jax.random.normal(key, (batch, channels, spatial, spatial), jnp.float32)

    out = jax.block_until_ready(space_to_channel(x, n=n))
    ref = space_to_channel_ref(x, n=n)

    assert out.shape == (batch, channels * n * n, spatial // n, spatial // n), out.shape
    assert out.shape == ref.shape, (out.shape, ref.shape)
    # Pure data movement through 0/1 permutation matmuls at HIGHEST precision;
    # tolerance is effectively "exact" for f32.
    assert bool(jnp.allclose(out, ref, rtol=1e-6, atol=1e-6)), "mismatch vs. reference"
    assert bool(jnp.all(jnp.isfinite(out)))
    print("KERNEL_OK")
</pallas_src>

<mosaic_0001>
module attributes {stable_mosaic.version = 11 : i64} {
  func.func @_s2c_kernel(%arg0: i32, %arg1: i32, %arg2: i32, %arg3: i32, %arg4: memref<1x4x16x16xf32, #tpu.memory_space<vmem>>, %arg5: memref<1x4x2x2x8x8xf32, #tpu.memory_space<vmem>>) attributes {dimension_semantics = [#tpu.dimension_semantics<parallel>, #tpu.dimension_semantics<parallel>, #tpu.dimension_semantics<parallel>, #tpu.dimension_semantics<parallel>], iteration_bounds = array<i64: 2, 1, 1, 1>, scalar_prefetch = 0 : i64, scratch_operands = 0 : i64, tpu.core_type = #tpu.core_type<tc>, window_params = [{transform_indices = @transform_0, window_bounds = array<i64: 1, 4, 16, 16>}, {transform_indices = @transform_1, window_bounds = array<i64: 1, 4, 2, 2, 8, 8>}]} {
    %0 = tpu.iota {dimensions = array<i32: 0>} : vector<16x8xi32>
    %1 = tpu.iota {dimensions = array<i32: 1>} : vector<16x8xi32>
    %c2_i32 = arith.constant 2 : i32
    %2 = vector.broadcast %c2_i32 : i32 to vector<16x8xi32>
    %3 = arith.muli %1, %2 : vector<16x8xi32>
    %c0_i32 = arith.constant 0 : i32
    %4 = vector.broadcast %c0_i32 : i32 to vector<16x8xi32>
    %5 = arith.addi %3, %4 : vector<16x8xi32>
    %6 = arith.cmpi eq, %0, %5 : vector<16x8xi32>
    %7 = arith.extui %6 : vector<16x8xi1> to vector<16x8xi32>
    %8 = arith.sitofp %7 : vector<16x8xi32> to vector<16x8xf32>
    %c2_i32_0 = arith.constant 2 : i32
    %9 = vector.broadcast %c2_i32_0 : i32 to vector<16x8xi32>
    %10 = arith.muli %1, %9 : vector<16x8xi32>
    %c1_i32 = arith.constant 1 : i32
    %11 = vector.broadcast %c1_i32 : i32 to vector<16x8xi32>
    %12 = arith.addi %10, %11 : vector<16x8xi32>
    %13 = arith.cmpi eq, %0, %12 : vector<16x8xi32>
    %14 = arith.extui %13 : vector<16x8xi1> to vector<16x8xi32>
    %15 = arith.sitofp %14 : vector<16x8xi32> to vector<16x8xf32>
    %16 = tpu.concatenate %8, %15 in 1 : vector<16x8xf32>, vector<16x8xf32> -> vector<16x16xf32>
    %17 = tpu.iota {dimensions = array<i32: 0>} : vector<8x16xi32>
    %18 = tpu.iota {dimensions = array<i32: 1>} : vector<8x16xi32>
    %c2_i32_1 = arith.constant 2 : i32
    %19 = vector.broadcast %c2_i32_1 : i32 to vector<8x16xi32>
    %20 = arith.muli %17, %19 : vector<8x16xi32>
    %c0_i32_2 = arith.constant 0 : i32
    %21 = vector.broadcast %c0_i32_2 : i32 to vector<8x16xi32>
    %22 = arith.addi %20, %21 : vector<8x16xi32>
    %23 = arith.cmpi eq, %18, %22 : vector<8x16xi32>
    %24 = arith.extui %23 : vector<8x16xi1> to vector<8x16xi32>
    %25 = arith.sitofp %24 : vector<8x16xi32> to vector<8x16xf32>
    %c2_i32_3 = arith.constant 2 : i32
    %26 = vector.broadcast %c2_i32_3 : i32 to vector<8x16xi32>
    %27 = arith.muli %17, %26 : vector<8x16xi32>
    %c1_i32_4 = arith.constant 1 : i32
    %28 = vector.broadcast %c1_i32_4 : i32 to vector<8x16xi32>
    %29 = arith.addi %27, %28 : vector<8x16xi32>
    %30 = arith.cmpi eq, %18, %29 : vector<8x16xi32>
    %31 = arith.extui %30 : vector<8x16xi1> to vector<8x16xi32>
    %32 = arith.sitofp %31 : vector<8x16xi32> to vector<8x16xf32>
    %33 = tpu.concatenate %25, %32 in 0 : vector<8x16xf32>, vector<8x16xf32> -> vector<16x16xf32>
    %c0 = arith.constant 0 : index
    %c0_5 = arith.constant 0 : index
    %c0_6 = arith.constant 0 : index
    %c0_7 = arith.constant 0 : index
    %34 = vector.load %arg4[%c0, %c0_5, %c0_6, %c0_7] : memref<1x4x16x16xf32, #tpu.memory_space<vmem>>, vector<1x1x16x16xf32>
    %35 = vector.shape_cast %34 : vector<1x1x16x16xf32> to vector<16x16xf32>
    %cst = arith.constant dense<0.000000e+00> : vector<16x16xf32>
    %36 = tpu.matmul %33, %35, %cst {dimension_numbers = #tpu.dot_dimension_numbers<[1], [0], [0], [1], [0, 0, 1, 1], [], []>, precision = #tpu.contract_precision<fp32>} : vector<16x16xf32>, vector<16x16xf32>, vector<16x16xf32> -> vector<16x16xf32>
    %cst_8 = arith.constant dense<0.000000e+00> : vector<16x16xf32>
    %37 = tpu.matmul %36, %16, %cst_8 {dimension_numbers = #tpu.dot_dimension_numbers<[1], [0], [0], [1], [0, 0, 1, 1], [], []>, precision = #tpu.contract_precision<fp32>} : vector<16x16xf32>, vector<16x16xf32>, vector<16x16xf32> -> vector<16x16xf32>
    %38 = vector.extract_strided_slice %37 {offsets = [0, 0], sizes = [8, 8], strides = [1, 1]} : vector<16x16xf32> to vector<8x8xf32>
    %c0_9 = arith.constant 0 : index
    %c0_10 = arith.constant 0 : index
    %c0_11 = arith.constant 0 : index
    %c0_12 = arith.constant 0 : index
    %c0_13 = arith.constant 0 : index
    %c0_14 = arith.constant 0 : index
    %39 = vector.load %arg5[%c0_9, %c0_10, %c0_11, %c0_12, %c0_13, %c0_14] : memref<1x4x2x2x8x8xf32, #tpu.memory_space<vmem>>, vector<1x1x1x1x8x8xf32>
    %40 = vector.shape_cast %39 : vector<1x1x1x1x8x8xf32> to vector<8x8xf32>
    %41 = vector.shape_cast %38 : vector<8x8xf32> to vector<1x1x1x1x8x8xf32>
    tpu.vector_store %arg5[%c0_9, %c0_10, %c0_11, %c0_12, %c0_13, %c0_14], %41 {strides = array<i32>} : memref<1x4x2x2x8x8xf32, #tpu.memory_space<vmem>>, vector<1x1x1x1x8x8xf32>,
    %42 = vector.extract_strided_slice %37 {offsets = [0, 8], sizes = [8, 8], strides = [1, 1]} : vector<16x16xf32> to vector<8x8xf32>
    %c0_15 = arith.constant 0 : index
    %c0_16 = arith.constant 0 : index
    %c0_17 = arith.constant 0 : index
    %c1 = arith.constant 1 : index
    %c0_18 = arith.constant 0 : index
    %c0_19 = arith.constant 0 : index
    %43 = vector.load %arg5[%c0_15, %c0_16, %c0_17, %c1, %c0_18, %c0_19] : memref<1x4x2x2x8x8xf32, #tpu.memory_space<vmem>>, vector<1x1x1x1x8x8xf32>
    %44 = vector.shape_cast %43 : vector<1x1x1x1x8x8xf32> to vector<8x8xf32>
    %45 = vector.shape_cast %42 : vector<8x8xf32> to vector<1x1x1x1x8x8xf32>
    tpu.vector_store %arg5[%c0_15, %c0_16, %c0_17, %c1, %c0_18, %c0_19], %45 {strides = array<i32>} : memref<1x4x2x2x8x8xf32, #tpu.memory_space<vmem>>, vector<1x1x1x1x8x8xf32>,
    %46 = vector.extract_strided_slice %37 {offsets = [8, 0], sizes = [8, 8], strides = [1, 1]} : vector<16x16xf32> to vector<8x8xf32>
    %c0_20 = arith.constant 0 : index
    %c0_21 = arith.constant 0 : index
    %c1_22 = arith.constant 1 : index
    %c0_23 = arith.constant 0 : index
    %c0_24 = arith.constant 0 : index
    %c0_25 = arith.constant 0 : index
    %47 = vector.load %arg5[%c0_20, %c0_21, %c1_22, %c0_23, %c0_24, %c0_25] : memref<1x4x2x2x8x8xf32, #tpu.memory_space<vmem>>, vector<1x1x1x1x8x8xf32>
    %48 = vector.shape_cast %47 : vector<1x1x1x1x8x8xf32> to vector<8x8xf32>
    %49 = vector.shape_cast %46 : vector<8x8xf32> to vector<1x1x1x1x8x8xf32>
    tpu.vector_store %arg5[%c0_20, %c0_21, %c1_22, %c0_23, %c0_24, %c0_25], %49 {strides = array<i32>} : memref<1x4x2x2x8x8xf32, #tpu.memory_space<vmem>>, vector<1x1x1x1x8x8xf32>,
    %50 = vector.extract_strided_slice %37 {offsets = [8, 8], sizes = [8, 8], strides = [1, 1]} : vector<16x16xf32> to vector<8x8xf32>
    %c0_26 = arith.constant 0 : index
    %c0_27 = arith.constant 0 : index
    %c1_28 = arith.constant 1 : index
    %c1_29 = arith.constant 1 : index
    %c0_30 = arith.constant 0 : index
    %c0_31 = arith.constant 0 : index
    %51 = vector.load %arg5[%c0_26, %c0_27, %c1_28, %c1_29, %c0_30, %c0_31] : memref<1x4x2x2x8x8xf32, #tpu.memory_space<vmem>>, vector<1x1x1x1x8x8xf32>
    %52 = vector.shape_cast %51 : vector<1x1x1x1x8x8xf32> to vector<8x8xf32>
    %53 = vector.shape_cast %50 : vector<8x8xf32> to vector<1x1x1x1x8x8xf32>
    tpu.vector_store %arg5[%c0_26, %c0_27, %c1_28, %c1_29, %c0_30, %c0_31], %53 {strides = array<i32>} : memref<1x4x2x2x8x8xf32, #tpu.memory_space<vmem>>, vector<1x1x1x1x8x8xf32>,
    %c0_32 = arith.constant 0 : index
    %c1_33 = arith.constant 1 : index
    %c0_34 = arith.constant 0 : index
    %c0_35 = arith.constant 0 : index
    %54 = vector.load %arg4[%c0_32, %c1_33, %c0_34, %c0_35] : memref<1x4x16x16xf32, #tpu.memory_space<vmem>>, vector<1x1x16x16xf32>
    %55 = vector.shape_cast %54 : vector<1x1x16x16xf32> to vector<16x16xf32>
    %cst_36 = arith.constant dense<0.000000e+00> : vector<16x16xf32>
    %56 = tpu.matmul %33, %55, %cst_36 {dimension_numbers = #tpu.dot_dimension_numbers<[1], [0], [0], [1], [0, 0, 1, 1], [], []>, precision = #tpu.contract_precision<fp32>} : vector<16x16xf32>, vector<16x16xf32>, vector<16x16xf32> -> vector<16x16xf32>
    %cst_37 = arith.constant dense<0.000000e+00> : vector<16x16xf32>
    %57 = tpu.matmul %56, %16, %cst_37 {dimension_numbers = #tpu.dot_dimension_numbers<[1], [0], [0], [1], [0, 0, 1, 1], [], []>, precision = #tpu.contract_precision<fp32>} : vector<16x16xf32>, vector<16x16xf32>, vector<16x16xf32> -> vector<16x16xf32>
    %58 = vector.extract_strided_slice %57 {offsets = [0, 0], sizes = [8, 8], strides = [1, 1]} : vector<16x16xf32> to vector<8x8xf32>
    %c0_38 = arith.constant 0 : index
    %c1_39 = arith.constant 1 : index
    %c0_40 = arith.constant 0 : index
    %c0_41 = arith.constant 0 : index
    %c0_42 = arith.constant 0 : index
    %c0_43 = arith.constant 0 : index
    %59 = vector.load %arg5[%c0_38, %c1_39, %c0_40, %c0_41, %c0_42, %c0_43] : memref<1x4x2x2x8x8xf32, #tpu.memory_space<vmem>>, vector<1x1x1x1x8x8xf32>
    %60 = vector.shape_cast %59 : vector<1x1x1x1x8x8xf32> to vector<8x8xf32>
    %61 = vector.shape_cast %58 : vector<8x8xf32> to vector<1x1x1x1x8x8xf32>
    tpu.vector_store %arg5[%c0_38, %c1_39, %c0_40, %c0_41, %c0_42, %c0_43], %61 {strides = array<i32>} : memref<1x4x2x2x8x8xf32, #tpu.memory_space<vmem>>, vector<1x1x1x1x8x8xf32>,
    %62 = vector.extract_strided_slice %57 {offsets = [0, 8], sizes = [8, 8], strides = [1, 1]} : vector<16x16xf32> to vector<8x8xf32>
    %c0_44 = arith.constant 0 : index
    %c1_45 = arith.constant 1 : index
    %c0_46 = arith.constant 0 : index
    %c1_47 = arith.constant 1 : index
    %c0_48 = arith.constant 0 : index
    %c0_49 = arith.constant 0 : index
    %63 = vector.load %arg5[%c0_44, %c1_45, %c0_46, %c1_47, %c0_48, %c0_49] : memref<1x4x2x2x8x8xf32, #tpu.memory_space<vmem>>, vector<1x1x1x1x8x8xf32>
    %64 = vector.shape_cast %63 : vector<1x1x1x1x8x8xf32> to vector<8x8xf32>
    %65 = vector.shape_cast %62 : vector<8x8xf32> to vector<1x1x1x1x8x8xf32>
    tpu.vector_store %arg5[%c0_44, %c1_45, %c0_46, %c1_47, %c0_48, %c0_49], %65 {strides = array<i32>} : memref<1x4x2x2x8x8xf32, #tpu.memory_space<vmem>>, vector<1x1x1x1x8x8xf32>,
    %66 = vector.extract_strided_slice %57 {offsets = [8, 0], sizes = [8, 8], strides = [1, 1]} : vector<16x16xf32> to vector<8x8xf32>
    %c0_50 = arith.constant 0 : index
    %c1_51 = arith.constant 1 : index
    %c1_52 = arith.constant 1 : index
    %c0_53 = arith.constant 0 : index
    %c0_54 = arith.constant 0 : index
    %c0_55 = arith.constant 0 : index
    %67 = vector.load %arg5[%c0_50, %c1_51, %c1_52, %c0_53, %c0_54, %c0_55] : memref<1x4x2x2x8x8xf32, #tpu.memory_space<vmem>>, vector<1x1x1x1x8x8xf32>
    %68 = vector.shape_cast %67 : vector<1x1x1x1x8x8xf32> to vector<8x8xf32>
    %69 = vector.shape_cast %66 : vector<8x8xf32> to vector<1x1x1x1x8x8xf32>
    tpu.vector_store %arg5[%c0_50, %c1_51, %c1_52, %c0_53, %c0_54, %c0_55], %69 {strides = array<i32>} : memref<1x4x2x2x8x8xf32, #tpu.memory_space<vmem>>, vector<1x1x1x1x8x8xf32>,
    %70 = vector.extract_strided_slice %57 {offsets = [8, 8], sizes = [8, 8], strides = [1, 1]} : vector<16x16xf32> to vector<8x8xf32>
    %c0_56 = arith.constant 0 : index
    %c1_57 = arith.constant 1 : index
    %c1_58 = arith.constant 1 : index
    %c1_59 = arith.constant 1 : index
    %c0_60 = arith.constant 0 : index
    %c0_61 = arith.constant 0 : index
    %71 = vector.load %arg5[%c0_56, %c1_57, %c1_58, %c1_59, %c0_60, %c0_61] : memref<1x4x2x2x8x8xf32, #tpu.memory_space<vmem>>, vector<1x1x1x1x8x8xf32>
    %72 = vector.shape_cast %71 : vector<1x1x1x1x8x8xf32> to vector<8x8xf32>
    %73 = vector.shape_cast %70 : vector<8x8xf32> to vector<1x1x1x1x8x8xf32>
    tpu.vector_store %arg5[%c0_56, %c1_57, %c1_58, %c1_59, %c0_60, %c0_61], %73 {strides = array<i32>} : memref<1x4x2x2x8x8xf32, #tpu.memory_space<vmem>>, vector<1x1x1x1x8x8xf32>,
    %c0_62 = arith.constant 0 : index
    %c2 = arith.constant 2 : index
    %c0_63 = arith.constant 0 : index
    %c0_64 = arith.constant 0 : index
    %74 = vector.load %arg4[%c0_62, %c2, %c0_63, %c0_64] : memref<1x4x16x16xf32, #tpu.memory_space<vmem>>, vector<1x1x16x16xf32>
    %75 = vector.shape_cast %74 : vector<1x1x16x16xf32> to vector<16x16xf32>
    %cst_65 = arith.constant dense<0.000000e+00> : vector<16x16xf32>
    %76 = tpu.matmul %33, %75, %cst_65 {dimension_numbers = #tpu.dot_dimension_numbers<[1], [0], [0], [1], [0, 0, 1, 1], [], []>, precision = #tpu.contract_precision<fp32>} : vector<16x16xf32>, vector<16x16xf32>, vector<16x16xf32> -> vector<16x16xf32>
    %cst_66 = arith.constant dense<0.000000e+00> : vector<16x16xf32>
    %77 = tpu.matmul %76, %16, %cst_66 {dimension_numbers = #tpu.dot_dimension_numbers<[1], [0], [0], [1], [0, 0, 1, 1], [], []>, precision = #tpu.contract_precision<fp32>} : vector<16x16xf32>, vector<16x16xf32>, vector<16x16xf32> -> vector<16x16xf32>
    %78 = vector.extract_strided_slice %77 {offsets = [0, 0], sizes = [8, 8], strides = [1, 1]} : vector<16x16xf32> to vector<8x8xf32>
    %c0_67 = arith.constant 0 : index
    %c2_68 = arith.constant 2 : index
    %c0_69 = arith.constant 0 : index
    %c0_70 = arith.constant 0 : index
    %c0_71 = arith.constant 0 : index
    %c0_72 = arith.constant 0 : index
    %79 = vector.load %arg5[%c0_67, %c2_68, %c0_69, %c0_70, %c0_71, %c0_72] : memref<1x4x2x2x8x8xf32, #tpu.memory_space<vmem>>, vector<1x1x1x1x8x8xf32>
    %80 = vector.shape_cast %79 : vector<1x1x1x1x8x8xf32> to vector<8x8xf32>
    %81 = vector.shape_cast %78 : vector<8x8xf32> to vector<1x1x1x1x8x8xf32>
    tpu.vector_store %arg5[%c0_67, %c2_68, %c0_69, %c0_70, %c0_71, %c0_72], %81 {strides = array<i32>} : memref<1x4x2x2x8x8xf32, #tpu.memory_space<vmem>>, vector<1x1x1x1x8x8xf32>,
    %82 = vector.extract_strided_slice %77 {offsets = [0, 8], sizes = [8, 8], strides = [1, 1]} : vector<16x16xf32> to vector<8x8xf32>
    %c0_73 = arith.constant 0 : index
    %c2_74 = arith.constant 2 : index
    %c0_75 = arith.constant 0 : index
    %c1_76 = arith.constant 1 : index
    %c0_77 = arith.constant 0 : index
    %c0_78 = arith.constant 0 : index
    %83 = vector.load %arg5[%c0_73, %c2_74, %c0_75, %c1_76, %c0_77, %c0_78] : memref<1x4x2x2x8x8xf32, #tpu.memory_space<vmem>>, vector<1x1x1x1x8x8xf32>
    %84 = vector.shape_cast %83 : vector<1x1x1x1x8x8xf32> to vector<8x8xf32>
    %85 = vector.shape_cast %82 : vector<8x8xf32> to vector<1x1x1x1x8x8xf32>
    tpu.vector_store %arg5[%c0_73, %c2_74, %c0_75, %c1_76, %c0_77, %c0_78], %85 {strides = array<i32>} : memref<1x4x2x2x8x8xf32, #tpu.memory_space<vmem>>, vector<1x1x1x1x8x8xf32>,
    %86 = vector.extract_strided_slice %77 {offsets = [8, 0], sizes = [8, 8], strides = [1, 1]} : vector<16x16xf32> to vector<8x8xf32>
    %c0_79 = arith.constant 0 : index
    %c2_80 = arith.constant 2 : index
    %c1_81 = arith.constant 1 : index
    %c0_82 = arith.constant 0 : index
    %c0_83 = arith.constant 0 : index
    %c0_84 = arith.constant 0 : index
    %87 = vector.load %arg5[%c0_79, %c2_80, %c1_81, %c0_82, %c0_83, %c0_84] : memref<1x4x2x2x8x8xf32, #tpu.memory_space<vmem>>, vector<1x1x1x1x8x8xf32>
    %88 = vector.shape_cast %87 : vector<1x1x1x1x8x8xf32> to vector<8x8xf32>
    %89 = vector.shape_cast %86 : vector<8x8xf32> to vector<1x1x1x1x8x8xf32>
    tpu.vector_store %arg5[%c0_79, %c2_80, %c1_81, %c0_82, %c0_83, %c0_84], %89 {strides = array<i32>} : memref<1x4x2x2x8x8xf32, #tpu.memory_space<vmem>>, vector<1x1x1x1x8x8xf32>,
    %90 = vector.extract_strided_slice %77 {offsets = [8, 8], sizes = [8, 8], strides = [1, 1]} : vector<16x16xf32> to vector<8x8xf32>
    %c0_85 = arith.constant 0 : index
    %c2_86 = arith.constant 2 : index
    %c1_87 = arith.constant 1 : index
    %c1_88 = arith.constant 1 : index
    %c0_89 = arith.constant 0 : index
    %c0_90 = arith.constant 0 : index
    %91 = vector.load %arg5[%c0_85, %c2_86, %c1_87, %c1_88, %c0_89, %c0_90] : memref<1x4x2x2x8x8xf32, #tpu.memory_space<vmem>>, vector<1x1x1x1x8x8xf32>
    %92 = vector.shape_cast %91 : vector<1x1x1x1x8x8xf32> to vector<8x8xf32>
    %93 = vector.shape_cast %90 : vector<8x8xf32> to vector<1x1x1x1x8x8xf32>
    tpu.vector_store %arg5[%c0_85, %c2_86, %c1_87, %c1_88, %c0_89, %c0_90], %93 {strides = array<i32>} : memref<1x4x2x2x8x8xf32, #tpu.memory_space<vmem>>, vector<1x1x1x1x8x8xf32>,
    %c0_91 = arith.constant 0 : index
    %c3 = arith.constant 3 : index
    %c0_92 = arith.constant 0 : index
    %c0_93 = arith.constant 0 : index
    %94 = vector.load %arg4[%c0_91, %c3, %c0_92, %c0_93] : memref<1x4x16x16xf32, #tpu.memory_space<vmem>>, vector<1x1x16x16xf32>
    %95 = vector.shape_cast %94 : vector<1x1x16x16xf32> to vector<16x16xf32>
    %cst_94 = arith.constant dense<0.000000e+00> : vector<16x16xf32>
    %96 = tpu.matmul %33, %95, %cst_94 {dimension_numbers = #tpu.dot_dimension_numbers<[1], [0], [0], [1], [0, 0, 1, 1], [], []>, precision = #tpu.contract_precision<fp32>} : vector<16x16xf32>, vector<16x16xf32>, vector<16x16xf32> -> vector<16x16xf32>
    %cst_95 = arith.constant dense<0.000000e+00> : vector<16x16xf32>
    %97 = tpu.matmul %96, %16, %cst_95 {dimension_numbers = #tpu.dot_dimension_numbers<[1], [0], [0], [1], [0, 0, 1, 1], [], []>, precision = #tpu.contract_precision<fp32>} : vector<16x16xf32>, vector<16x16xf32>, vector<16x16xf32> -> vector<16x16xf32>
    %98 = vector.extract_strided_slice %97 {offsets = [0, 0], sizes = [8, 8], strides = [1, 1]} : vector<16x16xf32> to vector<8x8xf32>
    %c0_96 = arith.constant 0 : index
    %c3_97 = arith.constant 3 : index
    %c0_98 = arith.constant 0 : index
    %c0_99 = arith.constant 0 : index
    %c0_100 = arith.constant 0 : index
    %c0_101 = arith.constant 0 : index
    %99 = vector.load %arg5[%c0_96, %c3_97, %c0_98, %c0_99, %c0_100, %c0_101] : memref<1x4x2x2x8x8xf32, #tpu.memory_space<vmem>>, vector<1x1x1x1x8x8xf32>
    %100 = vector.shape_cast %99 : vector<1x1x1x1x8x8xf32> to vector<8x8xf32>
    %101 = vector.shape_cast %98 : vector<8x8xf32> to vector<1x1x1x1x8x8xf32>
    tpu.vector_store %arg5[%c0_96, %c3_97, %c0_98, %c0_99, %c0_100, %c0_101], %101 {strides = array<i32>} : memref<1x4x2x2x8x8xf32, #tpu.memory_space<vmem>>, vector<1x1x1x1x8x8xf32>,
    %102 = vector.extract_strided_slice %97 {offsets = [0, 8], sizes = [8, 8], strides = [1, 1]} : vector<16x16xf32> to vector<8x8xf32>
    %c0_102 = arith.constant 0 : index
    %c3_103 = arith.constant 3 : index
    %c0_104 = arith.constant 0 : index
    %c1_105 = arith.constant 1 : index
    %c0_106 = arith.constant 0 : index
    %c0_107 = arith.constant 0 : index
    %103 = vector.load %arg5[%c0_102, %c3_103, %c0_104, %c1_105, %c0_106, %c0_107] : memref<1x4x2x2x8x8xf32, #tpu.memory_space<vmem>>, vector<1x1x1x1x8x8xf32>
    %104 = vector.shape_cast %103 : vector<1x1x1x1x8x8xf32> to vector<8x8xf32>
    %105 = vector.shape_cast %102 : vector<8x8xf32> to vector<1x1x1x1x8x8xf32>
    tpu.vector_store %arg5[%c0_102, %c3_103, %c0_104, %c1_105, %c0_106, %c0_107], %105 {strides = array<i32>} : memref<1x4x2x2x8x8xf32, #tpu.memory_space<vmem>>, vector<1x1x1x1x8x8xf32>,
    %106 = vector.extract_strided_slice %97 {offsets = [8, 0], sizes = [8, 8], strides = [1, 1]} : vector<16x16xf32> to vector<8x8xf32>
    %c0_108 = arith.constant 0 : index
    %c3_109 = arith.constant 3 : index
    %c1_110 = arith.constant 1 : index
    %c0_111 = arith.constant 0 : index
    %c0_112 = arith.constant 0 : index
    %c0_113 = arith.constant 0 : index
    %107 = vector.load %arg5[%c0_108, %c3_109, %c1_110, %c0_111, %c0_112, %c0_113] : memref<1x4x2x2x8x8xf32, #tpu.memory_space<vmem>>, vector<1x1x1x1x8x8xf32>
    %108 = vector.shape_cast %107 : vector<1x1x1x1x8x8xf32> to vector<8x8xf32>
    %109 = vector.shape_cast %106 : vector<8x8xf32> to vector<1x1x1x1x8x8xf32>
    tpu.vector_store %arg5[%c0_108, %c3_109, %c1_110, %c0_111, %c0_112, %c0_113], %109 {strides = array<i32>} : memref<1x4x2x2x8x8xf32, #tpu.memory_space<vmem>>, vector<1x1x1x1x8x8xf32>,
    %110 = vector.extract_strided_slice %97 {offsets = [8, 8], sizes = [8, 8], strides = [1, 1]} : vector<16x16xf32> to vector<8x8xf32>
    %c0_114 = arith.constant 0 : index
    %c3_115 = arith.constant 3 : index
    %c1_116 = arith.constant 1 : index
    %c1_117 = arith.constant 1 : index
    %c0_118 = arith.constant 0 : index
    %c0_119 = arith.constant 0 : index
    %111 = vector.load %arg5[%c0_114, %c3_115, %c1_116, %c1_117, %c0_118, %c0_119] : memref<1x4x2x2x8x8xf32, #tpu.memory_space<vmem>>, vector<1x1x1x1x8x8xf32>
    %112 = vector.shape_cast %111 : vector<1x1x1x1x8x8xf32> to vector<8x8xf32>
    %113 = vector.shape_cast %110 : vector<8x8xf32> to vector<1x1x1x1x8x8xf32>
    tpu.vector_store %arg5[%c0_114, %c3_115, %c1_116, %c1_117, %c0_118, %c0_119], %113 {strides = array<i32>} : memref<1x4x2x2x8x8xf32, #tpu.memory_space<vmem>>, vector<1x1x1x1x8x8xf32>,
    return
  }
  func.func @transform_0(%arg0: i32, %arg1: i32, %arg2: i32, %arg3: i32) -> (i32, i32, i32, i32) {
    %c0_i32 = arith.constant 0 : i32
    return %arg0, %arg1, %arg2, %arg3 : i32, i32, i32, i32
  }
  func.func @transform_1(%arg0: i32, %arg1: i32, %arg2: i32, %arg3: i32) -> (i32, i32, i32, i32, i32, i32) {
    %c0_i32 = arith.constant 0 : i32
    %c0_i32_0 = arith.constant 0 : i32
    %c0_i32_1 = arith.constant 0 : i32
    return %arg0, %arg1, %c0_i32, %c0_i32_0, %arg2, %arg3 : i32, i32, i32, i32, i32, i32
  }
}

</mosaic_0001>

<llo_original>
// kernel: tpu_custom_call.1
$region0: #{tpu_custom_call.1}
  #allocation0 [shape = 'u32[]', space=smem, size = 0x4, offset = 0x4, fixed_abs, tag = 'smem constant byte address 0x4 - core index']
  #allocation1 [shape = 'u32[144,128]{1,0:T(1,128)}', space=vmem, size = 0x12000, scoped, tag = 'internal scratch']
  %s0 = inlined_call_operand.hbm [shape: f32[2,4,16,16], index: 0, kind: input, shape index: {}]
  %s1 = inlined_call_operand.hbm [shape: f32[2,4,2,2,8,8], index: 1, kind: output, shape index: {}]
  %s2 = sld [smem:[#allocation0]]
  $region41: #{tpu_custom_call.1} parent=0
    _
  %s4 = ssub.s32 1, %s2
  %s5 = scalar_select 0, %s4, %s2
  $region1: #{tpu_custom_call.1} parent=0
    #allocation2 [shape = 'u8[65536]{0}', space=vmem, size = 0x10000, scoped, tag = 'input window, operand 0']
    #allocation3 [shape = 's32[2]{0}', space=sflag, size = 0x8, scoped, tag = 'scoped memory for tpu_custom_call.1']
    #allocation4 [shape = 's32[2]{0}', space=sflag, size = 0x8, scoped, tag = 'scoped memory for tpu_custom_call.1']
    #allocation5 [shape = 'u8[131072]{0}', space=vmem, size = 0x20000, scoped, tag = 'output window, operand 0']
    %6 = vsyncpa [#allocation3], 0
    %s7 = scalar_lea.sflag [#allocation3], 1
    %8 = vsyncpa %s7, 0
    %9 = vsyncpa [#allocation4], 0
    %s10 = scalar_lea.sflag [#allocation4], 1
    %11 = vsyncpa %s10, 0
    loop: start=0, step=1, limit=4
    $region2: #{tpu_custom_call.1} parent=1 // loop_pre_header
      _
    $region3: #{tpu_custom_call.1} parent=1 // loop_header
      %s13 = sphi 0, %s17
      %p14 = scmp.ge.s32.totalorder %s13, 4
      %s20 = sphi 0, %s46
      %s21 = sphi 0, %s42
      %s22 = sphi 0, %s38
      %s23 = sphi 0, %s34
      %s24 = sphi 0, %s20
      %s25 = sphi 0, %s21
      %s26 = sphi 0, %s22
      %s27 = sphi 0, %s23
      %s28 = sphi 0, %s24
      %s29 = sphi 0, %s25
      %s30 = sphi 0, %s26
      %s31 = sphi 0, %s27
      %s55 = sphi 0, %s57
      %s58 = sphi 0, %s55
      %s59 = sphi 0, %s58
      %s75 = sphi 0, %s59
      %s87 = sphi 0, %s89
      %s90 = sphi 0, %s87
      %s91 = sphi 0, %s90
      %s107 = sphi 0, %s91
    $region4: #{tpu_custom_call.1} parent=1 // loop_header_branch
      %16 = sbr.rel (%p14) target = $region8
    $region5: #{tpu_custom_call.1} parent=1 // loop_body
      %s18 = ssub.s32 %s13, 1
      %s19 = ssub.s32 %s13, 2
      %s32 = sadd.s32 1, %s23
      %p33 = scmp.ge.s32.totalorder %s32, 1
      %s34 = scalar_select %p33, 0, %s32
      %s35 = sadd.s32 1, %s22
      %s36 = scalar_select %p33, %s35, %s22
      %p37 = scmp.ge.s32.totalorder %s36, 1
      %s38 = scalar_select %p37, 0, %s36
      %s39 = sadd.s32 1, %s21
      %s40 = scalar_select %p37, %s39, %s21
      %p41 = scmp.ge.s32.totalorder %s40, 1
      %s42 = scalar_select %p41, 0, %s40
      %s43 = sadd.s32 1, %s20
      %s44 = scalar_select %p41, %s43, %s20
      %p45 = scmp.ge.s32.totalorder %s44, 2
      %s46 = scalar_select %p45, 0, %s44
      %s47 = ssub.s32 %s20, %s46
      %s48 = ssub.s32 %s21, %s42
      %s49 = sor.u32 %s47, %s48
      %s50 = ssub.s32 %s22, %s38
      %s51 = sor.u32 %s49, %s50
      %s52 = ssub.s32 %s23, %s34
      %s53 = sor.u32 %s51, %s52
      %p54 = scmp.eq.s32.totalorder %s53, 0
      %s56 = sadd.s32 %s55, 1
      %s57 = scalar_select %p54, %s55, %s56
      %p60 = pneg %p54
      %p61 = scmp.eq.s32.totalorder %s13, 1
      %p62 = por %p60, %p61
      %p63 = scmp.ne.s32.totalorder %s55, %s58
      %p64 = scmp.eq.s32.totalorder %s13, 0
      %p65 = por %p63, %p64
      %p66 = scmp.ne.s32.totalorder %s55, %s58
      %p67 = scmp.eq.s32.totalorder %s18, 1
      %p68 = por %p66, %p67
      %p69 = scmp.ne.s32.totalorder %s58, %s59
      %p70 = scmp.eq.s32.totalorder %s18, 0
      %p71 = por %p69, %p70
      %p72 = scmp.ne.s32.totalorder %s58, %s59
      %p73 = scmp.eq.s32.totalorder %s19, 1
      %p74 = por %p72, %p73
      %p76 = scmp.ne.s32.totalorder %s59, %s75
      %p77 = scmp.eq.s32.totalorder %s19, 0
      %p78 = por %p76, %p77
      %s79 = ssub.s32 %s20, %s46
      %s80 = ssub.s32 %s21, %s42
      %s81 = sor.u32 %s79, %s80
      %s82 = ssub.s32 %s22, %s38
      %s83 = sor.u32 %s81, %s82
      %s84 = ssub.s32 %s23, %s34
      %s85 = sor.u32 %s83, %s84
      %p86 = scmp.eq.s32.totalorder %s85, 0
      %s88 = sadd.s32 %s87, 1
      %s89 = scalar_select %p86, %s87, %s88
      %p92 = pneg %p86
      %p93 = scmp.eq.s32.totalorder %s13, 1
      %p94 = por %p92, %p93
      %p95 = scmp.ne.s32.totalorder %s87, %s90
      %p96 = scmp.eq.s32.totalorder %s13, 0
      %p97 = por %p95, %p96
      %p98 = scmp.ne.s32.totalorder %s87, %s90
      %p99 = scmp.eq.s32.totalorder %s18, 1
      %p100 = por %p98, %p99
      %p101 = scmp.ne.s32.totalorder %s90, %s91
      %p102 = scmp.eq.s32.totalorder %s18, 0
      %p103 = por %p101, %p102
      %p104 = scmp.ne.s32.totalorder %s90, %s91
      %p105 = scmp.eq.s32.totalorder %s19, 1
      %p106 = por %p104, %p105
      %p108 = scmp.ne.s32.totalorder %s91, %s107
      %p109 = scmp.eq.s32.totalorder %s19, 0
      %p110 = por %p108, %p109
      %p111 = scmp.le.s32.totalorder 1, %s13
      %p112 = scmp.lt.s32.totalorder %s13, 3
      %p113 = pnand %p111, %p112
      %p114 = pneg %p113
      // Predicated region
      $region9: #{tpu_custom_call.1} parent=5 // pred_check
        _
      $region10: #{tpu_custom_call.1} parent=5 // pred_check_branch
        %116 = sbr.rel (%p113) target = $region12
      $region11: #{tpu_custom_call.1} parent=5 // pred_region
        %s117 = ssub.s32 %s13, 1
      $region12: #{tpu_custom_call.1} parent=5 // pred_fallthru
        _
      %p118 = scmp.lt.s32.totalorder %s13, 2
      // Predicated region
      $region13: #{tpu_custom_call.1} parent=5 // pred_check
        %p119 = pneg %p118
      $region14: #{tpu_custom_call.1} parent=5 // pred_check_branch
        %121 = sbr.rel (%p119) target = $region16
      $region15: #{tpu_custom_call.1} parent=5 // pred_region
        // Predicated region
        $region17: #{tpu_custom_call.1} parent=15 // pred_check
          %p122 = pneg %p65
        $region18: #{tpu_custom_call.1} parent=15 // pred_check_branch
          %124 = sbr.rel (%p122) target = $region20
        $region19: #{tpu_custom_call.1} parent=15 // pred_region
          %s125 = sand.u32 %s55, 1
          %s126 = scalar_lea.sflag [#allocation3], %s125
          %s127 = sand.u32 %s55, 1
          %s128 = smul.addr %s127, 64
          %s129 = scalar_lea.vmem [#allocation2], %s128
          %s130 = smul.u32 4, %s21
          %s131 = smul.u32 2, %s22
          %s133 = ssub.s32 1024, 1024
          %134 = vsyncadd %s126, %s133
          %s135 = sadd.s32 %s23, %s131
          %s136 = smul.addr %s130, 2
          %s137 = sadd.s32 %s135, %s136
          %s138 = smul.addr %s20, 8
          %s139 = sadd.s32 %s137, %s138
          %s140 = smul.addr %s139, 128
          %s141 = scalar_lea.hbm %s0, %s140
          %s142 = sshll.u32 %s129, 4
          %s143 = int_to_ptr.vmem [resolvable:$true] %s142
          %148 = dma.hbm_to_vmem [thread:$0]  %s141, 1024, %s143, %s126, 128, 128, 8
        $region20: #{tpu_custom_call.1} parent=15 // pred_fallthru
          _
      $region16: #{tpu_custom_call.1} parent=5 // pred_fallthru
        _
      %p149 = scmp.le.s32.totalorder 1, %s13
      %p150 = scmp.lt.s32.totalorder %s13, 3
      %p151 = pnand %p149, %p150
      %p152 = pneg %p151
      // Predicated region
      $region21: #{tpu_custom_call.1} parent=5 // pred_check
        _
      $region22: #{tpu_custom_call.1} parent=5 // pred_check_branch
        %154 = sbr.rel (%p151) target = $region24
      $region23: #{tpu_custom_call.1} parent=5 // pred_region
        %s155 = ssub.s32 %s13, 1
        %s156 = sand.u32 %s58, 1
        %s157 = scalar_lea.sflag [#allocation3], %s156
        %s158 = sand.u32 %s58, 1
        %s159 = smul.addr %s158, 64
        %s160 = scalar_lea.vmem [#allocation2], %s159
        // Predicated region
        $region25: #{tpu_custom_call.1} parent=23 // pred_check
          %p161 = pneg %p71
        $region26: #{tpu_custom_call.1} parent=23 // pred_check_branch
          %163 = sbr.rel (%p161) target = $region28
        $region27: #{tpu_custom_call.1} parent=23 // pred_region
          %164 = dma.done %s157, 1024
        $region28: #{tpu_custom_call.1} parent=23 // pred_fallthru
          _
        %s165 = sand.u32 %s58, 1
        %s166 = scalar_lea.sflag [#allocation3], %s165
        %s167 = sand.u32 %s58, 1
        %s168 = smul.addr %s167, 64
        %s169 = scalar_lea.vmem [#allocation2], %s168
        %p170 = pneg %p71
        %p171 = pneg %p68
        %p172 = pneg %p103
        %p173 = pneg %p100
        %s174 = sand.u32 %s90, 1
        %s175 = scalar_lea.sflag [#allocation4], %s174
        %s176 = sand.u32 %s90, 1
        %s177 = smul.addr %s176, 128
        %s178 = scalar_lea.vmem [#allocation5], %s177
        %s179 = smul.u32 4, %s25
        %s180 = smul.u32 2, %s26
        %s181 = smul.u32 4, %s25
        %v182 = vlaneseq
        %v183 = vshrl.u32 %v182, 7
        %v184 = vadd.s32 %v183, 8
        %v185 = vlaneseq
        %v186 = vand.u32 %v185, 127
        %v187 = vmul.u32 %v186, 2
        %vm188 = vcmp.eq.s32.totalorder %v183, %v187
        %vm189 = vcmp.eq.s32.totalorder %v184, %v187
        %v190 = vsel %vm188, 1, 0
        %v191 = vsel %vm189, 1, 0
        %v192 = vcvt.s32.f32 %v190
        %v193 = vcvt.s32.f32 %v191
        %v194 = vadd.s32 %v187, 1
        %vm195 = vcmp.eq.s32.totalorder %v183, %v194
        %vm196 = vcmp.eq.s32.totalorder %v184, %v194
        %v197 = vsel %vm195, 1, 0
        %v198 = vsel %vm196, 1, 0
        %v199 = vcvt.s32.f32 %v197
        %v200 = vcvt.s32.f32 %v198
        %203 = vrot.lane.b32.xlu0 %v199, 8
        %v204 = vpop.permute.xlu0 %203
        %205 = vrot.lane.b32.xlu0 %v200, 8
        %v206 = vpop.permute.xlu0 %205
        %vm209 = vcmask 64512
        %v210 = vsel %vm209, %v192, %v204
        %v211 = vsel %vm209, %v193, %v206
        %v212 = vmul.u32 %v183, 2
        %vm213 = vcmp.eq.s32.totalorder %v186, %v212
        %v214 = vsel %vm213, 1, 0
        %v215 = vcvt.s32.f32 %v214
        %v216 = vadd.s32 %v212, 1
        %vm217 = vcmp.eq.s32.totalorder %v186, %v216
        %v218 = vsel %vm217, 1, 0
        %v219 = vcvt.s32.f32 %v218
        %v220 = vld [vmem:[%s160] sm:$0xff]
        %v221 = vld [vmem:[%s160 + $0x8] sm:$0xff]
        %vm222 = vcmask 130048
        %v224 = vsel %vm222, %v215, 0
        %v227 = vsel %vm222, %v219, 0
        %229 = vmatprep.subr.mxu0 0.0
        %v230 = vand.u32 %v220, 4294901760
        %231 = vmatpush1.msra.mxu0 %v230
        %232 = vmatprep.subr.mxu0 0.0
        %v233 = vand.u32 %v221, 4294901760
        %234 = vmatpush1.msra.mxu0 %v233
        %235 = vmatprep.subr.mxu0 0.0
        %236 = vmatpush1.msra.mxu0 0.0
        %237 = vmatprep.subr.mxu0 0.0
        %238 = vmatpush1.msra.mxu0 0.0
        %239 = vmatprep.subr.mxu0 0.0
        %240 = vmatpush1.msra.mxu0 0.0
        %241 = vmatprep.subr.mxu0 0.0
        %242 = vmatpush1.msra.mxu0 0.0
        %243 = vmatprep.subr.mxu0 0.0
        %244 = vmatpush1.msra.mxu0 0.0
        %245 = vmatprep.subr.mxu0 0.0
        %246 = vmatpush1.msra.mxu0 0.0
        %247 = vmatprep.subr.mxu0 0.0
        %248 = vmatpush1.msra.mxu0 0.0
        %249 = vmatprep.subr.mxu0 0.0
        %250 = vmatpush1.msra.mxu0 0.0
        %251 = vmatprep.subr.mxu0 0.0
        %252 = vmatpush1.msra.mxu0 0.0
        %253 = vmatprep.subr.mxu0 0.0
        %254 = vmatpush1.msra.mxu0 0.0
        %255 = vmatprep.subr.mxu0 0.0
        %256 = vmatpush1.msra.mxu0 0.0
        %257 = vmatprep.subr.mxu0 0.0
        %258 = vmatpush1.msra.mxu0 0.0
        %259 = vmatprep.subr.mxu0 0.0
        %260 = vmatpush1.msra.mxu0 0.0
        %261 = vmatprep.subr.mxu0 0.0
        %262 = vmatpush1.msra.mxu0 0.0
        %263 = vmatprep.subr.mxu0 0.0
        %264 = vmatpush1.msra.mxu0 0.0
        %265 = vmatprep.subr.mxu0 0.0
        %266 = vmatpush1.msra.mxu0 0.0
        %267 = vmatprep.subr.mxu0 0.0
        %268 = vmatpush1.msra.mxu0 0.0
        %269 = vmatprep.subr.mxu0 0.0
        %270 = vmatpush1.msra.mxu0 0.0
        %271 = vmatprep.subr.mxu0 0.0
        %272 = vmatpush1.msra.mxu0 0.0
        %273 = vmatprep.subr.mxu0 0.0
        %274 = vmatpush1.msra.mxu0 0.0
        %275 = vmatprep.subr.mxu0 0.0
        %276 = vmatpush1.msra.mxu0 0.0
        %277 = vmatprep.subr.mxu0 0.0
        %278 = vmatpush1.msra.mxu0 0.0
        %279 = vmatprep.subr.mxu0 0.0
        %280 = vmatpush1.msra.mxu0 0.0
        %281 = vmatprep.subr.mxu0 0.0
        %282 = vmatpush1.msra.mxu0 0.0
        %283 = vmatprep.subr.mxu0 0.0
        %284 = vmatpush1.msra.mxu0 0.0
        %285 = vmatprep.subr.mxu0 0.0
        %286 = vmatpush1.msra.mxu0 0.0
        %287 = vmatprep.subr.mxu0 0.0
        %288 = vmatpush1.msra.mxu0 0.0
        %289 = vmatprep.subr.mxu0 0.0
        %290 = vmatpush1.msra.mxu0 0.0
        %291 = vmatprep.subr.mxu0 0.0
        %292 = vmatpush1.msra.mxu0 0.0
        %293 = vmatprep.subr.mxu0 0.0
        %294 = vmatpush1.msra.mxu0 0.0
        %295 = vmatprep.mubr.f32.mxu0 0.0
        %v296 = vand.u32 %v224, 4294901760
        %v297 = vsub.f32 %v224, %v296
        %v298 = vand.u32 %v297, 4294901760
        %v299 = vsub.f32 %v297, %v298
        %v300 = vand.u32 %v299, 4294901760
        %301 = vmatmul.mubr.f32.gmra.mrb[0].mxu0 %v300
        %v302 = vpop.f32.mrb[0].mxu0
        %v303 = vadd.f32 0.0, %v302
        %v304 = vpop.f32.mrb[0].mxu0
        %305 = vmatprep.mubr.f32.mxu0 0.0
        %v306 = vand.u32 %v227, 4294901760
        %v307 = vsub.f32 %v227, %v306
        %v308 = vand.u32 %v307, 4294901760
        %v309 = vsub.f32 %v307, %v308
        %v310 = vand.u32 %v309, 4294901760
        %311 = vmatmul.mubr.f32.gmra.mrb[0].mxu0 %v310
        %v312 = vpop.f32.mrb[0].mxu0
        %v313 = vadd.f32 0.0, %v312
        %v314 = vpop.f32.mrb[0].mxu0
        %315 = vdwg.mxu0
        %316 = vmatprep.subr.mxu0 0.0
        %v317 = vand.u32 %v220, 4294901760
        %v318 = vsub.f32 %v220, %v317
        %v319 = vand.u32 %v318, 4294901760
        %v320 = vsub.f32 %v318, %v319
        %v321 = vand.u32 %v320, 4294901760
        %322 = vmatpush1.msra.mxu0 %v321
        %323 = vmatprep.subr.mxu0 0.0
        %v324 = vand.u32 %v221, 4294901760
        %v325 = vsub.f32 %v221, %v324
        %v326 = vand.u32 %v325, 4294901760
        %v327 = vsub.f32 %v325, %v326
        %v328 = vand.u32 %v327, 4294901760
        %329 = vmatpush1.msra.mxu0 %v328
        %330 = vmatprep.subr.mxu0 0.0
        %331 = vmatpush1.msra.mxu0 0.0
        %332 = vmatprep.subr.mxu0 0.0
        %333 = vmatpush1.msra.mxu0 0.0
        %334 = vmatprep.subr.mxu0 0.0
        %335 = vmatpush1.msra.mxu0 0.0
        %336 = vmatprep.subr.mxu0 0.0
        %337 = vmatpush1.msra.mxu0 0.0
        %338 = vmatprep.subr.mxu0 0.0
        %339 = vmatpush1.msra.mxu0 0.0
        %340 = vmatprep.subr.mxu0 0.0
        %341 = vmatpush1.msra.mxu0 0.0
        %342 = vmatprep.subr.mxu0 0.0
        %343 = vmatpush1.msra.mxu0 0.0
        %344 = vmatprep.subr.mxu0 0.0
        %345 = vmatpush1.msra.mxu0 0.0
        %346 = vmatprep.subr.mxu0 0.0
        %347 = vmatpush1.msra.mxu0 0.0
        %348 = vmatprep.subr.mxu0 0.0
        %349 = vmatpush1.msra.mxu0 0.0
        %350 = vmatprep.subr.mxu0 0.0
        %351 = vmatpush1.msra.mxu0 0.0
        %352 = vmatprep.subr.mxu0 0.0
        %353 = vmatpush1.msra.mxu0 0.0
        %354 = vmatprep.subr.mxu0 0.0
        %355 = vmatpush1.msra.mxu0 0.0
        %356 = vmatprep.subr.mxu0 0.0
        %357 = vmatpush1.msra.mxu0 0.0
        %358 = vmatprep.subr.mxu0 0.0
        %359 = vmatpush1.msra.mxu0 0.0
        %360 = vmatprep.subr.mxu0 0.0
        %361 = vmatpush1.msra.mxu0 0.0
        %362 = vmatprep.subr.mxu0 0.0
        %363 = vmatpush1.msra.mxu0 0.0
        %364 = vmatprep.subr.mxu0 0.0
        %365 = vmatpush1.msra.mxu0 0.0
        %366 = vmatprep.subr.mxu0 0.0
        %367 = vmatpush1.msra.mxu0 0.0
        %368 = vmatprep.subr.mxu0 0.0
        %369 = vmatpush1.msra.mxu0 0.0
        %370 = vmatprep.subr.mxu0 0.0
        %371 = vmatpush1.msra.mxu0 0.0
        %372 = vmatprep.subr.mxu0 0.0
        %373 = vmatpush1.msra.mxu0 0.0
        %374 = vmatprep.subr.mxu0 0.0
        %375 = vmatpush1.msra.mxu0 0.0
        %376 = vmatprep.subr.mxu0 0.0
        %377 = vmatpush1.msra.mxu0 0.0
        %378 = vmatprep.subr.mxu0 0.0
        %379 = vmatpush1.msra.mxu0 0.0
        %380 = vmatprep.subr.mxu0 0.0
        %381 = vmatpush1.msra.mxu0 0.0
        %382 = vmatprep.subr.mxu0 0.0
        %383 = vmatpush1.msra.mxu0 0.0
        %384 = vmatprep.subr.mxu0 0.0
        %385 = vmatpush1.msra.mxu0 0.0
        %386 = vmatprep.subr.mxu0 0.0
        %387 = vmatpush1.msra.mxu0 0.0
        %388 = vmatprep.subr.mxu0 0.0
        %389 = vmatpush1.msra.mxu0 0.0
        %390 = vmatprep.mubr.f32.mxu0 0.0
        %v391 = vand.u32 %v224, 4294901760
        %392 = vmatmul.mubr.f32.gmra.mrb[0].mxu0 %v391
        %v393 = vpop.f32.mrb[0].mxu0
        %v394 = vadd.f32 %v303, %v393
        %v395 = vpop.f32.mrb[0].mxu0
        %396 = vmatprep.mubr.f32.mxu0 0.0
        %v397 = vand.u32 %v227, 4294901760
        %398 = vmatmul.mubr.f32.gmra.mrb[0].mxu0 %v397
        %v399 = vpop.f32.mrb[0].mxu0
        %v400 = vadd.f32 %v313, %v399
        %v401 = vpop.f32.mrb[0].mxu0
        %402 = vdwg.mxu0
        %403 = vmatprep.subr.mxu0 0.0
        %v404 = vand.u32 %v220, 4294901760
        %v405 = vsub.f32 %v220, %v404
        %406 = vmatpush1.msra.mxu0 %v405
        %407 = vmatprep.subr.mxu0 0.0
        %v408 = vand.u32 %v221, 4294901760
        %v409 = vsub.f32 %v221, %v408
        %410 = vmatpush1.msra.mxu0 %v409
        %411 = vmatprep.subr.mxu0 0.0
        %412 = vmatpush1.msra.mxu0 0.0
        %413 = vmatprep.subr.mxu0 0.0
        %414 = vmatpush1.msra.mxu0 0.0
        %415 = vmatprep.subr.mxu0 0.0
        %416 = vmatpush1.msra.mxu0 0.0
        %417 = vmatprep.subr.mxu0 0.0
        %418 = vmatpush1.msra.mxu0 0.0
        %419 = vmatprep.subr.mxu0 0.0
        %420 = vmatpush1.msra.mxu0 0.0
        %421 = vmatprep.subr.mxu0 0.0
        %422 = vmatpush1.msra.mxu0 0.0
        %423 = vmatprep.subr.mxu0 0.0
        %424 = vmatpush1.msra.mxu0 0.0
        %425 = vmatprep.subr.mxu0 0.0
        %426 = vmatpush1.msra.mxu0 0.0
        %427 = vmatprep.subr.mxu0 0.0
        %428 = vmatpush1.msra.mxu0 0.0
        %429 = vmatprep.subr.mxu0 0.0
        %430 = vmatpush1.msra.mxu0 0.0
        %431 = vmatprep.subr.mxu0 0.0
        %432 = vmatpush1.msra.mxu0 0.0
        %433 = vmatprep.subr.mxu0 0.0
        %434 = vmatpush1.msra.mxu0 0.0
        %435 = vmatprep.subr.mxu0 0.0
        %436 = vmatpush1.msra.mxu0 0.0
        %437 = vmatprep.subr.mxu0 0.0
        %438 = vmatpush1.msra.mxu0 0.0
        %439 = vmatprep.subr.mxu0 0.0
        %440 = vmatpush1.msra.mxu0 0.0
        %441 = vmatprep.subr.mxu0 0.0
        %442 = vmatpush1.msra.mxu0 0.0
        %443 = vmatprep.subr.mxu0 0.0
        %444 = vmatpush1.msra.mxu0 0.0
        %445 = vmatprep.subr.mxu0 0.0
        %446 = vmatpush1.msra.mxu0 0.0
        %447 = vmatprep.subr.mxu0 0.0
        %448 = vmatpush1.msra.mxu0 0.0
        %449 = vmatprep.subr.mxu0 0.0
        %450 = vmatpush1.msra.mxu0 0.0
        %451 = vmatprep.subr.mxu0 0.0
        %452 = vmatpush1.msra.mxu0 0.0
        %453 = vmatprep.subr.mxu0 0.0
        %454 = vmatpush1.msra.mxu0 0.0
        %455 = vmatprep.subr.mxu0 0.0
        %456 = vmatpush1.msra.mxu0 0.0
        %457 = vmatprep.subr.mxu0 0.0
        %458 = vmatpush1.msra.mxu0 0.0
        %459 = vmatprep.subr.mxu0 0.0
        %460 = vmatpush1.msra.mxu0 0.0
        %461 = vmatprep.subr.mxu0 0.0
        %462 = vmatpush1.msra.mxu0 0.0
        %463 = vmatprep.subr.mxu0 0.0
        %464 = vmatpush1.msra.mxu0 0.0
        %465 = vmatprep.subr.mxu0 0.0
        %466 = vmatpush1.msra.mxu0 0.0
        %467 = vmatprep.subr.mxu0 0.0
        %468 = vmatpush1.msra.mxu0 0.0
        %469 = vmatprep.subr.mxu0 0.0
        %470 = vmatpush1.msra.mxu0 0.0
        %471 = vmatprep.mubr.f32.mxu0 0.0
        %v472 = vand.u32 %v224, 4294901760
        %v473 = vsub.f32 %v224, %v472
        %474 = vmatmul.mubr.f32.gmra.mrb[0].mxu0 %v473
        %v475 = vpop.f32.mrb[0].mxu0
        %v476 = vadd.f32 %v394, %v475
        %v477 = vpop.f32.mrb[0].mxu0
        %478 = vmatprep.mubr.f32.mxu0 0.0
        %v479 = vand.u32 %v227, 4294901760
        %v480 = vsub.f32 %v227, %v479
        %481 = vmatmul.mubr.f32.gmra.mrb[0].mxu0 %v480
        %v482 = vpop.f32.mrb[0].mxu0
        %v483 = vadd.f32 %v400, %v482
        %v484 = vpop.f32.mrb[0].mxu0
        %485 = vdwg.mxu0
        %486 = vmatprep.subr.mxu0 0.0
        %v487 = vand.u32 %v220, 4294901760
        %488 = vmatpush1.msra.mxu0 %v487
        %489 = vmatprep.subr.mxu0 0.0
        %v490 = vand.u32 %v221, 4294901760
        %491 = vmatpush1.msra.mxu0 %v490
        %492 = vmatprep.subr.mxu0 0.0
        %493 = vmatpush1.msra.mxu0 0.0
        %494 = vmatprep.subr.mxu0 0.0
        %495 = vmatpush1.msra.mxu0 0.0
        %496 = vmatprep.subr.mxu0 0.0
        %497 = vmatpush1.msra.mxu0 0.0
        %498 = vmatprep.subr.mxu0 0.0
        %499 = vmatpush1.msra.mxu0 0.0
        %500 = vmatprep.subr.mxu0 0.0
        %501 = vmatpush1.msra.mxu0 0.0
        %502 = vmatprep.subr.mxu0 0.0
        %503 = vmatpush1.msra.mxu0 0.0
        %504 = vmatprep.subr.mxu0 0.0
        %505 = vmatpush1.msra.mxu0 0.0
        %506 = vmatprep.subr.mxu0 0.0
        %507 = vmatpush1.msra.mxu0 0.0
        %508 = vmatprep.subr.mxu0 0.0
        %509 = vmatpush1.msra.mxu0 0.0
        %510 = vmatprep.subr.mxu0 0.0
        %511 = vmatpush1.msra.mxu0 0.0
        %512 = vmatprep.subr.mxu0 0.0
        %513 = vmatpush1.msra.mxu0 0.0
        %514 = vmatprep.subr.mxu0 0.0
        %515 = vmatpush1.msra.mxu0 0.0
        %516 = vmatprep.subr.mxu0 0.0
        %517 = vmatpush1.msra.mxu0 0.0
        %518 = vmatprep.subr.mxu0 0.0
        %519 = vmatpush1.msra.mxu0 0.0
        %520 = vmatprep.subr.mxu0 0.0
        %521 = vmatpush1.msra.mxu0 0.0
        %522 = vmatprep.subr.mxu0 0.0
        %523 = vmatpush1.msra.mxu0 0.0
        %524 = vmatprep.subr.mxu0 0.0
        %525 = vmatpush1.msra.mxu0 0.0
        %526 = vmatprep.subr.mxu0 0.0
        %527 = vmatpush1.msra.mxu0 0.0
        %528 = vmatprep.subr.mxu0 0.0
        %529 = vmatpush1.msra.mxu0 0.0
        %530 = vmatprep.subr.mxu0 0.0
        %531 = vmatpush1.msra.mxu0 0.0
        %532 = vmatprep.subr.mxu0 0.0
        %533 = vmatpush1.msra.mxu0 0.0
        %534 = vmatprep.subr.mxu0 0.0
        %535 = vmatpush1.msra.mxu0 0.0
        %536 = vmatprep.subr.mxu0 0.0
        %537 = vmatpush1.msra.mxu0 0.0
        %538 = vmatprep.subr.mxu0 0.0
        %539 = vmatpush1.msra.mxu0 0.0
        %540 = vmatprep.subr.mxu0 0.0
        %541 = vmatpush1.msra.mxu0 0.0
        %542 = vmatprep.subr.mxu0 0.0
        %543 = vmatpush1.msra.mxu0 0.0
        %544 = vmatprep.subr.mxu0 0.0
        %545 = vmatpush1.msra.mxu0 0.0
        %546 = vmatprep.subr.mxu0 0.0
        %547 = vmatpush1.msra.mxu0 0.0
        %548 = vmatprep.subr.mxu0 0.0
        %549 = vmatpush1.msra.mxu0 0.0
        %550 = vmatprep.subr.mxu0 0.0
        %551 = vmatpush1.msra.mxu0 0.0
        %552 = vmatprep.mubr.f32.mxu0 0.0
        %v553 = vand.u32 %v224, 4294901760
        %v554 = vsub.f32 %v224, %v553
        %v555 = vand.u32 %v554, 4294901760
        %556 = vmatmul.mubr.f32.gmra.mrb[0].mxu0 %v555
        %v557 = vpop.f32.mrb[0].mxu0
        %v558 = vadd.f32 %v476, %v557
        %v559 = vpop.f32.mrb[0].mxu0
        %560 = vmatprep.mubr.f32.mxu0 0.0
        %v561 = vand.u32 %v227, 4294901760
        %v562 = vsub.f32 %v227, %v561
        %v563 = vand.u32 %v562, 4294901760
        %564 = vmatmul.mubr.f32.gmra.mrb[0].mxu0 %v563
        %v565 = vpop.f32.mrb[0].mxu0
        %v566 = vadd.f32 %v483, %v565
        %v567 = vpop.f32.mrb[0].mxu0
        %568 = vdwg.mxu0
        %569 = vmatprep.subr.mxu0 0.0
        %v570 = vand.u32 %v220, 4294901760
        %v571 = vsub.f32 %v220, %v570
        %v572 = vand.u32 %v571, 4294901760
        %573 = vmatpush1.msra.mxu0 %v572
        %574 = vmatprep.subr.mxu0 0.0
        %v575 = vand.u32 %v221, 4294901760
        %v576 = vsub.f32 %v221, %v575
        %v577 = vand.u32 %v576, 4294901760
        %578 = vmatpush1.msra.mxu0 %v577
        %579 = vmatprep.subr.mxu0 0.0
        %580 = vmatpush1.msra.mxu0 0.0
        %581 = vmatprep.subr.mxu0 0.0
        %582 = vmatpush1.msra.mxu0 0.0
        %583 = vmatprep.subr.mxu0 0.0
        %584 = vmatpush1.msra.mxu0 0.0
        %585 = vmatprep.subr.mxu0 0.0
        %586 = vmatpush1.msra.mxu0 0.0
        %587 = vmatprep.subr.mxu0 0.0
        %588 = vmatpush1.msra.mxu0 0.0
        %589 = vmatprep.subr.mxu0 0.0
        %590 = vmatpush1.msra.mxu0 0.0
        %591 = vmatprep.subr.mxu0 0.0
        %592 = vmatpush1.msra.mxu0 0.0
        %593 = vmatprep.subr.mxu0 0.0
        %594 = vmatpush1.msra.mxu0 0.0
        %595 = vmatprep.subr.mxu0 0.0
        %596 = vmatpush1.msra.mxu0 0.0
        %597 = vmatprep.subr.mxu0 0.0
        %598 = vmatpush1.msra.mxu0 0.0
        %599 = vmatprep.subr.mxu0 0.0
        %600 = vmatpush1.msra.mxu0 0.0
        %601 = vmatprep.subr.mxu0 0.0
        %602 = vmatpush1.msra.mxu0 0.0
        %603 = vmatprep.subr.mxu0 0.0
        %604 = vmatpush1.msra.mxu0 0.0
        %605 = vmatprep.subr.mxu0 0.0
        %606 = vmatpush1.msra.mxu0 0.0
        %607 = vmatprep.subr.mxu0 0.0
        %608 = vmatpush1.msra.mxu0 0.0
        %609 = vmatprep.subr.mxu0 0.0
        %610 = vmatpush1.msra.mxu0 0.0
        %611 = vmatprep.subr.mxu0 0.0
        %612 = vmatpush1.msra.mxu0 0.0
        %613 = vmatprep.subr.mxu0 0.0
        %614 = vmatpush1.msra.mxu0 0.0
        %615 = vmatprep.subr.mxu0 0.0
        %616 = vmatpush1.msra.mxu0 0.0
        %617 = vmatprep.subr.mxu0 0.0
        %618 = vmatpush1.msra.mxu0 0.0
        %619 = vmatprep.subr.mxu0 0.0
        %620 = vmatpush1.msra.mxu0 0.0
        %621 = vmatprep.subr.mxu0 0.0
        %622 = vmatpush1.msra.mxu0 0.0
        %623 = vmatprep.subr.mxu0 0.0
        %624 = vmatpush1.msra.mxu0 0.0
        %625 = vmatprep.subr.mxu0 0.0
        %626 = vmatpush1.msra.mxu0 0.0
        %627 = vmatprep.subr.mxu0 0.0
        %628 = vmatpush1.msra.mxu0 0.0
        %629 = vmatprep.subr.mxu0 0.0
        %630 = vmatpush1.msra.mxu0 0.0
        %631 = vmatprep.subr.mxu0 0.0
        %632 = vmatpush1.msra.mxu0 0.0
        %633 = vmatprep.subr.mxu0 0.0
        %634 = vmatpush1.msra.mxu0 0.0
        %635 = vmatprep.subr.mxu0 0.0
        %636 = vmatpush1.msra.mxu0 0.0
        %637 = vmatprep.subr.mxu0 0.0
        %638 = vmatpush1.msra.mxu0 0.0
        %639 = vmatprep.mubr.f32.mxu0 0.0
        %v640 = vand.u32 %v224, 4294901760
        %641 = vmatmul.mubr.f32.gmra.mrb[0].mxu0 %v640
        %v642 = vpop.f32.mrb[0].mxu0
        %v643 = vadd.f32 %v558, %v642
        %v644 = vpop.f32.mrb[0].mxu0
        %645 = vmatprep.mubr.f32.mxu0 0.0
        %v646 = vand.u32 %v227, 4294901760
        %647 = vmatmul.mubr.f32.gmra.mrb[0].mxu0 %v646
        %v648 = vpop.f32.mrb[0].mxu0
        %v649 = vadd.f32 %v566, %v648
        %v650 = vpop.f32.mrb[0].mxu0
        %651 = vdwg.mxu0
        %652 = vmatprep.subr.mxu0 0.0
        %v653 = vand.u32 %v220, 4294901760
        %654 = vmatpush1.msra.mxu0 %v653
        %655 = vmatprep.subr.mxu0 0.0
        %v656 = vand.u32 %v221, 4294901760
        %657 = vmatpush1.msra.mxu0 %v656
        %658 = vmatprep.subr.mxu0 0.0
        %659 = vmatpush1.msra.mxu0 0.0
        %660 = vmatprep.subr.mxu0 0.0
        %661 = vmatpush1.msra.mxu0 0.0
        %662 = vmatprep.subr.mxu0 0.0
        %663 = vmatpush1.msra.mxu0 0.0
        %664 = vmatprep.subr.mxu0 0.0
        %665 = vmatpush1.msra.mxu0 0.0
        %666 = vmatprep.subr.mxu0 0.0
        %667 = vmatpush1.msra.mxu0 0.0
        %668 = vmatprep.subr.mxu0 0.0
        %669 = vmatpush1.msra.mxu0 0.0
        %670 = vmatprep.subr.mxu0 0.0
        %671 = vmatpush1.msra.mxu0 0.0
        %672 = vmatprep.subr.mxu0 0.0
        %673 = vmatpush1.msra.mxu0 0.0
        %674 = vmatprep.subr.mxu0 0.0
        %675 = vmatpush1.msra.mxu0 0.0
        %676 = vmatprep.subr.mxu0 0.0
        %677 = vmatpush1.msra.mxu0 0.0
        %678 = vmatprep.subr.mxu0 0.0
        %679 = vmatpush1.msra.mxu0 0.0
        %680 = vmatprep.subr.mxu0 0.0
        %681 = vmatpush1.msra.mxu0 0.0
        %682 = vmatprep.subr.mxu0 0.0
        %683 = vmatpush1.msra.mxu0 0.0
        %684 = vmatprep.subr.mxu0 0.0
        %685 = vmatpush1.msra.mxu0 0.0
        %686 = vmatprep.subr.mxu0 0.0
        %687 = vmatpush1.msra.mxu0 0.0
        %688 = vmatprep.subr.mxu0 0.0
        %689 = vmatpush1.msra.mxu0 0.0
        %690 = vmatprep.subr.mxu0 0.0
        %691 = vmatpush1.msra.mxu0 0.0
        %692 = vmatprep.subr.mxu0 0.0
        %693 = vmatpush1.msra.mxu0 0.0
        %694 = vmatprep.subr.mxu0 0.0
        %695 = vmatpush1.msra.mxu0 0.0
        %696 = vmatprep.subr.mxu0 0.0
        %697 = vmatpush1.msra.mxu0 0.0
        %698 = vmatprep.subr.mxu0 0.0
        %699 = vmatpush1.msra.mxu0 0.0
        %700 = vmatprep.subr.mxu0 0.0
        %701 = vmatpush1.msra.mxu0 0.0
        %702 = vmatprep.subr.mxu0 0.0
        %703 = vmatpush1.msra.mxu0 0.0
        %704 = vmatprep.subr.mxu0 0.0
        %705 = vmatpush1.msra.mxu0 0.0
        %706 = vmatprep.subr.mxu0 0.0
        %707 = vmatpush1.msra.mxu0 0.0
        %708 = vmatprep.subr.mxu0 0.0
        %709 = vmatpush1.msra.mxu0 0.0
        %710 = vmatprep.subr.mxu0 0.0
        %711 = vmatpush1.msra.mxu0 0.0
        %712 = vmatprep.subr.mxu0 0.0
        %713 = vmatpush1.msra.mxu0 0.0
        %714 = vmatprep.subr.mxu0 0.0
        %715 = vmatpush1.msra.mxu0 0.0
        %716 = vmatprep.subr.mxu0 0.0
        %717 = vmatpush1.msra.mxu0 0.0
        %718 = vmatprep.mubr.f32.mxu0 0.0
        %v719 = vand.u32 %v224, 4294901760
        %720 = vmatmul.mubr.f32.gmra.mrb[0].mxu0 %v719
        %v721 = vpop.f32.mrb[0].mxu0
        %v722 = vadd.f32 %v643, %v721
        %v723 = vpop.f32.mrb[0].mxu0
        %724 = vmatprep.mubr.f32.mxu0 0.0
        %v725 = vand.u32 %v227, 4294901760
        %726 = vmatmul.mubr.f32.gmra.mrb[0].mxu0 %v725
        %v727 = vpop.f32.mrb[0].mxu0
        %v728 = vadd.f32 %v649, %v727
        %v729 = vpop.f32.mrb[0].mxu0
        %730 = vdwg.mxu0
        %v732 = vsel %vm222, %v722, 0
        %v735 = vsel %vm222, %v728, 0
        %737 = vmatprep.subr.mxu0 0.0
        %v738 = vand.u32 %v210, 4294901760
        %739 = vmatpush1.msra.mxu0 %v738
        %740 = vmatprep.subr.mxu0 0.0
        %v741 = vand.u32 %v211, 4294901760
        %742 = vmatpush1.msra.mxu0 %v741
        %743 = vmatprep.subr.mxu0 0.0
        %744 = vmatpush1.msra.mxu0 0.0
        %745 = vmatprep.subr.mxu0 0.0
        %746 = vmatpush1.msra.mxu0 0.0
        %747 = vmatprep.subr.mxu0 0.0
        %748 = vmatpush1.msra.mxu0 0.0
        %749 = vmatprep.subr.mxu0 0.0
        %750 = vmatpush1.msra.mxu0 0.0
        %751 = vmatprep.subr.mxu0 0.0
        %752 = vmatpush1.msra.mxu0 0.0
        %753 = vmatprep.subr.mxu0 0.0
        %754 = vmatpush1.msra.mxu0 0.0
        %755 = vmatprep.subr.mxu0 0.0
        %756 = vmatpush1.msra.mxu0 0.0
        %757 = vmatprep.subr.mxu0 0.0
        %758 = vmatpush1.msra.mxu0 0.0
        %759 = vmatprep.subr.mxu0 0.0
        %760 = vmatpush1.msra.mxu0 0.0
        %761 = vmatprep.subr.mxu0 0.0
        %762 = vmatpush1.msra.mxu0 0.0
        %763 = vmatprep.subr.mxu0 0.0
        %764 = vmatpush1.msra.mxu0 0.0
        %765 = vmatprep.subr.mxu0 0.0
        %766 = vmatpush1.msra.mxu0 0.0
        %767 = vmatprep.subr.mxu0 0.0
        %768 = vmatpush1.msra.mxu0 0.0
        %769 = vmatprep.subr.mxu0 0.0
        %770 = vmatpush1.msra.mxu0 0.0
        %771 = vmatprep.subr.mxu0 0.0
        %772 = vmatpush1.msra.mxu0 0.0
        %773 = vmatprep.subr.mxu0 0.0
        %774 = vmatpush1.msra.mxu0 0.0
        %775 = vmatprep.subr.mxu0 0.0
        %776 = vmatpush1.msra.mxu0 0.0
        %777 = vmatprep.subr.mxu0 0.0
        %778 = vmatpush1.msra.mxu0 0.0
        %779 = vmatprep.subr.mxu0 0.0
        %780 = vmatpush1.msra.mxu0 0.0
        %781 = vmatprep.subr.mxu0 0.0
        %782 = vmatpush1.msra.mxu0 0.0
        %783 = vmatprep.subr.mxu0 0.0
        %784 = vmatpush1.msra.mxu0 0.0
        %785 = vmatprep.subr.mxu0 0.0
        %786 = vmatpush1.msra.mxu0 0.0
        %787 = vmatprep.subr.mxu0 0.0
        %788 = vmatpush1.msra.mxu0 0.0
        %789 = vmatprep.subr.mxu0 0.0
        %790 = vmatpush1.msra.mxu0 0.0
        %791 = vmatprep.subr.mxu0 0.0
        %792 = vmatpush1.msra.mxu0 0.0
        %793 = vmatprep.subr.mxu0 0.0
        %794 = vmatpush1.msra.mxu0 0.0
        %795 = vmatprep.subr.mxu0 0.0
        %796 = vmatpush1.msra.mxu0 0.0
        %797 = vmatprep.subr.mxu0 0.0
        %798 = vmatpush1.msra.mxu0 0.0
        %799 = vmatprep.subr.mxu0 0.0
        %800 = vmatpush1.msra.mxu0 0.0
        %801 = vmatprep.subr.mxu0 0.0
        %802 = vmatpush1.msra.mxu0 0.0
        %803 = vmatprep.mubr.f32.mxu0 0.0
        %v804 = vand.u32 %v732, 4294901760
        %v805 = vsub.f32 %v732, %v804
        %v806 = vand.u32 %v805, 4294901760
        %v807 = vsub.f32 %v805, %v806
        %v808 = vand.u32 %v807, 4294901760
        %809 = vmatmul.mubr.f32.gmra.mrb[0].mxu0 %v808
        %v810 = vpop.f32.mrb[0].mxu0
        %v811 = vadd.f32 0.0, %v810
        %v812 = vpop.f32.mrb[0].mxu0
        %813 = vmatprep.mubr.f32.mxu0 0.0
        %v814 = vand.u32 %v735, 4294901760
        %v815 = vsub.f32 %v735, %v814
        %v816 = vand.u32 %v815, 4294901760
        %v817 = vsub.f32 %v815, %v816
        %v818 = vand.u32 %v817, 4294901760
        %819 = vmatmul.mubr.f32.gmra.mrb[0].mxu0 %v818
        %v820 = vpop.f32.mrb[0].mxu0
        %v821 = vadd.f32 0.0, %v820
        %v822 = vpop.f32.mrb[0].mxu0
        %823 = vdwg.mxu0
        %824 = vmatprep.subr.mxu0 0.0
        %v825 = vand.u32 %v210, 4294901760
        %v826 = vsub.f32 %v210, %v825
        %v827 = vand.u32 %v826, 4294901760
        %v828 = vsub.f32 %v826, %v827
        %v829 = vand.u32 %v828, 4294901760
        %830 = vmatpush1.msra.mxu0 %v829
        %831 = vmatprep.subr.mxu0 0.0
        %v832 = vand.u32 %v211, 4294901760
        %v833 = vsub.f32 %v211, %v832
        %v834 = vand.u32 %v833, 4294901760
        %v835 = vsub.f32 %v833, %v834
        %v836 = vand.u32 %v835, 4294901760
        %837 = vmatpush1.msra.mxu0 %v836
        %838 = vmatprep.subr.mxu0 0.0
        %839 = vmatpush1.msra.mxu0 0.0
        %840 = vmatprep.subr.mxu0 0.0
        %841 = vmatpush1.msra.mxu0 0.0
        %842 = vmatprep.subr.mxu0 0.0
        %843 = vmatpush1.msra.mxu0 0.0
        %844 = vmatprep.subr.mxu0 0.0
        %845 = vmatpush1.msra.mxu0 0.0
        %846 = vmatprep.subr.mxu0 0.0
        %847 = vmatpush1.msra.mxu0 0.0
        %848 = vmatprep.subr.mxu0 0.0
        %849 = vmatpush1.msra.mxu0 0.0
        %850 = vmatprep.subr.mxu0 0.0
        %851 = vmatpush1.msra.mxu0 0.0
        %852 = vmatprep.subr.mxu0 0.0
        %853 = vmatpush1.msra.mxu0 0.0
        %854 = vmatprep.subr.mxu0 0.0
        %855 = vmatpush1.msra.mxu0 0.0
        %856 = vmatprep.subr.mxu0 0.0
        %857 = vmatpush1.msra.mxu0 0.0
        %858 = vmatprep.subr.mxu0 0.0
        %859 = vmatpush1.msra.mxu0 0.0
        %860 = vmatprep.subr.mxu0 0.0
        %861 = vmatpush1.msra.mxu0 0.0
        %862 = vmatprep.subr.mxu0 0.0
        %863 = vmatpush1.msra.mxu0 0.0
        %864 = vmatprep.subr.mxu0 0.0
        %865 = vmatpush1.msra.mxu0 0.0
        %866 = vmatprep.subr.mxu0 0.0
        %867 = vmatpush1.msra.mxu0 0.0
        %868 = vmatprep.subr.mxu0 0.0
        %869 = vmatpush1.msra.mxu0 0.0
        %870 = vmatprep.subr.mxu0 0.0
        %871 = vmatpush1.msra.mxu0 0.0
        %872 = vmatprep.subr.mxu0 0.0
        %873 = vmatpush1.msra.mxu0 0.0
        %874 = vmatprep.subr.mxu0 0.0
        %875 = vmatpush1.msra.mxu0 0.0
        %876 = vmatprep.subr.mxu0 0.0
        %877 = vmatpush1.msra.mxu0 0.0
        %878 = vmatprep.subr.mxu0 0.0
        %879 = vmatpush1.msra.mxu0 0.0
        %880 = vmatprep.subr.mxu0 0.0
        %881 = vmatpush1.msra.mxu0 0.0
        %882 = vmatprep.subr.mxu0 0.0
        %883 = vmatpush1.msra.mxu0 0.0
        %884 = vmatprep.subr.mxu0 0.0
        %885 = vmatpush1.msra.mxu0 0.0
        %886 = vmatprep.subr.mxu0 0.0
        %887 = vmatpush1.msra.mxu0 0.0
        %888 = vmatprep.subr.mxu0 0.0
        %889 = vmatpush1.msra.mxu0 0.0
        %890 = vmatprep.subr.mxu0 0.0
        %891 = vmatpush1.msra.mxu0 0.0
        %892 = vmatprep.subr.mxu0 0.0
        %893 = vmatpush1.msra.mxu0 0.0
        %894 = vmatprep.subr.mxu0 0.0
        %895 = vmatpush1.msra.mxu0 0.0
        %896 = vmatprep.subr.mxu0 0.0
        %897 = vmatpush1.msra.mxu0 0.0
        %898 = vmatprep.mubr.f32.mxu0 0.0
        %v899 = vand.u32 %v732, 4294901760
        %900 = vmatmul.mubr.f32.gmra.mrb[0].mxu0 %v899
        %v901 = vpop.f32.mrb[0].mxu0
        %v902 = vadd.f32 %v811, %v901
        %v903 = vpop.f32.mrb[0].mxu0
        %904 = vmatprep.mubr.f32.mxu0 0.0
        %v905 = vand.u32 %v735, 4294901760
        %906 = vmatmul.mubr.f32.gmra.mrb[0].mxu0 %v905
        %v907 = vpop.f32.mrb[0].mxu0
        %v908 = vadd.f32 %v821, %v907
        %v909 = vpop.f32.mrb[0].mxu0
        %910 = vdwg.mxu0
        %911 = vmatprep.subr.mxu0 0.0
        %v912 = vand.u32 %v210, 4294901760
        %v913 = vsub.f32 %v210, %v912
        %914 = vmatpush1.msra.mxu0 %v913
        %915 = vmatprep.subr.mxu0 0.0
        %v916 = vand.u32 %v211, 4294901760
        %v917 = vsub.f32 %v211, %v916
        %918 = vmatpush1.msra.mxu0 %v917
        %919 = vmatprep.subr.mxu0 0.0
        %920 = vmatpush1.msra.mxu0 0.0
        %921 = vmatprep.subr.mxu0 0.0
        %922 = vmatpush1.msra.mxu0 0.0
        %923 = vmatprep.subr.mxu0 0.0
        %924 = vmatpush1.msra.mxu0 0.0
        %925 = vmatprep.subr.mxu0 0.0
        %926 = vmatpush1.msra.mxu0 0.0
        %927 = vmatprep.subr.mxu0 0.0
        %928 = vmatpush1.msra.mxu0 0.0
        %929 = vmatprep.subr.mxu0 0.0
        %930 = vmatpush1.msra.mxu0 0.0
        %931 = vmatprep.subr.mxu0 0.0
        %932 = vmatpush1.msra.mxu0 0.0
        %933 = vmatprep.subr.mxu0 0.0
        %934 = vmatpush1.msra.mxu0 0.0
        %935 = vmatprep.subr.mxu0 0.0
        %936 = vmatpush1.msra.mxu0 0.0
        %937 = vmatprep.subr.mxu0 0.0
        %938 = vmatpush1.msra.mxu0 0.0
        %939 = vmatprep.subr.mxu0 0.0
        %940 = vmatpush1.msra.mxu0 0.0
        %941 = vmatprep.subr.mxu0 0.0
        %942 = vmatpush1.msra.mxu0 0.0
        %943 = vmatprep.subr.mxu0 0.0
        %944 = vmatpush1.msra.mxu0 0.0
        %945 = vmatprep.subr.mxu0 0.0
        %946 = vmatpush1.msra.mxu0 0.0
        %947 = vmatprep.subr.mxu0 0.0
        %948 = vmatpush1.msra.mxu0 0.0
        %949 = vmatprep.subr.mxu0 0.0
        %950 = vmatpush1.msra.mxu0 0.0
        %951 = vmatprep.subr.mxu0 0.0
        %952 = vmatpush1.msra.mxu0 0.0
        %953 = vmatprep.subr.mxu0 0.0
        %954 = vmatpush1.msra.mxu0 0.0
        %955 = vmatprep.subr.mxu0 0.0
        %956 = vmatpush1.msra.mxu0 0.0
        %957 = vmatprep.subr.mxu0 0.0
        %958 = vmatpush1.msra.mxu0 0.0
        %959 = vmatprep.subr.mxu0 0.0
        %960 = vmatpush1.msra.mxu0 0.0
        %961 = vmatprep.subr.mxu0 0.0
        %962 = vmatpush1.msra.mxu0 0.0
        %963 = vmatprep.subr.mxu0 0.0
        %964 = vmatpush1.msra.mxu0 0.0
        %965 = vmatprep.subr.mxu0 0.0
        %966 = vmatpush1.msra.mxu0 0.0
        %967 = vmatprep.subr.mxu0 0.0
        %968 = vmatpush1.msra.mxu0 0.0
        %969 = vmatprep.subr.mxu0 0.0
        %970 = vmatpush1.msra.mxu0 0.0
        %971 = vmatprep.subr.mxu0 0.0
        %972 = vmatpush1.msra.mxu0 0.0
        %973 = vmatprep.subr.mxu0 0.0
        %974 = vmatpush1.msra.mxu0 0.0
        %975 = vmatprep.subr.mxu0 0.0
        %976 = vmatpush1.msra.mxu0 0.0
        %977 = vmatprep.subr.mxu0 0.0
        %978 = vmatpush1.msra.mxu0 0.0
        %979 = vmatprep.mubr.f32.mxu0 0.0
        %v980 = vand.u32 %v732, 4294901760
        %v981 = vsub.f32 %v732, %v980
        %982 = vmatmul.mubr.f32.gmra.mrb[0].mxu0 %v981
        %v983 = vpop.f32.mrb[0].mxu0
        %v984 = vadd.f32 %v902, %v983
        %v985 = vpop.f32.mrb[0].mxu0
        %986 = vmatprep.mubr.f32.mxu0 0.0
        %v987 = vand.u32 %v735, 4294901760
        %v988 = vsub.f32 %v735, %v987
        %989 = vmatmul.mubr.f32.gmra.mrb[0].mxu0 %v988
        %v990 = vpop.f32.mrb[0].mxu0
        %v991 = vadd.f32 %v908, %v990
        %v992 = vpop.f32.mrb[0].mxu0
        %993 = vdwg.mxu0
        %994 = vmatprep.subr.mxu0 0.0
        %v995 = vand.u32 %v210, 4294901760
        %996 = vmatpush1.msra.mxu0 %v995
        %997 = vmatprep.subr.mxu0 0.0
        %v998 = vand.u32 %v211, 4294901760
        %999 = vmatpush1.msra.mxu0 %v998
        %1000 = vmatprep.subr.mxu0 0.0
        %1001 = vmatpush1.msra.mxu0 0.0
        %1002 = vmatprep.subr.mxu0 0.0
        %1003 = vmatpush1.msra.mxu0 0.0
        %1004 = vmatprep.subr.mxu0 0.0
        %1005 = vmatpush1.msra.mxu0 0.0
        %1006 = vmatprep.subr.mxu0 0.0
        %1007 = vmatpush1.msra.mxu0 0.0
        %1008 = vmatprep.subr.mxu0 0.0
        %1009 = vmatpush1.msra.mxu0 0.0
        %1010 = vmatprep.subr.mxu0 0.0
        %1011 = vmatpush1.msra.mxu0 0.0
        %1012 = vmatprep.subr.mxu0 0.0
        %1013 = vmatpush1.msra.mxu0 0.0
        %1014 = vmatprep.subr.mxu0 0.0
        %1015 = vmatpush1.msra.mxu0 0.0
        %1016 = vmatprep.subr.mxu0 0.0
        %1017 = vmatpush1.msra.mxu0 0.0
        %1018 = vmatprep.subr.mxu0 0.0
        %1019 = vmatpush1.msra.mxu0 0.0
        %1020 = vmatprep.subr.mxu0 0.0
        %1021 = vmatpush1.msra.mxu0 0.0
        %1022 = vmatprep.subr.mxu0 0.0
        %1023 = vmatpush1.msra.mxu0 0.0
        %1024 = vmatprep.subr.mxu0 0.0
        %1025 = vmatpush1.msra.mxu0 0.0
        %1026 = vmatprep.subr.mxu0 0.0
        %1027 = vmatpush1.msra.mxu0 0.0
        %1028 = vmatprep.subr.mxu0 0.0
        %1029 = vmatpush1.msra.mxu0 0.0
        %1030 = vmatprep.subr.mxu0 0.0
        %1031 = vmatpush1.msra.mxu0 0.0
        %1032 = vmatprep.subr.mxu0 0.0
        %1033 = vmatpush1.msra.mxu0 0.0
        %1034 = vmatprep.subr.mxu0 0.0
        %1035 = vmatpush1.msra.mxu0 0.0
        %1036 = vmatprep.subr.mxu0 0.0
        %1037 = vmatpush1.msra.mxu0 0.0
        %1038 = vmatprep.subr.mxu0 0.0
        %1039 = vmatpush1.msra.mxu0 0.0
        %1040 = vmatprep.subr.mxu0 0.0
        %1041 = vmatpush1.msra.mxu0 0.0
        %1042 = vmatprep.subr.mxu0 0.0
        %1043 = vmatpush1.msra.mxu0 0.0
        %1044 = vmatprep.subr.mxu0 0.0
        %1045 = vmatpush1.msra.mxu0 0.0
        %1046 = vmatprep.subr.mxu0 0.0
        %1047 = vmatpush1.msra.mxu0 0.0
        %1048 = vmatprep.subr.mxu0 0.0
        %1049 = vmatpush1.msra.mxu0 0.0
        %1050 = vmatprep.subr.mxu0 0.0
        %1051 = vmatpush1.msra.mxu0 0.0
        %1052 = vmatprep.subr.mxu0 0.0
        %1053 = vmatpush1.msra.mxu0 0.0
        %1054 = vmatprep.subr.mxu0 0.0
        %1055 = vmatpush1.msra.mxu0 0.0
        %1056 = vmatprep.subr.mxu0 0.0
        %1057 = vmatpush1.msra.mxu0 0.0
        %1058 = vmatprep.subr.mxu0 0.0
        %1059 = vmatpush1.msra.mxu0 0.0
        %1060 = vmatprep.mubr.f32.mxu0 0.0
        %v1061 = vand.u32 %v732, 4294901760
        %v1062 = vsub.f32 %v732, %v1061
        %v1063 = vand.u32 %v1062, 4294901760
        %1064 = vmatmul.mubr.f32.gmra.mrb[0].mxu0 %v1063
        %v1065 = vpop.f32.mrb[0].mxu0
        %v1066 = vadd.f32 %v984, %v1065
        %v1067 = vpop.f32.mrb[0].mxu0
        %1068 = vmatprep.mubr.f32.mxu0 0.0
        %v1069 = vand.u32 %v735, 4294901760
        %v1070 = vsub.f32 %v735, %v1069
        %v1071 = vand.u32 %v1070, 4294901760
        %1072 = vmatmul.mubr.f32.gmra.mrb[0].mxu0 %v1071
        %v1073 = vpop.f32.mrb[0].mxu0
        %v1074 = vadd.f32 %v991, %v1073
        %v1075 = vpop.f32.mrb[0].mxu0
        %1076 = vdwg.mxu0
        %1077 = vmatprep.subr.mxu0 0.0
        %v1078 = vand.u32 %v210, 4294901760
        %v1079 = vsub.f32 %v210, %v1078
        %v1080 = vand.u32 %v1079, 4294901760
        %1081 = vmatpush1.msra.mxu0 %v1080
        %1082 = vmatprep.subr.mxu0 0.0
        %v1083 = vand.u32 %v211, 4294901760
        %v1084 = vsub.f32 %v211, %v1083
        %v1085 = vand.u32 %v1084, 4294901760
        %1086 = vmatpush1.msra.mxu0 %v1085
        %1087 = vmatprep.subr.mxu0 0.0
        %1088 = vmatpush1.msra.mxu0 0.0
        %1089 = vmatprep.subr.mxu0 0.0
        %1090 = vmatpush1.msra.mxu0 0.0
        %1091 = vmatprep.subr.mxu0 0.0
        %1092 = vmatpush1.msra.mxu0 0.0
        %1093 = vmatprep.subr.mxu0 0.0
        %1094 = vmatpush1.msra.mxu0 0.0
        %1095 = vmatprep.subr.mxu0 0.0
        %1096 = vmatpush1.msra.mxu0 0.0
        %1097 = vmatprep.subr.mxu0 0.0
        %1098 = vmatpush1.msra.mxu0 0.0
        %1099 = vmatprep.subr.mxu0 0.0
        %1100 = vmatpush1.msra.mxu0 0.0
        %1101 = vmatprep.subr.mxu0 0.0
        %1102 = vmatpush1.msra.mxu0 0.0
        %1103 = vmatprep.subr.mxu0 0.0
        %1104 = vmatpush1.msra.mxu0 0.0
        %1105 = vmatprep.subr.mxu0 0.0
        %1106 = vmatpush1.msra.mxu0 0.0
        %1107 = vmatprep.subr.mxu0 0.0
        %1108 = vmatpush1.msra.mxu0 0.0
        %1109 = vmatprep.subr.mxu0 0.0
        %1110 = vmatpush1.msra.mxu0 0.0
        %1111 = vmatprep.subr.mxu0 0.0
        %1112 = vmatpush1.msra.mxu0 0.0
        %1113 = vmatprep.subr.mxu0 0.0
        %1114 = vmatpush1.msra.mxu0 0.0
        %1115 = vmatprep.subr.mxu0 0.0
        %1116 = vmatpush1.msra.mxu0 0.0
        %1117 = vmatprep.subr.mxu0 0.0
        %1118 = vmatpush1.msra.mxu0 0.0
        %1119 = vmatprep.subr.mxu0 0.0
        %1120 = vmatpush1.msra.mxu0 0.0
        %1121 = vmatprep.subr.mxu0 0.0
        %1122 = vmatpush1.msra.mxu0 0.0
        %1123 = vmatprep.subr.mxu0 0.0
        %1124 = vmatpush1.msra.mxu0 0.0
        %1125 = vmatprep.subr.mxu0 0.0
        %1126 = vmatpush1.msra.mxu0 0.0
        %1127 = vmatprep.subr.mxu0 0.0
        %1128 = vmatpush1.msra.mxu0 0.0
        %1129 = vmatprep.subr.mxu0 0.0
        %1130 = vmatpush1.msra.mxu0 0.0
        %1131 = vmatprep.subr.mxu0 0.0
        %1132 = vmatpush1.msra.mxu0 0.0
        %1133 = vmatprep.subr.mxu0 0.0
        %1134 = vmatpush1.msra.mxu0 0.0
        %1135 = vmatprep.subr.mxu0 0.0
        %1136 = vmatpush1.msra.mxu0 0.0
        %1137 = vmatprep.subr.mxu0 0.0
        %1138 = vmatpush1.msra.mxu0 0.0
        %1139 = vmatprep.subr.mxu0 0.0
        %1140 = vmatpush1.msra.mxu0 0.0
        %1141 = vmatprep.subr.mxu0 0.0
        %1142 = vmatpush1.msra.mxu0 0.0
        %1143 = vmatprep.subr.mxu0 0.0
        %1144 = vmatpush1.msra.mxu0 0.0
        %1145 = vmatprep.subr.mxu0 0.0
        %1146 = vmatpush1.msra.mxu0 0.0
        %1147 = vmatprep.mubr.f32.mxu0 0.0
        %v1148 = vand.u32 %v732, 4294901760
        %1149 = vmatmul.mubr.f32.gmra.mrb[0].mxu0 %v1148
        %v1150 = vpop.f32.mrb[0].mxu0
        %v1151 = vadd.f32 %v1066, %v1150
        %v1152 = vpop.f32.mrb[0].mxu0
        %1153 = vmatprep.mubr.f32.mxu0 0.0
        %v1154 = vand.u32 %v735, 4294901760
        %1155 = vmatmul.mubr.f32.gmra.mrb[0].mxu0 %v1154
        %v1156 = vpop.f32.mrb[0].mxu0
        %v1157 = vadd.f32 %v1074, %v1156
        %v1158 = vpop.f32.mrb[0].mxu0
        %1159 = vdwg.mxu0
        %1160 = vmatprep.subr.mxu0 0.0
        %v1161 = vand.u32 %v210, 4294901760
        %1162 = vmatpush1.msra.mxu0 %v1161
        %1163 = vmatprep.subr.mxu0 0.0
        %v1164 = vand.u32 %v211, 4294901760
        %1165 = vmatpush1.msra.mxu0 %v1164
        %1166 = vmatprep.subr.mxu0 0.0
        %1167 = vmatpush1.msra.mxu0 0.0
        %1168 = vmatprep.subr.mxu0 0.0
        %1169 = vmatpush1.msra.mxu0 0.0
        %1170 = vmatprep.subr.mxu0 0.0
        %1171 = vmatpush1.msra.mxu0 0.0
        %1172 = vmatprep.subr.mxu0 0.0
        %1173 = vmatpush1.msra.mxu0 0.0
        %1174 = vmatprep.subr.mxu0 0.0
        %1175 = vmatpush1.msra.mxu0 0.0
        %1176 = vmatprep.subr.mxu0 0.0
        %1177 = vmatpush1.msra.mxu0 0.0
        %1178 = vmatprep.subr.mxu0 0.0
        %1179 = vmatpush1.msra.mxu0 0.0
        %1180 = vmatprep.subr.mxu0 0.0
        %1181 = vmatpush1.msra.mxu0 0.0
        %1182 = vmatprep.subr.mxu0 0.0
        %1183 = vmatpush1.msra.mxu0 0.0
        %1184 = vmatprep.subr.mxu0 0.0
        %1185 = vmatpush1.msra.mxu0 0.0
        %1186 = vmatprep.subr.mxu0 0.0
        %1187 = vmatpush1.msra.mxu0 0.0
        %1188 = vmatprep.subr.mxu0 0.0
        %1189 = vmatpush1.msra.mxu0 0.0
        %1190 = vmatprep.subr.mxu0 0.0
        %1191 = vmatpush1.msra.mxu0 0.0
        %1192 = vmatprep.subr.mxu0 0.0
        %1193 = vmatpush1.msra.mxu0 0.0
        %1194 = vmatprep.subr.mxu0 0.0
        %1195 = vmatpush1.msra.mxu0 0.0
        %1196 = vmatprep.subr.mxu0 0.0
        %1197 = vmatpush1.msra.mxu0 0.0
        %1198 = vmatprep.subr.mxu0 0.0
        %1199 = vmatpush1.msra.mxu0 0.0
        %1200 = vmatprep.subr.mxu0 0.0
        %1201 = vmatpush1.msra.mxu0 0.0
        %1202 = vmatprep.subr.mxu0 0.0
        %1203 = vmatpush1.msra.mxu0 0.0
        %1204 = vmatprep.subr.mxu0 0.0
        %1205 = vmatpush1.msra.mxu0 0.0
        %1206 = vmatprep.subr.mxu0 0.0
        %1207 = vmatpush1.msra.mxu0 0.0
        %1208 = vmatprep.subr.mxu0 0.0
        %1209 = vmatpush1.msra.mxu0 0.0
        %1210 = vmatprep.subr.mxu0 0.0
        %1211 = vmatpush1.msra.mxu0 0.0
        %1212 = vmatprep.subr.mxu0 0.0
        %1213 = vmatpush1.msra.mxu0 0.0
        %1214 = vmatprep.subr.mxu0 0.0
        %1215 = vmatpush1.msra.mxu0 0.0
        %1216 = vmatprep.subr.mxu0 0.0
        %1217 = vmatpush1.msra.mxu0 0.0
        %1218 = vmatprep.subr.mxu0 0.0
        %1219 = vmatpush1.msra.mxu0 0.0
        %1220 = vmatprep.subr.mxu0 0.0
        %1221 = vmatpush1.msra.mxu0 0.0
        %1222 = vmatprep.subr.mxu0 0.0
        %1223 = vmatpush1.msra.mxu0 0.0
        %1224 = vmatprep.subr.mxu0 0.0
        %1225 = vmatpush1.msra.mxu0 0.0
        %1226 = vmatprep.mubr.f32.mxu0 0.0
        %v1227 = vand.u32 %v732, 4294901760
        %1228 = vmatmul.mubr.f32.gmra.mrb[0].mxu0 %v1227
        %v1229 = vpop.f32.mrb[0].mxu0
        %v1230 = vadd.f32 %v1151, %v1229
        %v1231 = vpop.f32.mrb[0].mxu0
        %1232 = vmatprep.mubr.f32.mxu0 0.0
        %v1233 = vand.u32 %v735, 4294901760
        %1234 = vmatmul.mubr.f32.gmra.mrb[0].mxu0 %v1233
        %v1235 = vpop.f32.mrb[0].mxu0
        %v1236 = vadd.f32 %v1157, %v1235
        %v1237 = vpop.f32.mrb[0].mxu0
        %1238 = vdwg.mxu0
        %1239 = vst.msk [vmem:[%s178] sm:$0xff] %vm209, %v1230
        %1241 = vrot.lane.b32.xlu0 %v1230, 120
        %v1242 = vpop.permute.xlu0 %1241
        %s1244 = scalar_lea.vmem %s178, 8 [#allocation5]
        %1245 = vst.msk [vmem:[%s1244] sm:$0xff] %vm209, %v1242
        %s1246 = scalar_lea.vmem %s178, 16 [#allocation5]
        %1247 = vst.msk [vmem:[%s1246] sm:$0xff] %vm209, %v1236
        %1249 = vrot.lane.b32.xlu0 %v1236, 120
        %v1250 = vpop.permute.xlu0 %1249
        %s1252 = scalar_lea.vmem %s178, 24 [#allocation5]
        %1253 = vst.msk [vmem:[%s1252] sm:$0xff] %vm209, %v1250
        %s1254 = scalar_lea.vmem %s160, 16 [#allocation2]
        %v1255 = vld [vmem:[%s1254] sm:$0xff]
        %v1256 = vld [vmem:[%s1254 + $0x8] sm:$0xff]
        %1257 = vmatprep.subr.mxu0 0.0
        %v1258 = vand.u32 %v1255, 4294901760
        %1259 = vmatpush1.msra.mxu0 %v1258
        %1260 = vmatprep.subr.mxu0 0.0
        %v1261 = vand.u32 %v1256, 4294901760
        %1262 = vmatpush1.msra.mxu0 %v1261
        %1263 = vmatprep.subr.mxu0 0.0
        %1264 = vmatpush1.msra.mxu0 0.0
        %1265 = vmatprep.subr.mxu0 0.0
        %1266 = vmatpush1.msra.mxu0 0.0
        %1267 = vmatprep.subr.mxu0 0.0
        %1268 = vmatpush1.msra.mxu0 0.0
        %1269 = vmatprep.subr.mxu0 0.0
        %1270 = vmatpush1.msra.mxu0 0.0
        %1271 = vmatprep.subr.mxu0 0.0
        %1272 = vmatpush1.msra.mxu0 0.0
        %1273 = vmatprep.subr.mxu0 0.0
        %1274 = vmatpush1.msra.mxu0 0.0
        %1275 = vmatprep.subr.mxu0 0.0
        %1276 = vmatpush1.msra.mxu0 0.0
        %1277 = vmatprep.subr.mxu0 0.0
        %1278 = vmatpush1.msra.mxu0 0.0
        %1279 = vmatprep.subr.mxu0 0.0
        %1280 = vmatpush1.msra.mxu0 0.0
        %1281 = vmatprep.subr.mxu0 0.0
        %1282 = vmatpush1.msra.mxu0 0.0
        %1283 = vmatprep.subr.mxu0 0.0
        %1284 = vmatpush1.msra.mxu0 0.0
        %1285 = vmatprep.subr.mxu0 0.0
        %1286 = vmatpush1.msra.mxu0 0.0
        %1287 = vmatprep.subr.mxu0 0.0
        %1288 = vmatpush1.msra.mxu0 0.0
        %1289 = vmatprep.subr.mxu0 0.0
        %1290 = vmatpush1.msra.mxu0 0.0
        %1291 = vmatprep.subr.mxu0 0.0
        %1292 = vmatpush1.msra.mxu0 0.0
        %1293 = vmatprep.subr.mxu0 0.0
        %1294 = vmatpush1.msra.mxu0 0.0
        %1295 = vmatprep.subr.mxu0 0.0
        %1296 = vmatpush1.msra.mxu0 0.0
        %1297 = vmatprep.subr.mxu0 0.0
        %1298 = vmatpush1.msra.mxu0 0.0
        %1299 = vmatprep.subr.mxu0 0.0
        %1300 = vmatpush1.msra.mxu0 0.0
        %1301 = vmatprep.subr.mxu0 0.0
        %1302 = vmatpush1.msra.mxu0 0.0
        %1303 = vmatprep.subr.mxu0 0.0
        %1304 = vmatpush1.msra.mxu0 0.0
        %1305 = vmatprep.subr.mxu0 0.0
        %1306 = vmatpush1.msra.mxu0 0.0
        %1307 = vmatprep.subr.mxu0 0.0
        %1308 = vmatpush1.msra.mxu0 0.0
        %1309 = vmatprep.subr.mxu0 0.0
        %1310 = vmatpush1.msra.mxu0 0.0
        %1311 = vmatprep.subr.mxu0 0.0
        %1312 = vmatpush1.msra.mxu0 0.0
        %1313 = vmatprep.subr.mxu0 0.0
        %1314 = vmatpush1.msra.mxu0 0.0
        %1315 = vmatprep.subr.mxu0 0.0
        %1316 = vmatpush1.msra.mxu0 0.0
        %1317 = vmatprep.subr.mxu0 0.0
        %1318 = vmatpush1.msra.mxu0 0.0
        %1319 = vmatprep.subr.mxu0 0.0
        %1320 = vmatpush1.msra.mxu0 0.0
        %1321 = vmatprep.subr.mxu0 0.0
        %1322 = vmatpush1.msra.mxu0 0.0
        %1323 = vmatprep.mubr.f32.mxu0 0.0
        %v1324 = vand.u32 %v224, 4294901760
        %v1325 = vsub.f32 %v224, %v1324
        %v1326 = vand.u32 %v1325, 4294901760
        %v1327 = vsub.f32 %v1325, %v1326
        %v1328 = vand.u32 %v1327, 4294901760
        %1329 = vmatmul.mubr.f32.gmra.mrb[0].mxu0 %v1328
        %v1330 = vpop.f32.mrb[0].mxu0
        %v1331 = vadd.f32 0.0, %v1330
        %v1332 = vpop.f32.mrb[0].mxu0
        %1333 = vmatprep.mubr.f32.mxu0 0.0
        %v1334 = vand.u32 %v227, 4294901760
        %v1335 = vsub.f32 %v227, %v1334
        %v1336 = vand.u32 %v1335, 4294901760
        %v1337 = vsub.f32 %v1335, %v1336
        %v1338 = vand.u32 %v1337, 4294901760
        %1339 = vmatmul.mubr.f32.gmra.mrb[0].mxu0 %v1338
        %v1340 = vpop.f32.mrb[0].mxu0
        %v1341 = vadd.f32 0.0, %v1340
        %v1342 = vpop.f32.mrb[0].mxu0
        %1343 = vdwg.mxu0
        %1344 = vmatprep.subr.mxu0 0.0
        %v1345 = vand.u32 %v1255, 4294901760
        %v1346 = vsub.f32 %v1255, %v1345
        %v1347 = vand.u32 %v1346, 4294901760
        %v1348 = vsub.f32 %v1346, %v1347
        %v1349 = vand.u32 %v1348, 4294901760
        %1350 = vmatpush1.msra.mxu0 %v1349
        %1351 = vmatprep.subr.mxu0 0.0
        %v1352 = vand.u32 %v1256, 4294901760
        %v1353 = vsub.f32 %v1256, %v1352
        %v1354 = vand.u32 %v1353, 4294901760
        %v1355 = vsub.f32 %v1353, %v1354
        %v1356 = vand.u32 %v1355, 4294901760
        %1357 = vmatpush1.msra.mxu0 %v1356
        %1358 = vmatprep.subr.mxu0 0.0
        %1359 = vmatpush1.msra.mxu0 0.0
        %1360 = vmatprep.subr.mxu0 0.0
        %1361 = vmatpush1.msra.mxu0 0.0
        %1362 = vmatprep.subr.mxu0 0.0
        %1363 = vmatpush1.msra.mxu0 0.0
        %1364 = vmatprep.subr.mxu0 0.0
        %1365 = vmatpush1.msra.mxu0 0.0
        %1366 = vmatprep.subr.mxu0 0.0
        %1367 = vmatpush1.msra.mxu0 0.0
        %1368 = vmatprep.subr.mxu0 0.0
        %1369 = vmatpush1.msra.mxu0 0.0
        %1370 = vmatprep.subr.mxu0 0.0
        %1371 = vmatpush1.msra.mxu0 0.0
        %1372 = vmatprep.subr.mxu0 0.0
        %1373 = vmatpush1.msra.mxu0 0.0
        %1374 = vmatprep.subr.mxu0 0.0
        %1375 = vmatpush1.msra.mxu0 0.0
        %1376 = vmatprep.subr.mxu0 0.0
        %1377 = vmatpush1.msra.mxu0 0.0
        %1378 = vmatprep.subr.mxu0 0.0
        %1379 = vmatpush1.msra.mxu0 0.0
        %1380 = vmatprep.subr.mxu0 0.0
        %1381 = vmatpush1.msra.mxu0 0.0
        %1382 = vmatprep.subr.mxu0 0.0
        %1383 = vmatpush1.msra.mxu0 0.0
        %1384 = vmatprep.subr.mxu0 0.0
        %1385 = vmatpush1.msra.mxu0 0.0
        %1386 = vmatprep.subr.mxu0 0.0
        %1387 = vmatpush1.msra.mxu0 0.0
        %1388 = vmatprep.subr.mxu0 0.0
        %1389 = vmatpush1.msra.mxu0 0.0
        %1390 = vmatprep.subr.mxu0 0.0
        %1391 = vmatpush1.msra.mxu0 0.0
        %1392 = vmatprep.subr.mxu0 0.0
        %1393 = vmatpush1.msra.mxu0 0.0
        %1394 = vmatprep.subr.mxu0 0.0
        %1395 = vmatpush1.msra.mxu0 0.0
        %1396 = vmatprep.subr.mxu0 0.0
        %1397 = vmatpush1.msra.mxu0 0.0
        %1398 = vmatprep.subr.mxu0 0.0
        %1399 = vmatpush1.msra.mxu0 0.0
        %1400 = vmatprep.subr.mxu0 0.0
        %1401 = vmatpush1.msra.mxu0 0.0
        %1402 = vmatprep.subr.mxu0 0.0
        %1403 = vmatpush1.msra.mxu0 0.0
        %1404 = vmatprep.subr.mxu0 0.0
        %1405 = vmatpush1.msra.mxu0 0.0
        %1406 = vmatprep.subr.mxu0 0.0
        %1407 = vmatpush1.msra.mxu0 0.0
        %1408 = vmatprep.subr.mxu0 0.0
        %1409 = vmatpush1.msra.mxu0 0.0
        %1410 = vmatprep.subr.mxu0 0.0
        %1411 = vmatpush1.msra.mxu0 0.0
        %1412 = vmatprep.subr.mxu0 0.0
        %1413 = vmatpush1.msra.mxu0 0.0
        %1414 = vmatprep.subr.mxu0 0.0
        %1415 = vmatpush1.msra.mxu0 0.0
        %1416 = vmatprep.subr.mxu0 0.0
        %1417 = vmatpush1.msra.mxu0 0.0
        %1418 = vmatprep.mubr.f32.mxu0 0.0
        %v1419 = vand.u32 %v224, 4294901760
        %1420 = vmatmul.mubr.f32.gmra.mrb[0].mxu0 %v1419
        %v1421 = vpop.f32.mrb[0].mxu0
        %v1422 = vadd.f32 %v1331, %v1421
        %v1423 = vpop.f32.mrb[0].mxu0
        %1424 = vmatprep.mubr.f32.mxu0 0.0
        %v1425 = vand.u32 %v227, 4294901760
        %1426 = vmatmul.mubr.f32.gmra.mrb[0].mxu0 %v1425
        %v1427 = vpop.f32.mrb[0].mxu0
        %v1428 = vadd.f32 %v1341, %v1427
        %v1429 = vpop.f32.mrb[0].mxu0
        %1430 = vdwg.mxu0
        %1431 = vmatprep.subr.mxu0 0.0
        %v1432 = vand.u32 %v1255, 4294901760
        %v1433 = vsub.f32 %v1255, %v1432
        %1434 = vmatpush1.msra.mxu0 %v1433
        %1435 = vmatprep.subr.mxu0 0.0
        %v1436 = vand.u32 %v1256, 4294901760
        %v1437 = vsub.f32 %v1256, %v1436
        %1438 = vmatpush1.msra.mxu0 %v1437
        %1439 = vmatprep.subr.mxu0 0.0
        %1440 = vmatpush1.msra.mxu0 0.0
        %1441 = vmatprep.subr.mxu0 0.0
        %1442 = vmatpush1.msra.mxu0 0.0
        %1443 = vmatprep.subr.mxu0 0.0
        %1444 = vmatpush1.msra.mxu0 0.0
        %1445 = vmatprep.subr.mxu0 0.0
        %1446 = vmatpush1.msra.mxu0 0.0
        %1447 = vmatprep.subr.mxu0 0.0
        %1448 = vmatpush1.msra.mxu0 0.0
        %1449 = vmatprep.subr.mxu0 0.0
        %1450 = vmatpush1.msra.mxu0 0.0
        %1451 = vmatprep.subr.mxu0 0.0
        %1452 = vmatpush1.msra.mxu0 0.0
        %1453 = vmatprep.subr.mxu0 0.0
        %1454 = vmatpush1.msra.mxu0 0.0
        %1455 = vmatprep.subr.mxu0 0.0
        %1456 = vmatpush1.msra.mxu0 0.0
        %1457 = vmatprep.subr.mxu0 0.0
        %1458 = vmatpush1.msra.mxu0 0.0
        %1459 = vmatprep.subr.mxu0 0.0
        %1460 = vmatpush1.msra.mxu0 0.0
        %1461 = vmatprep.subr.mxu0 0.0
        %1462 = vmatpush1.msra.mxu0 0.0
        %1463 = vmatprep.subr.mxu0 0.0
        %1464 = vmatpush1.msra.mxu0 0.0
        %1465 = vmatprep.subr.mxu0 0.0
        %1466 = vmatpush1.msra.mxu0 0.0
        %1467 = vmatprep.subr.mxu0 0.0
        %1468 = vmatpush1.msra.mxu0 0.0
        %1469 = vmatprep.subr.mxu0 0.0
        %1470 = vmatpush1.msra.mxu0 0.0
        %1471 = vmatprep.subr.mxu0 0.0
        %1472 = vmatpush1.msra.mxu0 0.0
        %1473 = vmatprep.subr.mxu0 0.0
        %1474 = vmatpush1.msra.mxu0 0.0
        %1475 = vmatprep.subr.mxu0 0.0
        %1476 = vmatpush1.msra.mxu0 0.0
        %1477 = vmatprep.subr.mxu0 0.0
        %1478 = vmatpush1.msra.mxu0 0.0
        %1479 = vmatprep.subr.mxu0 0.0
        %1480 = vmatpush1.msra.mxu0 0.0
        %1481 = vmatprep.subr.mxu0 0.0
        %1482 = vmatpush1.msra.mxu0 0.0
        %1483 = vmatprep.subr.mxu0 0.0
        %1484 = vmatpush1.msra.mxu0 0.0
        %1485 = vmatprep.subr.mxu0 0.0
        %1486 = vmatpush1.msra.mxu0 0.0
        %1487 = vmatprep.subr.mxu0 0.0
        %1488 = vmatpush1.msra.mxu0 0.0
        %1489 = vmatprep.subr.mxu0 0.0
        %1490 = vmatpush1.msra.mxu0 0.0
        %1491 = vmatprep.subr.mxu0 0.0
        %1492 = vmatpush1.msra.mxu0 0.0
        %1493 = vmatprep.subr.mxu0 0.0
        %1494 = vmatpush1.msra.mxu0 0.0
        %1495 = vmatprep.subr.mxu0 0.0
        %1496 = vmatpush1.msra.mxu0 0.0
        %1497 = vmatprep.subr.mxu0 0.0
        %1498 = vmatpush1.msra.mxu0 0.0
        %1499 = vmatprep.mubr.f32.mxu0 0.0
        %v1500 = vand.u32 %v224, 4294901760
        %v1501 = vsub.f32 %v224, %v1500
        %1502 = vmatmul.mubr.f32.gmra.mrb[0].mxu0 %v1501
        %v1503 = vpop.f32.mrb[0].mxu0
        %v1504 = vadd.f32 %v1422, %v1503
        %v1505 = vpop.f32.mrb[0].mxu0
        %1506 = vmatprep.mubr.f32.mxu0 0.0
        %v1507 = vand.u32 %v227, 4294901760
        %v1508 = vsub.f32 %v227, %v1507
        %1509 = vmatmul.mubr.f32.gmra.mrb[0].mxu0 %v1508
        %v1510 = vpop.f32.mrb[0].mxu0
        %v1511 = vadd.f32 %v1428, %v1510
        %v1512 = vpop.f32.mrb[0].mxu0
        %1513 = vdwg.mxu0
        %1514 = vmatprep.subr.mxu0 0.0
        %v1515 = vand.u32 %v1255, 4294901760
        %1516 = vmatpush1.msra.mxu0 %v1515
        %1517 = vmatprep.subr.mxu0 0.0
        %v1518 = vand.u32 %v1256, 4294901760
        %1519 = vmatpush1.msra.mxu0 %v1518
        %1520 = vmatprep.subr.mxu0 0.0
        %1521 = vmatpush1.msra.mxu0 0.0
        %1522 = vmatprep.subr.mxu0 0.0
        %1523 = vmatpush1.msra.mxu0 0.0
        %1524 = vmatprep.subr.mxu0 0.0
        %1525 = vmatpush1.msra.mxu0 0.0
        %1526 = vmatprep.subr.mxu0 0.0
        %1527 = vmatpush1.msra.mxu0 0.0
        %1528 = vmatprep.subr.mxu0 0.0
        %1529 = vmatpush1.msra.mxu0 0.0
        %1530 = vmatprep.subr.mxu0 0.0
        %1531 = vmatpush1.msra.mxu0 0.0
        %1532 = vmatprep.subr.mxu0 0.0
        %1533 = vmatpush1.msra.mxu0 0.0
        %1534 = vmatprep.subr.mxu0 0.0
        %1535 = vmatpush1.msra.mxu0 0.0
        %1536 = vmatprep.subr.mxu0 0.0
        %1537 = vmatpush1.msra.mxu0 0.0
        %1538 = vmatprep.subr.mxu0 0.0
        %1539 = vmatpush1.msra.mxu0 0.0
        %1540 = vmatprep.subr.mxu0 0.0
        %1541 = vmatpush1.msra.mxu0 0.0
        %1542 = vmatprep.subr.mxu0 0.0
        %1543 = vmatpush1.msra.mxu0 0.0
        %1544 = vmatprep.subr.mxu0 0.0
        %1545 = vmatpush1.msra.mxu0 0.0
        %1546 = vmatprep.subr.mxu0 0.0
        %1547 = vmatpush1.msra.mxu0 0.0
        %1548 = vmatprep.subr.mxu0 0.0
        %1549 = vmatpush1.msra.mxu0 0.0
        %1550 = vmatprep.subr.mxu0 0.0
        %1551 = vmatpush1.msra.mxu0 0.0
        %1552 = vmatprep.subr.mxu0 0.0
        %1553 = vmatpush1.msra.mxu0 0.0
        %1554 = vmatprep.subr.mxu0 0.0
        %1555 = vmatpush1.msra.mxu0 0.0
        %1556 = vmatprep.subr.mxu0 0.0
        %1557 = vmatpush1.msra.mxu0 0.0
        %1558 = vmatprep.subr.mxu0 0.0
        %1559 = vmatpush1.msra.mxu0 0.0
        %1560 = vmatprep.subr.mxu0 0.0
        %1561 = vmatpush1.msra.mxu0 0.0
        %1562 = vmatprep.subr.mxu0 0.0
        %1563 = vmatpush1.msra.mxu0 0.0
        %1564 = vmatprep.subr.mxu0 0.0
        %1565 = vmatpush1.msra.mxu0 0.0
        %1566 = vmatprep.subr.mxu0 0.0
        %1567 = vmatpush1.msra.mxu0 0.0
        %1568 = vmatprep.subr.mxu0 0.0
        %1569 = vmatpush1.msra.mxu0 0.0
        %1570 = vmatprep.subr.mxu0 0.0
        %1571 = vmatpush1.msra.mxu0 0.0
        %1572 = vmatprep.subr.mxu0 0.0
        %1573 = vmatpush1.msra.mxu0 0.0
        %1574 = vmatprep.subr.mxu0 0.0
        %1575 = vmatpush1.msra.mxu0 0.0
        %1576 = vmatprep.subr.mxu0 0.0
        %1577 = vmatpush1.msra.mxu0 0.0
        %1578 = vmatprep.subr.mxu0 0.0
        %1579 = vmatpush1.msra.mxu0 0.0
        %1580 = vmatprep.mubr.f32.mxu0 0.0
        %v1581 = vand.u32 %v224, 4294901760
        %v1582 = vsub.f32 %v224, %v1581
        %v1583 = vand.u32 %v1582, 4294901760
        %1584 = vmatmul.mubr.f32.gmra.mrb[0].mxu0 %v1583
        %v1585 = vpop.f32.mrb[0].mxu0
        %v1586 = vadd.f32 %v1504, %v1585
        %v1587 = vpop.f32.mrb[0].mxu0
        %1588 = vmatprep.mubr.f32.mxu0 0.0
        %v1589 = vand.u32 %v227, 4294901760
        %v1590 = vsub.f32 %v227, %v1589
        %v1591 = vand.u32 %v1590, 4294901760
        %1592 = vmatmul.mubr.f32.gmra.mrb[0].mxu0 %v1591
        %v1593 = vpop.f32.mrb[0].mxu0
        %v1594 = vadd.f32 %v1511, %v1593
        %v1595 = vpop.f32.mrb[0].mxu0
        %1596 = vdwg.mxu0
        %1597 = vmatprep.subr.mxu0 0.0
        %v1598 = vand.u32 %v1255, 4294901760
        %v1599 = vsub.f32 %v1255, %v1598
        %v1600 = vand.u32 %v1599, 4294901760
        %1601 = vmatpush1.msra.mxu0 %v1600
        %1602 = vmatprep.subr.mxu0 0.0
        %v1603 = vand.u32 %v1256, 4294901760
        %v1604 = vsub.f32 %v1256, %v1603
        %v1605 = vand.u32 %v1604, 4294901760
        %1606 = vmatpush1.msra.mxu0 %v1605
        %1607 = vmatprep.subr.mxu0 0.0
        %1608 = vmatpush1.msra.mxu0 0.0
        %1609 = vmatprep.subr.mxu0 0.0
        %1610 = vmatpush1.msra.mxu0 0.0
        %1611 = vmatprep.subr.mxu0 0.0
        %1612 = vmatpush1.msra.mxu0 0.0
        %1613 = vmatprep.subr.mxu0 0.0
        %1614 = vmatpush1.msra.mxu0 0.0
        %1615 = vmatprep.subr.mxu0 0.0
        %1616 = vmatpush1.msra.mxu0 0.0
        %1617 = vmatprep.subr.mxu0 0.0
        %1618 = vmatpush1.msra.mxu0 0.0
        %1619 = vmatprep.subr.mxu0 0.0
        %1620 = vmatpush1.msra.mxu0 0.0
        %1621 = vmatprep.subr.mxu0 0.0
        %1622 = vmatpush1.msra.mxu0 0.0
        %1623 = vmatprep.subr.mxu0 0.0
        %1624 = vmatpush1.msra.mxu0 0.0
        %1625 = vmatprep.subr.mxu0 0.0
        %1626 = vmatpush1.msra.mxu0 0.0
        %1627 = vmatprep.subr.mxu0 0.0
        %1628 = vmatpush1.msra.mxu0 0.0
        %1629 = vmatprep.subr.mxu0 0.0
        %1630 = vmatpush1.msra.mxu0 0.0
        %1631 = vmatprep.subr.mxu0 0.0
        %1632 = vmatpush1.msra.mxu0 0.0
        %1633 = vmatprep.subr.mxu0 0.0
        %1634 = vmatpush1.msra.mxu0 0.0
        %1635 = vmatprep.subr.mxu0 0.0
        %1636 = vmatpush1.msra.mxu0 0.0
        %1637 = vmatprep.subr.mxu0 0.0
        %1638 = vmatpush1.msra.mxu0 0.0
        %1639 = vmatprep.subr.mxu0 0.0
        %1640 = vmatpush1.msra.mxu0 0.0
        %1641 = vmatprep.subr.mxu0 0.0
        %1642 = vmatpush1.msra.mxu0 0.0
        %1643 = vmatprep.subr.mxu0 0.0
        %1644 = vmatpush1.msra.mxu0 0.0
        %1645 = vmatprep.subr.mxu0 0.0
        %1646 = vmatpush1.msra.mxu0 0.0
        %1647 = vmatprep.subr.mxu0 0.0
        %1648 = vmatpush1.msra.mxu0 0.0
        %1649 = vmatprep.subr.mxu0 0.0
        %1650 = vmatpush1.msra.mxu0 0.0
        %1651 = vmatprep.subr.mxu0 0.0
        %1652 = vmatpush1.msra.mxu0 0.0
        %1653 = vmatprep.subr.mxu0 0.0
        %1654 = vmatpush1.msra.mxu0 0.0
        %1655 = vmatprep.subr.mxu0 0.0
        %1656 = vmatpush1.msra.mxu0 0.0
        %1657 = vmatprep.subr.mxu0 0.0
        %1658 = vmatpush1.msra.mxu0 0.0
        %1659 = vmatprep.subr.mxu0 0.0
        %1660 = vmatpush1.msra.mxu0 0.0
        %1661 = vmatprep.subr.mxu0 0.0
        %1662 = vmatpush1.msra.mxu0 0.0
        %1663 = vmatprep.subr.mxu0 0.0
        %1664 = vmatpush1.msra.mxu0 0.0
        %1665 = vmatprep.subr.mxu0 0.0
        %1666 = vmatpush1.msra.mxu0 0.0
        %1667 = vmatprep.mubr.f32.mxu0 0.0
        %v1668 = vand.u32 %v224, 4294901760
        %1669 = vmatmul.mubr.f32.gmra.mrb[0].mxu0 %v1668
        %v1670 = vpop.f32.mrb[0].mxu0
        %v1671 = vadd.f32 %v1586, %v1670
        %v1672 = vpop.f32.mrb[0].mxu0
        %1673 = vmatprep.mubr.f32.mxu0 0.0
        %v1674 = vand.u32 %v227, 4294901760
        %1675 = vmatmul.mubr.f32.gmra.mrb[0].mxu0 %v1674
        %v1676 = vpop.f32.mrb[0].mxu0
        %v1677 = vadd.f32 %v1594, %v1676
        %v1678 = vpop.f32.mrb[0].mxu0
        %1679 = vdwg.mxu0
        %1680 = vmatprep.subr.mxu0 0.0
        %v1681 = vand.u32 %v1255, 4294901760
        %1682 = vmatpush1.msra.mxu0 %v1681
        %1683 = vmatprep.subr.mxu0 0.0
        %v1684 = vand.u32 %v1256, 4294901760
        %1685 = vmatpush1.msra.mxu0 %v1684
        %1686 = vmatprep.subr.mxu0 0.0
        %1687 = vmatpush1.msra.mxu0 0.0
        %1688 = vmatprep.subr.mxu0 0.0
        %1689 = vmatpush1.msra.mxu0 0.0
        %1690 = vmatprep.subr.mxu0 0.0
        %1691 = vmatpush1.msra.mxu0 0.0
        %1692 = vmatprep.subr.mxu0 0.0
        %1693 = vmatpush1.msra.mxu0 0.0
        %1694 = vmatprep.subr.mxu0 0.0
        %1695 = vmatpush1.msra.mxu0 0.0
        %1696 = vmatprep.subr.mxu0 0.0
        %1697 = vmatpush1.msra.mxu0 0.0
        %1698 = vmatprep.subr.mxu0 0.0
        %1699 = vmatpush1.msra.mxu0 0.0
        %1700 = vmatprep.subr.mxu0 0.0
        %1701 = vmatpush1.msra.mxu0 0.0
        %1702 = vmatprep.subr.mxu0 0.0
        %1703 = vmatpush1.msra.mxu0 0.0
        %1704 = vmatprep.subr.mxu0 0.0
        %1705 = vmatpush1.msra.mxu0 0.0
        %1706 = vmatprep.subr.mxu0 0.0
        %1707 = vmatpush1.msra.mxu0 0.0
        %1708 = vmatprep.subr.mxu0 0.0
        %1709 = vmatpush1.msra.mxu0 0.0
        %1710 = vmatprep.subr.mxu0 0.0
        %1711 = vmatpush1.msra.mxu0 0.0
        %1712 = vmatprep.subr.mxu0 0.0
        %1713 = vmatpush1.msra.mxu0 0.0
        %1714 = vmatprep.subr.mxu0 0.0
        %1715 = vmatpush1.msra.mxu0 0.0
        %1716 = vmatprep.subr.mxu0 0.0
        %1717 = vmatpush1.msra.mxu0 0.0
        %1718 = vmatprep.subr.mxu0 0.0
        %1719 = vmatpush1.msra.mxu0 0.0
        %1720 = vmatprep.subr.mxu0 0.0
        %1721 = vmatpush1.msra.mxu0 0.0
        %1722 = vmatprep.subr.mxu0 0.0
        %1723 = vmatpush1.msra.mxu0 0.0
        %1724 = vmatprep.subr.mxu0 0.0
        %1725 = vmatpush1.msra.mxu0 0.0
        %1726 = vmatprep.subr.mxu0 0.0
        %1727 = vmatpush1.msra.mxu0 0.0
        %1728 = vmatprep.subr.mxu0 0.0
        %1729 = vmatpush1.msra.mxu0 0.0
        %1730 = vmatprep.subr.mxu0 0.0
        %1731 = vmatpush1.msra.mxu0 0.0
        %1732 = vmatprep.subr.mxu0 0.0
        %1733 = vmatpush1.msra.mxu0 0.0
        %1734 = vmatprep.subr.mxu0 0.0
        %1735 = vmatpush1.msra.mxu0 0.0
        %1736 = vmatprep.subr.mxu0 0.0
        %1737 = vmatpush1.msra.mxu0 0.0
        %1738 = vmatprep.subr.mxu0 0.0
        %1739 = vmatpush1.msra.mxu0 0.0
        %1740 = vmatprep.subr.mxu0 0.0
        %1741 = vmatpush1.msra.mxu0 0.0
        %1742 = vmatprep.subr.mxu0 0.0
        %1743 = vmatpush1.msra.mxu0 0.0
        %1744 = vmatprep.subr.mxu0 0.0
        %1745 = vmatpush1.msra.mxu0 0.0
        %1746 = vmatprep.mubr.f32.mxu0 0.0
        %v1747 = vand.u32 %v224, 4294901760
        %1748 = vmatmul.mubr.f32.gmra.mrb[0].mxu0 %v1747
        %v1749 = vpop.f32.mrb[0].mxu0
        %v1750 = vadd.f32 %v1671, %v1749
        %v1751 = vpop.f32.mrb[0].mxu0
        %1752 = vmatprep.mubr.f32.mxu0 0.0
        %v1753 = vand.u32 %v227, 4294901760
        %1754 = vmatmul.mubr.f32.gmra.mrb[0].mxu0 %v1753
        %v1755 = vpop.f32.mrb[0].mxu0
        %v1756 = vadd.f32 %v1677, %v1755
        %v1757 = vpop.f32.mrb[0].mxu0
        %1758 = vdwg.mxu0
        %v1760 = vsel %vm222, %v1750, 0
        %v1763 = vsel %vm222, %v1756, 0
        %1765 = vmatprep.subr.mxu0 0.0
        %v1766 = vand.u32 %v210, 4294901760
        %1767 = vmatpush1.msra.mxu0 %v1766
        %1768 = vmatprep.subr.mxu0 0.0
        %v1769 = vand.u32 %v211, 4294901760
        %1770 = vmatpush1.msra.mxu0 %v1769
        %1771 = vmatprep.subr.mxu0 0.0
        %1772 = vmatpush1.msra.mxu0 0.0
        %1773 = vmatprep.subr.mxu0 0.0
        %1774 = vmatpush1.msra.mxu0 0.0
        %1775 = vmatprep.subr.mxu0 0.0
        %1776 = vmatpush1.msra.mxu0 0.0
        %1777 = vmatprep.subr.mxu0 0.0
        %1778 = vmatpush1.msra.mxu0 0.0
        %1779 = vmatprep.subr.mxu0 0.0
        %1780 = vmatpush1.msra.mxu0 0.0
        %1781 = vmatprep.subr.mxu0 0.0
        %1782 = vmatpush1.msra.mxu0 0.0
        %1783 = vmatprep.subr.mxu0 0.0
        %1784 = vmatpush1.msra.mxu0 0.0
        %1785 = vmatprep.subr.mxu0 0.0
        %1786 = vmatpush1.msra.mxu0 0.0
        %1787 = vmatprep.subr.mxu0 0.0
        %1788 = vmatpush1.msra.mxu0 0.0
        %1789 = vmatprep.subr.mxu0 0.0
        %1790 = vmatpush1.msra.mxu0 0.0
        %1791 = vmatprep.subr.mxu0 0.0
        %1792 = vmatpush1.msra.mxu0 0.0
        %1793 = vmatprep.subr.mxu0 0.0
        %1794 = vmatpush1.msra.mxu0 0.0
        %1795 = vmatprep.subr.mxu0 0.0
        %1796 = vmatpush1.msra.mxu0 0.0
        %1797 = vmatprep.subr.mxu0 0.0
        %1798 = vmatpush1.msra.mxu0 0.0
        %1799 = vmatprep.subr.mxu0 0.0
        %1800 = vmatpush1.msra.mxu0 0.0
        %1801 = vmatprep.subr.mxu0 0.0
        %1802 = vmatpush1.msra.mxu0 0.0
        %1803 = vmatprep.subr.mxu0 0.0
        %1804 = vmatpush1.msra.mxu0 0.0
        %1805 = vmatprep.subr.mxu0 0.0
        %1806 = vmatpush1.msra.mxu0 0.0
        %1807 = vmatprep.subr.mxu0 0.0
        %1808 = vmatpush1.msra.mxu0 0.0
        %1809 = vmatprep.subr.mxu0 0.0
        %1810 = vmatpush1.msra.mxu0 0.0
        %1811 = vmatprep.subr.mxu0 0.0
        %1812 = vmatpush1.msra.mxu0 0.0
        %1813 = vmatprep.subr.mxu0 0.0
        %1814 = vmatpush1.msra.mxu0 0.0
        %1815 = vmatprep.subr.mxu0 0.0
        %1816 = vmatpush1.msra.mxu0 0.0
        %1817 = vmatprep.subr.mxu0 0.0
        %1818 = vmatpush1.msra.mxu0 0.0
        %1819 = vmatprep.subr.mxu0 0.0
        %1820 = vmatpush1.msra.mxu0 0.0
        %1821 = vmatprep.subr.mxu0 0.0
        %1822 = vmatpush1.msra.mxu0 0.0
        %1823 = vmatprep.subr.mxu0 0.0
        %1824 = vmatpush1.msra.mxu0 0.0
        %1825 = vmatprep.subr.mxu0 0.0
        %1826 = vmatpush1.msra.mxu0 0.0
        %1827 = vmatprep.subr.mxu0 0.0
        %1828 = vmatpush1.msra.mxu0 0.0
        %1829 = vmatprep.subr.mxu0 0.0
        %1830 = vmatpush1.msra.mxu0 0.0
        %1831 = vmatprep.mubr.f32.mxu0 0.0
        %v1832 = vand.u32 %v1760, 4294901760
        %v1833 = vsub.f32 %v1760, %v1832
        %v1834 = vand.u32 %v1833, 4294901760
        %v1835 = vsub.f32 %v1833, %v1834
        %v1836 = vand.u32 %v1835, 4294901760
        %1837 = vmatmul.mubr.f32.gmra.mrb[0].mxu0 %v1836
        %v1838 = vpop.f32.mrb[0].mxu0
        %v1839 = vadd.f32 0.0, %v1838
        %v1840 = vpop.f32.mrb[0].mxu0
        %1841 = vmatprep.mubr.f32.mxu0 0.0
        %v1842 = vand.u32 %v1763, 4294901760
        %v1843 = vsub.f32 %v1763, %v1842
        %v1844 = vand.u32 %v1843, 4294901760
        %v1845 = vsub.f32 %v1843, %v1844
        %v1846 = vand.u32 %v1845, 4294901760
        %1847 = vmatmul.mubr.f32.gmra.mrb[0].mxu0 %v1846
        %v1848 = vpop.f32.mrb[0].mxu0
        %v1849 = vadd.f32 0.0, %v1848
        %v1850 = vpop.f32.mrb[0].mxu0
        %1851 = vdwg.mxu0
        %1852 = vmatprep.subr.mxu0 0.0
        %v1853 = vand.u32 %v210, 4294901760
        %v1854 = vsub.f32 %v210, %v1853
        %v1855 = vand.u32 %v1854, 4294901760
        %v1856 = vsub.f32 %v1854, %v1855
        %v1857 = vand.u32 %v1856, 4294901760
        %1858 = vmatpush1.msra.mxu0 %v1857
        %1859 = vmatprep.subr.mxu0 0.0
        %v1860 = vand.u32 %v211, 4294901760
        %v1861 = vsub.f32 %v211, %v1860
        %v1862 = vand.u32 %v1861, 4294901760
        %v1863 = vsub.f32 %v1861, %v1862
        %v1864 = vand.u32 %v1863, 4294901760
        %1865 = vmatpush1.msra.mxu0 %v1864
        %1866 = vmatprep.subr.mxu0 0.0
        %1867 = vmatpush1.msra.mxu0 0.0
        %1868 = vmatprep.subr.mxu0 0.0
        %1869 = vmatpush1.msra.mxu0 0.0
        %1870 = vmatprep.subr.mxu0 0.0
        %1871 = vmatpush1.msra.mxu0 0.0
        %1872 = vmatprep.subr.mxu0 0.0
        %1873 = vmatpush1.msra.mxu0 0.0
        %1874 = vmatprep.subr.mxu0 0.0
        %1875 = vmatpush1.msra.mxu0 0.0
        %1876 = vmatprep.subr.mxu0 0.0
        %1877 = vmatpush1.msra.mxu0 0.0
        %1878 = vmatprep.subr.mxu0 0.0
        %1879 = vmatpush1.msra.mxu0 0.0
        %1880 = vmatprep.subr.mxu0 0.0
        %1881 = vmatpush1.msra.mxu0 0.0
        %1882 = vmatprep.subr.mxu0 0.0
        %1883 = vmatpush1.msra.mxu0 0.0
        %1884 = vmatprep.subr.mxu0 0.0
        %1885 = vmatpush1.msra.mxu0 0.0
        %1886 = vmatprep.subr.mxu0 0.0
        %1887 = vmatpush1.msra.mxu0 0.0
        %1888 = vmatprep.subr.mxu0 0.0
        %1889 = vmatpush1.msra.mxu0 0.0
        %1890 = vmatprep.subr.mxu0 0.0
        %1891 = vmatpush1.msra.mxu0 0.0
        %1892 = vmatprep.subr.mxu0 0.0
        %1893 = vmatpush1.msra.mxu0 0.0
        %1894 = vmatprep.subr.mxu0 0.0
        %1895 = vmatpush1.msra.mxu0 0.0
        %1896 = vmatprep.subr.mxu0 0.0
        %1897 = vmatpush1.msra.mxu0 0.0
        %1898 = vmatprep.subr.mxu0 0.0
        %1899 = vmatpush1.msra.mxu0 0.0
        %1900 = vmatprep.subr.mxu0 0.0
        %1901 = vmatpush1.msra.mxu0 0.0
        %1902 = vmatprep.subr.mxu0 0.0
        %1903 = vmatpush1.msra.mxu0 0.0
        %1904 = vmatprep.subr.mxu0 0.0
        %1905 = vmatpush1.msra.mxu0 0.0
        %1906 = vmatprep.subr.mxu0 0.0
        %1907 = vmatpush1.msra.mxu0 0.0
        %1908 = vmatprep.subr.mxu0 0.0
        %1909 = vmatpush1.msra.mxu0 0.0
        %1910 = vmatprep.subr.mxu0 0.0
        %1911 = vmatpush1.msra.mxu0 0.0
        %1912 = vmatprep.subr.mxu0 0.0
        %1913 = vmatpush1.msra.mxu0 0.0
        %1914 = vmatprep.subr.mxu0 0.0
        %1915 = vmatpush1.msra.mxu0 0.0
        %1916 = vmatprep.subr.mxu0 0.0
        %1917 = vmatpush1.msra.mxu0 0.0
        %1918 = vmatprep.subr.mxu0 0.0
        %1919 = vmatpush1.msra.mxu0 0.0
        %1920 = vmatprep.subr.mxu0 0.0
        %1921 = vmatpush1.msra.mxu0 0.0
        %1922 = vmatprep.subr.mxu0 0.0
        %1923 = vmatpush1.msra.mxu0 0.0
        %1924 = vmatprep.subr.mxu0 0.0
        %1925 = vmatpush1.msra.mxu0 0.0
        %1926 = vmatprep.mubr.f32.mxu0 0.0
        %v1927 = vand.u32 %v1760, 4294901760
        %1928 = vmatmul.mubr.f32.gmra.mrb[0].mxu0 %v1927
        %v1929 = vpop.f32.mrb[0].mxu0
        %v1930 = vadd.f32 %v1839, %v1929
        %v1931 = vpop.f32.mrb[0].mxu0
        %1932 = vmatprep.mubr.f32.mxu0 0.0
        %v1933 = vand.u32 %v1763, 4294901760
        %1934 = vmatmul.mubr.f32.gmra.mrb[0].mxu0 %v1933
        %v1935 = vpop.f32.mrb[0].mxu0
        %v1936 = vadd.f32 %v1849, %v1935
        %v1937 = vpop.f32.mrb[0].mxu0
        %1938 = vdwg.mxu0
        %1939 = vmatprep.subr.mxu0 0.0
        %v1940 = vand.u32 %v210, 4294901760
        %v1941 = vsub.f32 %v210, %v1940
        %1942 = vmatpush1.msra.mxu0 %v1941
        %1943 = vmatprep.subr.mxu0 0.0
        %v1944 = vand.u32 %v211, 4294901760
        %v1945 = vsub.f32 %v211, %v1944
        %1946 = vmatpush1.msra.mxu0 %v1945
        %1947 = vmatprep.subr.mxu0 0.0
        %1948 = vmatpush1.msra.mxu0 0.0
        %1949 = vmatprep.subr.mxu0 0.0
        %1950 = vmatpush1.msra.mxu0 0.0
        %1951 = vmatprep.subr.mxu0 0.0
        %1952 = vmatpush1.msra.mxu0 0.0
        %1953 = vmatprep.subr.mxu0 0.0
        %1954 = vmatpush1.msra.mxu0 0.0
        %1955 = vmatprep.subr.mxu0 0.0
        %1956 = vmatpush1.msra.mxu0 0.0
        %1957 = vmatprep.subr.mxu0 0.0
        %1958 = vmatpush1.msra.mxu0 0.0
        %1959 = vmatprep.subr.mxu0 0.0
        %1960 = vmatpush1.msra.mxu0 0.0
        %1961 = vmatprep.subr.mxu0 0.0
        %1962 = vmatpush1.msra.mxu0 0.0
        %1963 = vmatprep.subr.mxu0 0.0
        %1964 = vmatpush1.msra.mxu0 0.0
        %1965 = vmatprep.subr.mxu0 0.0
        %1966 = vmatpush1.msra.mxu0 0.0
        %1967 = vmatprep.subr.mxu0 0.0
        %1968 = vmatpush1.msra.mxu0 0.0
        %1969 = vmatprep.subr.mxu0 0.0
        %1970 = vmatpush1.msra.mxu0 0.0
        %1971 = vmatprep.subr.mxu0 0.0
        %1972 = vmatpush1.msra.mxu0 0.0
        %1973 = vmatprep.subr.mxu0 0.0
        %1974 = vmatpush1.msra.mxu0 0.0
        %1975 = vmatprep.subr.mxu0 0.0
        %1976 = vmatpush1.msra.mxu0 0.0
        %1977 = vmatprep.subr.mxu0 0.0
        %1978 = vmatpush1.msra.mxu0 0.0
        %1979 = vmatprep.subr.mxu0 0.0
        %1980 = vmatpush1.msra.mxu0 0.0
        %1981 = vmatprep.subr.mxu0 0.0
        %1982 = vmatpush1.msra.mxu0 0.0
        %1983 = vmatprep.subr.mxu0 0.0
        %1984 = vmatpush1.msra.mxu0 0.0
        %1985 = vmatprep.subr.mxu0 0.0
        %1986 = vmatpush1.msra.mxu0 0.0
        %1987 = vmatprep.subr.mxu0 0.0
        %1988 = vmatpush1.msra.mxu0 0.0
        %1989 = vmatprep.subr.mxu0 0.0
        %1990 = vmatpush1.msra.mxu0 0.0
        %1991 = vmatprep.subr.mxu0 0.0
        %1992 = vmatpush1.msra.mxu0 0.0
        %1993 = vmatprep.subr.mxu0 0.0
        %1994 = vmatpush1.msra.mxu0 0.0
        %1995 = vmatprep.subr.mxu0 0.0
        %1996 = vmatpush1.msra.mxu0 0.0
        %1997 = vmatprep.subr.mxu0 0.0
        %1998 = vmatpush1.msra.mxu0 0.0
        %1999 = vmatprep.subr.mxu0 0.0
        %2000 = vmatpush1.msra.mxu0 0.0
        %2001 = vmatprep.subr.mxu0 0.0
        %2002 = vmatpush1.msra.mxu0 0.0
        %2003 = vmatprep.subr.mxu0 0.0
        %2004 = vmatpush1.msra.mxu0 0.0
        %2005 = vmatprep.subr.mxu0 0.0
        %2006 = vmatpush1.msra.mxu0 0.0
        %2007 = vmatprep.mubr.f32.mxu0 0.0
        %v2008 = vand.u32 %v1760, 4294901760
        %v2009 = vsub.f32 %v1760, %v2008
        %2010 = vmatmul.mubr.f32.gmra.mrb[0].mxu0 %v2009
        %v2011 = vpop.f32.mrb[0].mxu0
        %v2012 = vadd.f32 %v1930, %v2011
        %v2013 = vpop.f32.mrb[0].mxu0
        %2014 = vmatprep.mubr.f32.mxu0 0.0
        %v2015 = vand.u32 %v1763, 4294901760
        %v2016 = vsub.f32 %v1763, %v2015
        %2017 = vmatmul.mubr.f32.gmra.mrb[0].mxu0 %v2016
        %v2018 = vpop.f32.mrb[0].mxu0
        %v2019 = vadd.f32 %v1936, %v2018
        %v2020 = vpop.f32.mrb[0].mxu0
        %2021 = vdwg.mxu0
        %2022 = vmatprep.subr.mxu0 0.0
        %v2023 = vand.u32 %v210, 4294901760
        %2024 = vmatpush1.msra.mxu0 %v2023
        %2025 = vmatprep.subr.mxu0 0.0
        %v2026 = vand.u32 %v211, 4294901760
        %2027 = vmatpush1.msra.mxu0 %v2026
        %2028 = vmatprep.subr.mxu0 0.0
        %2029 = vmatpush1.msra.mxu0 0.0
        %2030 = vmatprep.subr.mxu0 0.0
        %2031 = vmatpush1.msra.mxu0 0.0
        %2032 = vmatprep.subr.mxu0 0.0
        %2033 = vmatpush1.msra.mxu0 0.0
        %2034 = vmatprep.subr.mxu0 0.0
        %2035 = vmatpush1.msra.mxu0 0.0
        %2036 = vmatprep.subr.mxu0 0.0
        %2037 = vmatpush1.msra.mxu0 0.0
        %2038 = vmatprep.subr.mxu0 0.0
        %2039 = vmatpush1.msra.mxu0 0.0
        %2040 = vmatprep.subr.mxu0 0.0
        %2041 = vmatpush1.msra.mxu0 0.0
        %2042 = vmatprep.subr.mxu0 0.0
        %2043 = vmatpush1.msra.mxu0 0.0
        %2044 = vmatprep.subr.mxu0 0.0
        %2045 = vmatpush1.msra.mxu0 0.0
        %2046 = vmatprep.subr.mxu0 0.0
        %2047 = vmatpush1.msra.mxu0 0.0
        %2048 = vmatprep.subr.mxu0 0.0
        %2049 = vmatpush1.msra.mxu0 0.0
        %2050 = vmatprep.subr.mxu0 0.0
        %2051 = vmatpush1.msra.mxu0 0.0
        %2052 = vmatprep.subr.mxu0 0.0
        %2053 = vmatpush1.msra.mxu0 0.0
        %2054 = vmatprep.subr.mxu0 0.0
        %2055 = vmatpush1.msra.mxu0 0.0
        %2056 = vmatprep.subr.mxu0 0.0
        %2057 = vmatpush1.msra.mxu0 0.0
        %2058 = vmatprep.subr.mxu0 0.0
        %2059 = vmatpush1.msra.mxu0 0.0
        %2060 = vmatprep.subr.mxu0 0.0
        %2061 = vmatpush1.msra.mxu0 0.0
        %2062 = vmatprep.subr.mxu0 0.0
        %2063 = vmatpush1.msra.mxu0 0.0
        %2064 = vmatprep.subr.mxu0 0.0
        %2065 = vmatpush1.msra.mxu0 0.0
        %2066 = vmatprep.subr.mxu0 0.0
        %2067 = vmatpush1.msra.mxu0 0.0
        %2068 = vmatprep.subr.mxu0 0.0
        %2069 = vmatpush1.msra.mxu0 0.0
        %2070 = vmatprep.subr.mxu0 0.0
        %2071 = vmatpush1.msra.mxu0 0.0
        %2072 = vmatprep.subr.mxu0 0.0
        %2073 = vmatpush1.msra.mxu0 0.0
        %2074 = vmatprep.subr.mxu0 0.0
        %2075 = vmatpush1.msra.mxu0 0.0
        %2076 = vmatprep.subr.mxu0 0.0
        %2077 = vmatpush1.msra.mxu0 0.0
        %2078 = vmatprep.subr.mxu0 0.0
        %2079 = vmatpush1.msra.mxu0 0.0
        %2080 = vmatprep.subr.mxu0 0.0
        %2081 = vmatpush1.msra.mxu0 0.0
        %2082 = vmatprep.subr.mxu0 0.0
        %2083 = vmatpush1.msra.mxu0 0.0
        %2084 = vmatprep.subr.mxu0 0.0
        %2085 = vmatpush1.msra.mxu0 0.0
        %2086 = vmatprep.subr.mxu0 0.0
        %2087 = vmatpush1.msra.mxu0 0.0
        %2088 = vmatprep.mubr.f32.mxu0 0.0
        %v2089 = vand.u32 %v1760, 4294901760
        %v2090 = vsub.f32 %v1760, %v2089
        %v2091 = vand.u32 %v2090, 4294901760
        %2092 = vmatmul.mubr.f32.gmra.mrb[0].mxu0 %v2091
        %v2093 = vpop.f32.mrb[0].mxu0
        %v2094 = vadd.f32 %v2012, %v2093
        %v2095 = vpop.f32.mrb[0].mxu0
        %2096 = vmatprep.mubr.f32.mxu0 0.0
        %v2097 = vand.u32 %v1763, 4294901760
        %v2098 = vsub.f32 %v1763, %v2097
        %v2099 = vand.u32 %v2098, 4294901760
        %2100 = vmatmul.mubr.f32.gmra.mrb[0].mxu0 %v2099
        %v2101 = vpop.f32.mrb[0].mxu0
        %v2102 = vadd.f32 %v2019, %v2101
        %v2103 = vpop.f32.mrb[0].mxu0
        %2104 = vdwg.mxu0
        %2105 = vmatprep.subr.mxu0 0.0
        %v2106 = vand.u32 %v210, 4294901760
        %v2107 = vsub.f32 %v210, %v2106
        %v2108 = vand.u32 %v2107, 4294901760
        %2109 = vmatpush1.msra.mxu0 %v2108
        %2110 = vmatprep.subr.mxu0 0.0
        %v2111 = vand.u32 %v211, 4294901760
        %v2112 = vsub.f32 %v211, %v2111
        %v2113 = vand.u32 %v2112, 4294901760
        %2114 = vmatpush1.msra.mxu0 %v2113
        %2115 = vmatprep.subr.mxu0 0.0
        %2116 = vmatpush1.msra.mxu0 0.0
        %2117 = vmatprep.subr.mxu0 0.0
        %2118 = vmatpush1.msra.mxu0 0.0
        %2119 = vmatprep.subr.mxu0 0.0
        %2120 = vmatpush1.msra.mxu0 0.0
        %2121 = vmatprep.subr.mxu0 0.0
        %2122 = vmatpush1.msra.mxu0 0.0
        %2123 = vmatprep.subr.mxu0 0.0
        %2124 = vmatpush1.msra.mxu0 0.0
        %2125 = vmatprep.subr.mxu0 0.0
        %2126 = vmatpush1.msra.mxu0 0.0
        %2127 = vmatprep.subr.mxu0 0.0
        %2128 = vmatpush1.msra.mxu0 0.0
        %2129 = vmatprep.subr.mxu0 0.0
        %2130 = vmatpush1.msra.mxu0 0.0
        %2131 = vmatprep.subr.mxu0 0.0
        %2132 = vmatpush1.msra.mxu0 0.0
        %2133 = vmatprep.subr.mxu0 0.0
        %2134 = vmatpush1.msra.mxu0 0.0
        %2135 = vmatprep.subr.mxu0 0.0
        %2136 = vmatpush1.msra.mxu0 0.0
        %2137 = vmatprep.subr.mxu0 0.0
        %2138 = vmatpush1.msra.mxu0 0.0
        %2139 = vmatprep.subr.mxu0 0.0
        %2140 = vmatpush1.msra.mxu0 0.0
        %2141 = vmatprep.subr.mxu0 0.0
        %2142 = vmatpush1.msra.mxu0 0.0
        %2143 = vmatprep.subr.mxu0 0.0
        %2144 = vmatpush1.msra.mxu0 0.0
        %2145 = vmatprep.subr.mxu0 0.0
        %2146 = vmatpush1.msra.mxu0 0.0
        %2147 = vmatprep.subr.mxu0 0.0
        %2148 = vmatpush1.msra.mxu0 0.0
        %2149 = vmatprep.subr.mxu0 0.0
        %2150 = vmatpush1.msra.mxu0 0.0
        %2151 = vmatprep.subr.mxu0 0.0
        %2152 = vmatpush1.msra.mxu0 0.0
        %2153 = vmatprep.subr.mxu0 0.0
        %2154 = vmatpush1.msra.mxu0 0.0
        %2155 = vmatprep.subr.mxu0 0.0
        %2156 = vmatpush1.msra.mxu0 0.0
        %2157 = vmatprep.subr.mxu0 0.0
        %2158 = vmatpush1.msra.mxu0 0.0
        %2159 = vmatprep.subr.mxu0 0.0
        %2160 = vmatpush1.msra.mxu0 0.0
        %2161 = vmatprep.subr.mxu0 0.0
        %2162 = vmatpush1.msra.mxu0 0.0
        %2163 = vmatprep.subr.mxu0 0.0
        %2164 = vmatpush1.msra.mxu0 0.0
        %2165 = vmatprep.subr.mxu0 0.0
        %2166 = vmatpush1.msra.mxu0 0.0
        %2167 = vmatprep.subr.mxu0 0.0
        %2168 = vmatpush1.msra.mxu0 0.0
        %2169 = vmatprep.subr.mxu0 0.0
        %2170 = vmatpush1.msra.mxu0 0.0
        %2171 = vmatprep.subr.mxu0 0.0
        %2172 = vmatpush1.msra.mxu0 0.0
        %2173 = vmatprep.subr.mxu0 0.0
        %2174 = vmatpush1.msra.mxu0 0.0
        %2175 = vmatprep.mubr.f32.mxu0 0.0
        %v2176 = vand.u32 %v1760, 4294901760
        %2177 = vmatmul.mubr.f32.gmra.mrb[0].mxu0 %v2176
        %v2178 = vpop.f32.mrb[0].mxu0
        %v2179 = vadd.f32 %v2094, %v2178
        %v2180 = vpop.f32.mrb[0].mxu0
        %2181 = vmatprep.mubr.f32.mxu0 0.0
        %v2182 = vand.u32 %v1763, 4294901760
        %2183 = vmatmul.mubr.f32.gmra.mrb[0].mxu0 %v2182
        %v2184 = vpop.f32.mrb[0].mxu0
        %v2185 = vadd.f32 %v2102, %v2184
        %v2186 = vpop.f32.mrb[0].mxu0
        %2187 = vdwg.mxu0
        %2188 = vmatprep.subr.mxu0 0.0
        %v2189 = vand.u32 %v210, 4294901760
        %2190 = vmatpush1.msra.mxu0 %v2189
        %2191 = vmatprep.subr.mxu0 0.0
        %v2192 = vand.u32 %v211, 4294901760
        %2193 = vmatpush1.msra.mxu0 %v2192
        %2194 = vmatprep.subr.mxu0 0.0
        %2195 = vmatpush1.msra.mxu0 0.0
        %2196 = vmatprep.subr.mxu0 0.0
        %2197 = vmatpush1.msra.mxu0 0.0
        %2198 = vmatprep.subr.mxu0 0.0
        %2199 = vmatpush1.msra.mxu0 0.0
        %2200 = vmatprep.subr.mxu0 0.0
        %2201 = vmatpush1.msra.mxu0 0.0
        %2202 = vmatprep.subr.mxu0 0.0
        %2203 = vmatpush1.msra.mxu0 0.0
        %2204 = vmatprep.subr.mxu0 0.0
        %2205 = vmatpush1.msra.mxu0 0.0
        %2206 = vmatprep.subr.mxu0 0.0
        %2207 = vmatpush1.msra.mxu0 0.0
        %2208 = vmatprep.subr.mxu0 0.0
        %2209 = vmatpush1.msra.mxu0 0.0
        %2210 = vmatprep.subr.mxu0 0.0
        %2211 = vmatpush1.msra.mxu0 0.0
        %2212 = vmatprep.subr.mxu0 0.0
        %2213 = vmatpush1.msra.mxu0 0.0
        %2214 = vmatprep.subr.mxu0 0.0
        %2215 = vmatpush1.msra.mxu0 0.0
        %2216 = vmatprep.subr.mxu0 0.0
        %2217 = vmatpush1.msra.mxu0 0.0
        %2218 = vmatprep.subr.mxu0 0.0
        %2219 = vmatpush1.msra.mxu0 0.0
        %2220 = vmatprep.subr.mxu0 0.0
        %2221 = vmatpush1.msra.mxu0 0.0
        %2222 = vmatprep.subr.mxu0 0.0
        %2223 = vmatpush1.msra.mxu0 0.0
        %2224 = vmatprep.subr.mxu0 0.0
        %2225 = vmatpush1.msra.mxu0 0.0
        %2226 = vmatprep.subr.mxu0 0.0
        %2227 = vmatpush1.msra.mxu0 0.0
        %2228 = vmatprep.subr.mxu0 0.0
        %2229 = vmatpush1.msra.mxu0 0.0
        %2230 = vmatprep.subr.mxu0 0.0
        %2231 = vmatpush1.msra.mxu0 0.0
        %2232 = vmatprep.subr.mxu0 0.0
        %2233 = vmatpush1.msra.mxu0 0.0
        %2234 = vmatprep.subr.mxu0 0.0
        %2235 = vmatpush1.msra.mxu0 0.0
        %2236 = vmatprep.subr.mxu0 0.0
        %2237 = vmatpush1.msra.mxu0 0.0
        %2238 = vmatprep.subr.mxu0 0.0
        %2239 = vmatpush1.msra.mxu0 0.0
        %2240 = vmatprep.subr.mxu0 0.0
        %2241 = vmatpush1.msra.mxu0 0.0
        %2242 = vmatprep.subr.mxu0 0.0
        %2243 = vmatpush1.msra.mxu0 0.0
        %2244 = vmatprep.subr.mxu0 0.0
        %2245 = vmatpush1.msra.mxu0 0.0
        %2246 = vmatprep.subr.mxu0 0.0
        %2247 = vmatpush1.msra.mxu0 0.0
        %2248 = vmatprep.subr.mxu0 0.0
        %2249 = vmatpush1.msra.mxu0 0.0
        %2250 = vmatprep.subr.mxu0 0.0
        %2251 = vmatpush1.msra.mxu0 0.0
        %2252 = vmatprep.subr.mxu0 0.0
        %2253 = vmatpush1.msra.mxu0 0.0
        %2254 = vmatprep.mubr.f32.mxu0 0.0
        %v2255 = vand.u32 %v1760, 4294901760
        %2256 = vmatmul.mubr.f32.gmra.mrb[0].mxu0 %v2255
        %v2257 = vpop.f32.mrb[0].mxu0
        %v2258 = vadd.f32 %v2179, %v2257
        %v2259 = vpop.f32.mrb[0].mxu0
        %2260 = vmatprep.mubr.f32.mxu0 0.0
        %v2261 = vand.u32 %v1763, 4294901760
        %2262 = vmatmul.mubr.f32.gmra.mrb[0].mxu0 %v2261
        %v2263 = vpop.f32.mrb[0].mxu0
        %v2264 = vadd.f32 %v2185, %v2263
        %v2265 = vpop.f32.mrb[0].mxu0
        %2266 = vdwg.mxu0
        %s2267 = scalar_lea.vmem %s178, 32 [#allocation5]
        %2268 = vst.msk [vmem:[%s2267] sm:$0xff] %vm209, %v2258
        %2270 = vrot.lane.b32.xlu0 %v2258, 120
        %v2271 = vpop.permute.xlu0 %2270
        %s2273 = scalar_lea.vmem %s178, 40 [#allocation5]
        %2274 = vst.msk [vmem:[%s2273] sm:$0xff] %vm209, %v2271
        %s2275 = scalar_lea.vmem %s178, 48 [#allocation5]
        %2276 = vst.msk [vmem:[%s2275] sm:$0xff] %vm209, %v2264
        %2278 = vrot.lane.b32.xlu0 %v2264, 120
        %v2279 = vpop.permute.xlu0 %2278
        %s2281 = scalar_lea.vmem %s178, 56 [#allocation5]
        %2282 = vst.msk [vmem:[%s2281] sm:$0xff] %vm209, %v2279
        %s2283 = scalar_lea.vmem %s160, 32 [#allocation2]
        %v2284 = vld [vmem:[%s2283] sm:$0xff]
        %v2285 = vld [vmem:[%s2283 + $0x8] sm:$0xff]
        %2286 = vmatprep.subr.mxu0 0.0
        %v2287 = vand.u32 %v2284, 4294901760
        %2288 = vmatpush1.msra.mxu0 %v2287
        %2289 = vmatprep.subr.mxu0 0.0
        %v2290 = vand.u32 %v2285, 4294901760
        %2291 = vmatpush1.msra.mxu0 %v2290
        %2292 = vmatprep.subr.mxu0 0.0
        %2293 = vmatpush1.msra.mxu0 0.0
        %2294 = vmatprep.subr.mxu0 0.0
        %2295 = vmatpush1.msra.mxu0 0.0
        %2296 = vmatprep.subr.mxu0 0.0
        %2297 = vmatpush1.msra.mxu0 0.0
        %2298 = vmatprep.subr.mxu0 0.0
        %2299 = vmatpush1.msra.mxu0 0.0
        %2300 = vmatprep.subr.mxu0 0.0
        %2301 = vmatpush1.msra.mxu0 0.0
        %2302 = vmatprep.subr.mxu0 0.0
        %2303 = vmatpush1.msra.mxu0 0.0
        %2304 = vmatprep.subr.mxu0 0.0
        %2305 = vmatpush1.msra.mxu0 0.0
        %2306 = vmatprep.subr.mxu0 0.0
        %2307 = vmatpush1.msra.mxu0 0.0
        %2308 = vmatprep.subr.mxu0 0.0
        %2309 = vmatpush1.msra.mxu0 0.0
        %2310 = vmatprep.subr.mxu0 0.0
        %2311 = vmatpush1.msra.mxu0 0.0
        %2312 = vmatprep.subr.mxu0 0.0
        %2313 = vmatpush1.msra.mxu0 0.0
        %2314 = vmatprep.subr.mxu0 0.0
        %2315 = vmatpush1.msra.mxu0 0.0
        %2316 = vmatprep.subr.mxu0 0.0
        %2317 = vmatpush1.msra.mxu0 0.0
        %2318 = vmatprep.subr.mxu0 0.0
        %2319 = vmatpush1.msra.mxu0 0.0
        %2320 = vmatprep.subr.mxu0 0.0
        %2321 = vmatpush1.msra.mxu0 0.0
        %2322 = vmatprep.subr.mxu0 0.0
        %2323 = vmatpush1.msra.mxu0 0.0
        %2324 = vmatprep.subr.mxu0 0.0
        %2325 = vmatpush1.msra.mxu0 0.0
        %2326 = vmatprep.subr.mxu0 0.0
        %2327 = vmatpush1.msra.mxu0 0.0
        %2328 = vmatprep.subr.mxu0 0.0
        %2329 = vmatpush1.msra.mxu0 0.0
        %2330 = vmatprep.subr.mxu0 0.0
        %2331 = vmatpush1.msra.mxu0 0.0
        %2332 = vmatprep.subr.mxu0 0.0
        %2333 = vmatpush1.msra.mxu0 0.0
        %2334 = vmatprep.subr.mxu0 0.0
        %2335 = vmatpush1.msra.mxu0 0.0
        %2336 = vmatprep.subr.mxu0 0.0
        %2337 = vmatpush1.msra.mxu0 0.0
        %2338 = vmatprep.subr.mxu0 0.0
        %2339 = vmatpush1.msra.mxu0 0.0
        %2340 = vmatprep.subr.mxu0 0.0
        %2341 = vmatpush1.msra.mxu0 0.0
        %2342 = vmatprep.subr.mxu0 0.0
        %2343 = vmatpush1.msra.mxu0 0.0
        %2344 = vmatprep.subr.mxu0 0.0
        %2345 = vmatpush1.msra.mxu0 0.0
        %2346 = vmatprep.subr.mxu0 0.0
        %2347 = vmatpush1.msra.mxu0 0.0
        %2348 = vmatprep.subr.mxu0 0.0
        %2349 = vmatpush1.msra.mxu0 0.0
        %2350 = vmatprep.subr.mxu0 0.0
        %2351 = vmatpush1.msra.mxu0 0.0
        %2352 = vmatprep.mubr.f32.mxu0 0.0
        %v2353 = vand.u32 %v224, 4294901760
        %v2354 = vsub.f32 %v224, %v2353
        %v2355 = vand.u32 %v2354, 4294901760
        %v2356 = vsub.f32 %v2354, %v2355
        %v2357 = vand.u32 %v2356, 4294901760
        %2358 = vmatmul.mubr.f32.gmra.mrb[0].mxu0 %v2357
        %v2359 = vpop.f32.mrb[0].mxu0
        %v2360 = vadd.f32 0.0, %v2359
        %v2361 = vpop.f32.mrb[0].mxu0
        %2362 = vmatprep.mubr.f32.mxu0 0.0
        %v2363 = vand.u32 %v227, 4294901760
        %v2364 = vsub.f32 %v227, %v2363
        %v2365 = vand.u32 %v2364, 4294901760
        %v2366 = vsub.f32 %v2364, %v2365
        %v2367 = vand.u32 %v2366, 4294901760
        %2368 = vmatmul.mubr.f32.gmra.mrb[0].mxu0 %v2367
        %v2369 = vpop.f32.mrb[0].mxu0
        %v2370 = vadd.f32 0.0, %v2369
        %v2371 = vpop.f32.mrb[0].mxu0
        %2372 = vdwg.mxu0
        %2373 = vmatprep.subr.mxu0 0.0
        %v2374 = vand.u32 %v2284, 4294901760
        %v2375 = vsub.f32 %v2284, %v2374
        %v2376 = vand.u32 %v2375, 4294901760
        %v2377 = vsub.f32 %v2375, %v2376
        %v2378 = vand.u32 %v2377, 4294901760
        %2379 = vmatpush1.msra.mxu0 %v2378
        %2380 = vmatprep.subr.mxu0 0.0
        %v2381 = vand.u32 %v2285, 4294901760
        %v2382 = vsub.f32 %v2285, %v2381
        %v2383 = vand.u32 %v2382, 4294901760
        %v2384 = vsub.f32 %v2382, %v2383
        %v2385 = vand.u32 %v2384, 4294901760
        %2386 = vmatpush1.msra.mxu0 %v2385
        %2387 = vmatprep.subr.mxu0 0.0
        %2388 = vmatpush1.msra.mxu0 0.0
        %2389 = vmatprep.subr.mxu0 0.0
        %2390 = vmatpush1.msra.mxu0 0.0
        %2391 = vmatprep.subr.mxu0 0.0
        %2392 = vmatpush1.msra.mxu0 0.0
        %2393 = vmatprep.subr.mxu0 0.0
        %2394 = vmatpush1.msra.mxu0 0.0
        %2395 = vmatprep.subr.mxu0 0.0
        %2396 = vmatpush1.msra.mxu0 0.0
        %2397 = vmatprep.subr.mxu0 0.0
        %2398 = vmatpush1.msra.mxu0 0.0
        %2399 = vmatprep.subr.mxu0 0.0
        %2400 = vmatpush1.msra.mxu0 0.0
        %2401 = vmatprep.subr.mxu0 0.0
        %2402 = vmatpush1.msra.mxu0 0.0
        %2403 = vmatprep.subr.mxu0 0.0
        %2404 = vmatpush1.msra.mxu0 0.0
        %2405 = vmatprep.subr.mxu0 0.0
        %2406 = vmatpush1.msra.mxu0 0.0
        %2407 = vmatprep.subr.mxu0 0.0
        %2408 = vmatpush1.msra.mxu0 0.0
        %2409 = vmatprep.subr.mxu0 0.0
        %2410 = vmatpush1.msra.mxu0 0.0
        %2411 = vmatprep.subr.mxu0 0.0
        %2412 = vmatpush1.msra.mxu0 0.0
        %2413 = vmatprep.subr.mxu0 0.0
        %2414 = vmatpush1.msra.mxu0 0.0
        %2415 = vmatprep.subr.mxu0 0.0
        %2416 = vmatpush1.msra.mxu0 0.0
        %2417 = vmatprep.subr.mxu0 0.0
        %2418 = vmatpush1.msra.mxu0 0.0
        %2419 = vmatprep.subr.mxu0 0.0
        %2420 = vmatpush1.msra.mxu0 0.0
        %2421 = vmatprep.subr.mxu0 0.0
        %2422 = vmatpush1.msra.mxu0 0.0
        %2423 = vmatprep.subr.mxu0 0.0
        %2424 = vmatpush1.msra.mxu0 0.0
        %2425 = vmatprep.subr.mxu0 0.0
        %2426 = vmatpush1.msra.mxu0 0.0
        %2427 = vmatprep.subr.mxu0 0.0
        %2428 = vmatpush1.msra.mxu0 0.0
        %2429 = vmatprep.subr.mxu0 0.0
        %2430 = vmatpush1.msra.mxu0 0.0
        %2431 = vmatprep.subr.mxu0 0.0
        %2432 = vmatpush1.msra.mxu0 0.0
        %2433 = vmatprep.subr.mxu0 0.0
        %2434 = vmatpush1.msra.mxu0 0.0
        %2435 = vmatprep.subr.mxu0 0.0
        %2436 = vmatpush1.msra.mxu0 0.0
        %2437 = vmatprep.subr.mxu0 0.0
        %2438 = vmatpush1.msra.mxu0 0.0
        %2439 = vmatprep.subr.mxu0 0.0
        %2440 = vmatpush1.msra.mxu0 0.0
        %2441 = vmatprep.subr.mxu0 0.0
        %2442 = vmatpush1.msra.mxu0 0.0
        %2443 = vmatprep.subr.mxu0 0.0
        %2444 = vmatpush1.msra.mxu0 0.0
        %2445 = vmatprep.subr.mxu0 0.0
        %2446 = vmatpush1.msra.mxu0 0.0
        %2447 = vmatprep.mubr.f32.mxu0 0.0
        %v2448 = vand.u32 %v224, 4294901760
        %2449 = vmatmul.mubr.f32.gmra.mrb[0].mxu0 %v2448
        %v2450 = vpop.f32.mrb[0].mxu0
        %v2451 = vadd.f32 %v2360, %v2450
        %v2452 = vpop.f32.mrb[0].mxu0
        %2453 = vmatprep.mubr.f32.mxu0 0.0
        %v2454 = vand.u32 %v227, 4294901760
        %2455 = vmatmul.mubr.f32.gmra.mrb[0].mxu0 %v2454
        %v2456 = vpop.f32.mrb[0].mxu0
        %v2457 = vadd.f32 %v2370, %v2456
        %v2458 = vpop.f32.mrb[0].mxu0
        %2459 = vdwg.mxu0
        %2460 = vmatprep.subr.mxu0 0.0
        %v2461 = vand.u32 %v2284, 4294901760
        %v2462 = vsub.f32 %v2284, %v2461
        %2463 = vmatpush1.msra.mxu0 %v2462
        %2464 = vmatprep.subr.mxu0 0.0
        %v2465 = vand.u32 %v2285, 4294901760
        %v2466 = vsub.f32 %v2285, %v2465
        %2467 = vmatpush1.msra.mxu0 %v2466
        %2468 = vmatprep.subr.mxu0 0.0
        %2469 = vmatpush1.msra.mxu0 0.0
        %2470 = vmatprep.subr.mxu0 0.0
        %2471 = vmatpush1.msra.mxu0 0.0
        %2472 = vmatprep.subr.mxu0 0.0
        %2473 = vmatpush1.msra.mxu0 0.0
        %2474 = vmatprep.subr.mxu0 0.0
        %2475 = vmatpush1.msra.mxu0 0.0
        %2476 = vmatprep.subr.mxu0 0.0
        %2477 = vmatpush1.msra.mxu0 0.0
        %2478 = vmatprep.subr.mxu0 0.0
        %2479 = vmatpush1.msra.mxu0 0.0
        %2480 = vmatprep.subr.mxu0 0.0
        %2481 = vmatpush1.msra.mxu0 0.0
        %2482 = vmatprep.subr.mxu0 0.0
        %2483 = vmatpush1.msra.mxu0 0.0
        %2484 = vmatprep.subr.mxu0 0.0
        %2485 = vmatpush1.msra.mxu0 0.0
        %2486 = vmatprep.subr.mxu0 0.0
        %2487 = vmatpush1.msra.mxu0 0.0
        %2488 = vmatprep.subr.mxu0 0.0
        %2489 = vmatpush1.msra.mxu0 0.0
        %2490 = vmatprep.subr.mxu0 0.0
        %2491 = vmatpush1.msra.mxu0 0.0
        %2492 = vmatprep.subr.mxu0 0.0
        %2493 = vmatpush1.msra.mxu0 0.0
        %2494 = vmatprep.subr.mxu0 0.0
        %2495 = vmatpush1.msra.mxu0 0.0
        %2496 = vmatprep.subr.mxu0 0.0
        %2497 = vmatpush1.msra.mxu0 0.0
        %2498 = vmatprep.subr.mxu0 0.0
        %2499 = vmatpush1.msra.mxu0 0.0
        %2500 = vmatprep.subr.mxu0 0.0
        %2501 = vmatpush1.msra.mxu0 0.0
        %2502 = vmatprep.subr.mxu0 0.0
        %2503 = vmatpush1.msra.mxu0 0.0
        %2504 = vmatprep.subr.mxu0 0.0
        %2505 = vmatpush1.msra.mxu0 0.0
        %2506 = vmatprep.subr.mxu0 0.0
        %2507 = vmatpush1.msra.mxu0 0.0
        %2508 = vmatprep.subr.mxu0 0.0
        %2509 = vmatpush1.msra.mxu0 0.0
        %2510 = vmatprep.subr.mxu0 0.0
        %2511 = vmatpush1.msra.mxu0 0.0
        %2512 = vmatprep.subr.mxu0 0.0
        %2513 = vmatpush1.msra.mxu0 0.0
        %2514 = vmatprep.subr.mxu0 0.0
        %2515 = vmatpush1.msra.mxu0 0.0
        %2516 = vmatprep.subr.mxu0 0.0
        %2517 = vmatpush1.msra.mxu0 0.0
        %2518 = vmatprep.subr.mxu0 0.0
        %2519 = vmatpush1.msra.mxu0 0.0
        %2520 = vmatprep.subr.mxu0 0.0
        %2521 = vmatpush1.msra.mxu0 0.0
        %2522 = vmatprep.subr.mxu0 0.0
        %2523 = vmatpush1.msra.mxu0 0.0
        %2524 = vmatprep.subr.mxu0 0.0
        %2525 = vmatpush1.msra.mxu0 0.0
        %2526 = vmatprep.subr.mxu0 0.0
        %2527 = vmatpush1.msra.mxu0 0.0
        %2528 = vmatprep.mubr.f32.mxu0 0.0
        %v2529 = vand.u32 %v224, 4294901760
        %v2530 = vsub.f32 %v224, %v2529
        %2531 = vmatmul.mubr.f32.gmra.mrb[0].mxu0 %v2530
        %v2532 = vpop.f32.mrb[0].mxu0
        %v2533 = vadd.f32 %v2451, %v2532
        %v2534 = vpop.f32.mrb[0].mxu0
        %2535 = vmatprep.mubr.f32.mxu0 0.0
        %v2536 = vand.u32 %v227, 4294901760
        %v2537 = vsub.f32 %v227, %v2536
        %2538 = vmatmul.mubr.f32.gmra.mrb[0].mxu0 %v2537
        %v2539 = vpop.f32.mrb[0].mxu0
        %v2540 = vadd.f32 %v2457, %v2539
        %v2541 = vpop.f32.mrb[0].mxu0
        %2542 = vdwg.mxu0
        %2543 = vmatprep.subr.mxu0 0.0
        %v2544 = vand.u32 %v2284, 4294901760
        %2545 = vmatpush1.msra.mxu0 %v2544
        %2546 = vmatprep.subr.mxu0 0.0
        %v2547 = vand.u32 %v2285, 4294901760
        %2548 = vmatpush1.msra.mxu0 %v2547
        %2549 = vmatprep.subr.mxu0 0.0
        %2550 = vmatpush1.msra.mxu0 0.0
        %2551 = vmatprep.subr.mxu0 0.0
        %2552 = vmatpush1.msra.mxu0 0.0
        %2553 = vmatprep.subr.mxu0 0.0
        %2554 = vmatpush1.msra.mxu0 0.0
        %2555 = vmatprep.subr.mxu0 0.0
        %2556 = vmatpush1.msra.mxu0 0.0
        %2557 = vmatprep.subr.mxu0 0.0
        %2558 = vmatpush1.msra.mxu0 0.0
        %2559 = vmatprep.subr.mxu0 0.0
        %2560 = vmatpush1.msra.mxu0 0.0
        %2561 = vmatprep.subr.mxu0 0.0
        %2562 = vmatpush1.msra.mxu0 0.0
        %2563 = vmatprep.subr.mxu0 0.0
        %2564 = vmatpush1.msra.mxu0 0.0
        %2565 = vmatprep.subr.mxu0 0.0
        %2566 = vmatpush1.msra.mxu0 0.0
        %2567 = vmatprep.subr.mxu0 0.0
        %2568 = vmatpush1.msra.mxu0 0.0
        %2569 = vmatprep.subr.mxu0 0.0
        %2570 = vmatpush1.msra.mxu0 0.0
        %2571 = vmatprep.subr.mxu0 0.0
        %2572 = vmatpush1.msra.mxu0 0.0
        %2573 = vmatprep.subr.mxu0 0.0
        %2574 = vmatpush1.msra.mxu0 0.0
        %2575 = vmatprep.subr.mxu0 0.0
        %2576 = vmatpush1.msra.mxu0 0.0
        %2577 = vmatprep.subr.mxu0 0.0
        %2578 = vmatpush1.msra.mxu0 0.0
        %2579 = vmatprep.subr.mxu0 0.0
        %2580 = vmatpush1.msra.mxu0 0.0
        %2581 = vmatprep.subr.mxu0 0.0
        %2582 = vmatpush1.msra.mxu0 0.0
        %2583 = vmatprep.subr.mxu0 0.0
        %2584 = vmatpush1.msra.mxu0 0.0
        %2585 = vmatprep.subr.mxu0 0.0
        %2586 = vmatpush1.msra.mxu0 0.0
        %2587 = vmatprep.subr.mxu0 0.0
        %2588 = vmatpush1.msra.mxu0 0.0
        %2589 = vmatprep.subr.mxu0 0.0
        %2590 = vmatpush1.msra.mxu0 0.0
        %2591 = vmatprep.subr.mxu0 0.0
        %2592 = vmatpush1.msra.mxu0 0.0
        %2593 = vmatprep.subr.mxu0 0.0
        %2594 = vmatpush1.msra.mxu0 0.0
        %2595 = vmatprep.subr.mxu0 0.0
        %2596 = vmatpush1.msra.mxu0 0.0
        %2597 = vmatprep.subr.mxu0 0.0
        %2598 = vmatpush1.msra.mxu0 0.0
        %2599 = vmatprep.subr.mxu0 0.0
        %2600 = vmatpush1.msra.mxu0 0.0
        %2601 = vmatprep.subr.mxu0 0.0
        %2602 = vmatpush1.msra.mxu0 0.0
        %2603 = vmatprep.subr.mxu0 0.0
        %2604 = vmatpush1.msra.mxu0 0.0
        %2605 = vmatprep.subr.mxu0 0.0
        %2606 = vmatpush1.msra.mxu0 0.0
        %2607 = vmatprep.subr.mxu0 0.0
        %2608 = vmatpush1.msra.mxu0 0.0
        %2609 = vmatprep.mubr.f32.mxu0 0.0
        %v2610 = vand.u32 %v224, 4294901760
        %v2611 = vsub.f32 %v224, %v2610
        %v2612 = vand.u32 %v2611, 4294901760
        %2613 = vmatmul.mubr.f32.gmra.mrb[0].mxu0 %v2612
        %v2614 = vpop.f32.mrb[0].mxu0
        %v2615 = vadd.f32 %v2533, %v2614
        %v2616 = vpop.f32.mrb[0].mxu0
        %2617 = vmatprep.mubr.f32.mxu0 0.0
        %v2618 = vand.u32 %v227, 4294901760
        %v2619 = vsub.f32 %v227, %v2618
        %v2620 = vand.u32 %v2619, 4294901760
        %2621 = vmatmul.mubr.f32.gmra.mrb[0].mxu0 %v2620
        %v2622 = vpop.f32.mrb[0].mxu0
        %v2623 = vadd.f32 %v2540, %v2622
        %v2624 = vpop.f32.mrb[0].mxu0
        %2625 = vdwg.mxu0
        %2626 = vmatprep.subr.mxu0 0.0
        %v2627 = vand.u32 %v2284, 4294901760
        %v2628 = vsub.f32 %v2284, %v2627
        %v2629 = vand.u32 %v2628, 4294901760
        %2630 = vmatpush1.msra.mxu0 %v2629
        %2631 = vmatprep.subr.mxu0 0.0
        %v2632 = vand.u32 %v2285, 4294901760
        %v2633 = vsub.f32 %v2285, %v2632
        %v2634 = vand.u32 %v2633, 4294901760
        %2635 = vmatpush1.msra.mxu0 %v2634
        %2636 = vmatprep.subr.mxu0 0.0
        %2637 = vmatpush1.msra.mxu0 0.0
        %2638 = vmatprep.subr.mxu0 0.0
        %2639 = vmatpush1.msra.mxu0 0.0
        %2640 = vmatprep.subr.mxu0 0.0
        %2641 = vmatpush1.msra.mxu0 0.0
        %2642 = vmatprep.subr.mxu0 0.0
        %2643 = vmatpush1.msra.mxu0 0.0
        %2644 = vmatprep.subr.mxu0 0.0
        %2645 = vmatpush1.msra.mxu0 0.0
        %2646 = vmatprep.subr.mxu0 0.0
        %2647 = vmatpush1.msra.mxu0 0.0
        %2648 = vmatprep.subr.mxu0 0.0
        %2649 = vmatpush1.msra.mxu0 0.0
        %2650 = vmatprep.subr.mxu0 0.0
        %2651 = vmatpush1.msra.mxu0 0.0
        %2652 = vmatprep.subr.mxu0 0.0
        %2653 = vmatpush1.msra.mxu0 0.0
        %2654 = vmatprep.subr.mxu0 0.0
        %2655 = vmatpush1.msra.mxu0 0.0
        %2656 = vmatprep.subr.mxu0 0.0
        %2657 = vmatpush1.msra.mxu0 0.0
        %2658 = vmatprep.subr.mxu0 0.0
        %2659 = vmatpush1.msra.mxu0 0.0
        %2660 = vmatprep.subr.mxu0 0.0
        %2661 = vmatpush1.msra.mxu0 0.0
        %2662 = vmatprep.subr.mxu0 0.0
        %2663 = vmatpush1.msra.mxu0 0.0
        %2664 = vmatprep.subr.mxu0 0.0
        %2665 = vmatpush1.msra.mxu0 0.0
        %2666 = vmatprep.subr.mxu0 0.0
        %2667 = vmatpush1.msra.mxu0 0.0
        %2668 = vmatprep.subr.mxu0 0.0
        %2669 = vmatpush1.msra.mxu0 0.0
        %2670 = vmatprep.subr.mxu0 0.0
        %2671 = vmatpush1.msra.mxu0 0.0
        %2672 = vmatprep.subr.mxu0 0.0
        %2673 = vmatpush1.msra.mxu0 0.0
        %2674 = vmatprep.subr.mxu0 0.0
        %2675 = vmatpush1.msra.mxu0 0.0
        %2676 = vmatprep.subr.mxu0 0.0
        %2677 = vmatpush1.msra.mxu0 0.0
        %2678 = vmatprep.subr.mxu0 0.0
        %2679 = vmatpush1.msra.mxu0 0.0
        %2680 = vmatprep.subr.mxu0 0.0
        %2681 = vmatpush1.msra.mxu0 0.0
        %2682 = vmatprep.subr.mxu0 0.0
        %2683 = vmatpush1.msra.mxu0 0.0
        %2684 = vmatprep.subr.mxu0 0.0
        %2685 = vmatpush1.msra.mxu0 0.0
        %2686 = vmatprep.subr.mxu0 0.0
        %2687 = vmatpush1.msra.mxu0 0.0
        %2688 = vmatprep.subr.mxu0 0.0
        %2689 = vmatpush1.msra.mxu0 0.0
        %2690 = vmatprep.subr.mxu0 0.0
        %2691 = vmatpush1.msra.mxu0 0.0
        %2692 = vmatprep.subr.mxu0 0.0
        %2693 = vmatpush1.msra.mxu0 0.0
        %2694 = vmatprep.subr.mxu0 0.0
        %2695 = vmatpush1.msra.mxu0 0.0
        %2696 = vmatprep.mubr.f32.mxu0 0.0
        %v2697 = vand.u32 %v224, 4294901760
        %2698 = vmatmul.mubr.f32.gmra.mrb[0].mxu0 %v2697
        %v2699 = vpop.f32.mrb[0].mxu0
        %v2700 = vadd.f32 %v2615, %v2699
        %v2701 = vpop.f32.mrb[0].mxu0
        %2702 = vmatprep.mubr.f32.mxu0 0.0
        %v2703 = vand.u32 %v227, 4294901760
        %2704 = vmatmul.mubr.f32.gmra.mrb[0].mxu0 %v2703
        %v2705 = vpop.f32.mrb[0].mxu0
        %v2706 = vadd.f32 %v2623, %v2705
        %v2707 = vpop.f32.mrb[0].mxu0
        %2708 = vdwg.mxu0
        %2709 = vmatprep.subr.mxu0 0.0
        %v2710 = vand.u32 %v2284, 4294901760
        %2711 = vmatpush1.msra.mxu0 %v2710
        %2712 = vmatprep.subr.mxu0 0.0
        %v2713 = vand.u32 %v2285, 4294901760
        %2714 = vmatpush1.msra.mxu0 %v2713
        %2715 = vmatprep.subr.mxu0 0.0
        %2716 = vmatpush1.msra.mxu0 0.0
        %2717 = vmatprep.subr.mxu0 0.0
        %2718 = vmatpush1.msra.mxu0 0.0
        %2719 = vmatprep.subr.mxu0 0.0
        %2720 = vmatpush1.msra.mxu0 0.0
        %2721 = vmatprep.subr.mxu0 0.0
        %2722 = vmatpush1.msra.mxu0 0.0
        %2723 = vmatprep.subr.mxu0 0.0
        %2724 = vmatpush1.msra.mxu0 0.0
        %2725 = vmatprep.subr.mxu0 0.0
        %2726 = vmatpush1.msra.mxu0 0.0
        %2727 = vmatprep.subr.mxu0 0.0
        %2728 = vmatpush1.msra.mxu0 0.0
        %2729 = vmatprep.subr.mxu0 0.0
        %2730 = vmatpush1.msra.mxu0 0.0
        %2731 = vmatprep.subr.mxu0 0.0
        %2732 = vmatpush1.msra.mxu0 0.0
        %2733 = vmatprep.subr.mxu0 0.0
        %2734 = vmatpush1.msra.mxu0 0.0
        %2735 = vmatprep.subr.mxu0 0.0
        %2736 = vmatpush1.msra.mxu0 0.0
        %2737 = vmatprep.subr.mxu0 0.0
        %2738 = vmatpush1.msra.mxu0 0.0
        %2739 = vmatprep.subr.mxu0 0.0
        %2740 = vmatpush1.msra.mxu0 0.0
        %2741 = vmatprep.subr.mxu0 0.0
        %2742 = vmatpush1.msra.mxu0 0.0
        %2743 = vmatprep.subr.mxu0 0.0
        %2744 = vmatpush1.msra.mxu0 0.0
        %2745 = vmatprep.subr.mxu0 0.0
        %2746 = vmatpush1.msra.mxu0 0.0
        %2747 = vmatprep.subr.mxu0 0.0
        %2748 = vmatpush1.msra.mxu0 0.0
        %2749 = vmatprep.subr.mxu0 0.0
        %2750 = vmatpush1.msra.mxu0 0.0
        %2751 = vmatprep.subr.mxu0 0.0
        %2752 = vmatpush1.msra.mxu0 0.0
        %2753 = vmatprep.subr.mxu0 0.0
        %2754 = vmatpush1.msra.mxu0 0.0
        %2755 = vmatprep.subr.mxu0 0.0
        %2756 = vmatpush1.msra.mxu0 0.0
        %2757 = vmatprep.subr.mxu0 0.0
        %2758 = vmatpush1.msra.mxu0 0.0
        %2759 = vmatprep.subr.mxu0 0.0
        %2760 = vmatpush1.msra.mxu0 0.0
        %2761 = vmatprep.subr.mxu0 0.0
        %2762 = vmatpush1.msra.mxu0 0.0
        %2763 = vmatprep.subr.mxu0 0.0
        %2764 = vmatpush1.msra.mxu0 0.0
        %2765 = vmatprep.subr.mxu0 0.0
        %2766 = vmatpush1.msra.mxu0 0.0
        %2767 = vmatprep.subr.mxu0 0.0
        %2768 = vmatpush1.msra.mxu0 0.0
        %2769 = vmatprep.subr.mxu0 0.0
        %2770 = vmatpush1.msra.mxu0 0.0
        %2771 = vmatprep.subr.mxu0 0.0
        %2772 = vmatpush1.msra.mxu0 0.0
        %2773 = vmatprep.subr.mxu0 0.0
        %2774 = vmatpush1.msra.mxu0 0.0
        %2775 = vmatprep.mubr.f32.mxu0 0.0
        %v2776 = vand.u32 %v224, 4294901760
        %2777 = vmatmul.mubr.f32.gmra.mrb[0].mxu0 %v2776
        %v2778 = vpop.f32.mrb[0].mxu0
        %v2779 = vadd.f32 %v2700, %v2778
        %v2780 = vpop.f32.mrb[0].mxu0
        %2781 = vmatprep.mubr.f32.mxu0 0.0
        %v2782 = vand.u32 %v227, 4294901760
        %2783 = vmatmul.mubr.f32.gmra.mrb[0].mxu0 %v2782
        %v2784 = vpop.f32.mrb[0].mxu0
        %v2785 = vadd.f32 %v2706, %v2784
        %v2786 = vpop.f32.mrb[0].mxu0
        %2787 = vdwg.mxu0
        %v2789 = vsel %vm222, %v2779, 0
        %v2792 = vsel %vm222, %v2785, 0
        %2794 = vmatprep.subr.mxu0 0.0
        %v2795 = vand.u32 %v210, 4294901760
        %2796 = vmatpush1.msra.mxu0 %v2795
        %2797 = vmatprep.subr.mxu0 0.0
        %v2798 = vand.u32 %v211, 4294901760
        %2799 = vmatpush1.msra.mxu0 %v2798
        %2800 = vmatprep.subr.mxu0 0.0
        %2801 = vmatpush1.msra.mxu0 0.0
        %2802 = vmatprep.subr.mxu0 0.0
        %2803 = vmatpush1.msra.mxu0 0.0
        %2804 = vmatprep.subr.mxu0 0.0
        %2805 = vmatpush1.msra.mxu0 0.0
        %2806 = vmatprep.subr.mxu0 0.0
        %2807 = vmatpush1.msra.mxu0 0.0
        %2808 = vmatprep.subr.mxu0 0.0
        %2809 = vmatpush1.msra.mxu0 0.0
        %2810 = vmatprep.subr.mxu0 0.0
        %2811 = vmatpush1.msra.mxu0 0.0
        %2812 = vmatprep.subr.mxu0 0.0
        %2813 = vmatpush1.msra.mxu0 0.0
        %2814 = vmatprep.subr.mxu0 0.0
        %2815 = vmatpush1.msra.mxu0 0.0
        %2816 = vmatprep.subr.mxu0 0.0
        %2817 = vmatpush1.msra.mxu0 0.0
        %2818 = vmatprep.subr.mxu0 0.0
        %2819 = vmatpush1.msra.mxu0 0.0
        %2820 = vmatprep.subr.mxu0 0.0
        %2821 = vmatpush1.msra.mxu0 0.0
        %2822 = vmatprep.subr.mxu0 0.0
        %2823 = vmatpush1.msra.mxu0 0.0
        %2824 = vmatprep.subr.mxu0 0.0
        %2825 = vmatpush1.msra.mxu0 0.0
        %2826 = vmatprep.subr.mxu0 0.0
        %2827 = vmatpush1.msra.mxu0 0.0
        %2828 = vmatprep.subr.mxu0 0.0
        %2829 = vmatpush1.msra.mxu0 0.0
        %2830 = vmatprep.subr.mxu0 0.0
        %2831 = vmatpush1.msra.mxu0 0.0
        %2832 = vmatprep.subr.mxu0 0.0
        %2833 = vmatpush1.msra.mxu0 0.0
        %2834 = vmatprep.subr.mxu0 0.0
        %2835 = vmatpush1.msra.mxu0 0.0
        %2836 = vmatprep.subr.mxu0 0.0
        %2837 = vmatpush1.msra.mxu0 0.0
        %2838 = vmatprep.subr.mxu0 0.0
        %2839 = vmatpush1.msra.mxu0 0.0
        %2840 = vmatprep.subr.mxu0 0.0
        %2841 = vmatpush1.msra.mxu0 0.0
        %2842 = vmatprep.subr.mxu0 0.0
        %2843 = vmatpush1.msra.mxu0 0.0
        %2844 = vmatprep.subr.mxu0 0.0
        %2845 = vmatpush1.msra.mxu0 0.0
        %2846 = vmatprep.subr.mxu0 0.0
        %2847 = vmatpush1.msra.mxu0 0.0
        %2848 = vmatprep.subr.mxu0 0.0
        %2849 = vmatpush1.msra.mxu0 0.0
        %2850 = vmatprep.subr.mxu0 0.0
        %2851 = vmatpush1.msra.mxu0 0.0
        %2852 = vmatprep.subr.mxu0 0.0
        %2853 = vmatpush1.msra.mxu0 0.0
        %2854 = vmatprep.subr.mxu0 0.0
        %2855 = vmatpush1.msra.mxu0 0.0
        %2856 = vmatprep.subr.mxu0 0.0
        %2857 = vmatpush1.msra.mxu0 0.0
        %2858 = vmatprep.subr.mxu0 0.0
        %2859 = vmatpush1.msra.mxu0 0.0
        %2860 = vmatprep.mubr.f32.mxu0 0.0
        %v2861 = vand.u32 %v2789, 4294901760
        %v2862 = vsub.f32 %v2789, %v2861
        %v2863 = vand.u32 %v2862, 4294901760
        %v2864 = vsub.f32 %v2862, %v2863
        %v2865 = vand.u32 %v2864, 4294901760
        %2866 = vmatmul.mubr.f32.gmra.mrb[0].mxu0 %v2865
        %v2867 = vpop.f32.mrb[0].mxu0
        %v2868 = vadd.f32 0.0, %v2867
        %v2869 = vpop.f32.mrb[0].mxu0
        %2870 = vmatprep.mubr.f32.mxu0 0.0
        %v2871 = vand.u32 %v2792, 4294901760
        %v2872 = vsub.f32 %v2792, %v2871
        %v2873 = vand.u32 %v2872, 4294901760
        %v2874 = vsub.f32 %v2872, %v2873
        %v2875 = vand.u32 %v2874, 4294901760
        %2876 = vmatmul.mubr.f32.gmra.mrb[0].mxu0 %v2875
        %v2877 = vpop.f32.mrb[0].mxu0
        %v2878 = vadd.f32 0.0, %v2877
        %v2879 = vpop.f32.mrb[0].mxu0
        %2880 = vdwg.mxu0
        %2881 = vmatprep.subr.mxu0 0.0
        %v2882 = vand.u32 %v210, 4294901760
        %v2883 = vsub.f32 %v210, %v2882
        %v2884 = vand.u32 %v2883, 4294901760
        %v2885 = vsub.f32 %v2883, %v2884
        %v2886 = vand.u32 %v2885, 4294901760
        %2887 = vmatpush1.msra.mxu0 %v2886
        %2888 = vmatprep.subr.mxu0 0.0
        %v2889 = vand.u32 %v211, 4294901760
        %v2890 = vsub.f32 %v211, %v2889
        %v2891 = vand.u32 %v2890, 4294901760
        %v2892 = vsub.f32 %v2890, %v2891
        %v2893 = vand.u32 %v2892, 4294901760
        %2894 = vmatpush1.msra.mxu0 %v2893
        %2895 = vmatprep.subr.mxu0 0.0
        %2896 = vmatpush1.msra.mxu0 0.0
        %2897 = vmatprep.subr.mxu0 0.0
        %2898 = vmatpush1.msra.mxu0 0.0
        %2899 = vmatprep.subr.mxu0 0.0
        %2900 = vmatpush1.msra.mxu0 0.0
        %2901 = vmatprep.subr.mxu0 0.0
        %2902 = vmatpush1.msra.mxu0 0.0
        %2903 = vmatprep.subr.mxu0 0.0
        %2904 = vmatpush1.msra.mxu0 0.0
        %2905 = vmatprep.subr.mxu0 0.0
        %2906 = vmatpush1.msra.mxu0 0.0
        %2907 = vmatprep.subr.mxu0 0.0
        %2908 = vmatpush1.msra.mxu0 0.0
        %2909 = vmatprep.subr.mxu0 0.0
        %2910 = vmatpush1.msra.mxu0 0.0
        %2911 = vmatprep.subr.mxu0 0.0
        %2912 = vmatpush1.msra.mxu0 0.0
        %2913 = vmatprep.subr.mxu0 0.0
        %2914 = vmatpush1.msra.mxu0 0.0
        %2915 = vmatprep.subr.mxu0 0.0
        %2916 = vmatpush1.msra.mxu0 0.0
        %2917 = vmatprep.subr.mxu0 0.0
        %2918 = vmatpush1.msra.mxu0 0.0
        %2919 = vmatprep.subr.mxu0 0.0
        %2920 = vmatpush1.msra.mxu0 0.0
        %2921 = vmatprep.subr.mxu0 0.0
        %2922 = vmatpush1.msra.mxu0 0.0
        %2923 = vmatprep.subr.mxu0 0.0
        %2924 = vmatpush1.msra.mxu0 0.0
        %2925 = vmatprep.subr.mxu0 0.0
        %2926 = vmatpush1.msra.mxu0 0.0
        %2927 = vmatprep.subr.mxu0 0.0
        %2928 = vmatpush1.msra.mxu0 0.0
        %2929 = vmatprep.subr.mxu0 0.0
        %2930 = vmatpush1.msra.mxu0 0.0
        %2931 = vmatprep.subr.mxu0 0.0
        %2932 = vmatpush1.msra.mxu0 0.0
        %2933 = vmatprep.subr.mxu0 0.0
        %2934 = vmatpush1.msra.mxu0 0.0
        %2935 = vmatprep.subr.mxu0 0.0
        %2936 = vmatpush1.msra.mxu0 0.0
        %2937 = vmatprep.subr.mxu0 0.0
        %2938 = vmatpush1.msra.mxu0 0.0
        %2939 = vmatprep.subr.mxu0 0.0
        %2940 = vmatpush1.msra.mxu0 0.0
        %2941 = vmatprep.subr.mxu0 0.0
        %2942 = vmatpush1.msra.mxu0 0.0
        %2943 = vmatprep.subr.mxu0 0.0
        %2944 = vmatpush1.msra.mxu0 0.0
        %2945 = vmatprep.subr.mxu0 0.0
        %2946 = vmatpush1.msra.mxu0 0.0
        %2947 = vmatprep.subr.mxu0 0.0
        %2948 = vmatpush1.msra.mxu0 0.0
        %2949 = vmatprep.subr.mxu0 0.0
        %2950 = vmatpush1.msra.mxu0 0.0
        %2951 = vmatprep.subr.mxu0 0.0
        %2952 = vmatpush1.msra.mxu0 0.0
        %2953 = vmatprep.subr.mxu0 0.0
        %2954 = vmatpush1.msra.mxu0 0.0
        %2955 = vmatprep.mubr.f32.mxu0 0.0
        %v2956 = vand.u32 %v2789, 4294901760
        %2957 = vmatmul.mubr.f32.gmra.mrb[0].mxu0 %v2956
        %v2958 = vpop.f32.mrb[0].mxu0
        %v2959 = vadd.f32 %v2868, %v2958
        %v2960 = vpop.f32.mrb[0].mxu0
        %2961 = vmatprep.mubr.f32.mxu0 0.0
        %v2962 = vand.u32 %v2792, 4294901760
        %2963 = vmatmul.mubr.f32.gmra.mrb[0].mxu0 %v2962
        %v2964 = vpop.f32.mrb[0].mxu0
        %v2965 = vadd.f32 %v2878, %v2964
        %v2966 = vpop.f32.mrb[0].mxu0
        %2967 = vdwg.mxu0
        %2968 = vmatprep.subr.mxu0 0.0
        %v2969 = vand.u32 %v210, 4294901760
        %v2970 = vsub.f32 %v210, %v2969
        %2971 = vmatpush1.msra.mxu0 %v2970
        %2972 = vmatprep.subr.mxu0 0.0
        %v2973 = vand.u32 %v211, 4294901760
        %v2974 = vsub.f32 %v211, %v2973
        %2975 = vmatpush1.msra.mxu0 %v2974
        %2976 = vmatprep.subr.mxu0 0.0
        %2977 = vmatpush1.msra.mxu0 0.0
        %2978 = vmatprep.subr.mxu0 0.0
        %2979 = vmatpush1.msra.mxu0 0.0
        %2980 = vmatprep.subr.mxu0 0.0
        %2981 = vmatpush1.msra.mxu0 0.0
        %2982 = vmatprep.subr.mxu0 0.0
        %2983 = vmatpush1.msra.mxu0 0.0
        %2984 = vmatprep.subr.mxu0 0.0
        %2985 = vmatpush1.msra.mxu0 0.0
        %2986 = vmatprep.subr.mxu0 0.0
        %2987 = vmatpush1.msra.mxu0 0.0
        %2988 = vmatprep.subr.mxu0 0.0
        %2989 = vmatpush1.msra.mxu0 0.0
        %2990 = vmatprep.subr.mxu0 0.0
        %2991 = vmatpush1.msra.mxu0 0.0
        %2992 = vmatprep.subr.mxu0 0.0
        %2993 = vmatpush1.msra.mxu0 0.0
        %2994 = vmatprep.subr.mxu0 0.0
        %2995 = vmatpush1.msra.mxu0 0.0
        %2996 = vmatprep.subr.mxu0 0.0
        %2997 = vmatpush1.msra.mxu0 0.0
        %2998 = vmatprep.subr.mxu0 0.0
        %2999 = vmatpush1.msra.mxu0 0.0
        %3000 = vmatprep.subr.mxu0 0.0
        %3001 = vmatpush1.msra.mxu0 0.0
        %3002 = vmatprep.subr.mxu0 0.0
        %3003 = vmatpush1.msra.mxu0 0.0
        %3004 = vmatprep.subr.mxu0 0.0
        %3005 = vmatpush1.msra.mxu0 0.0
        %3006 = vmatprep.subr.mxu0 0.0
        %3007 = vmatpush1.msra.mxu0 0.0
        %3008 = vmatprep.subr.mxu0 0.0
        %3009 = vmatpush1.msra.mxu0 0.0
        %3010 = vmatprep.subr.mxu0 0.0
        %3011 = vmatpush1.msra.mxu0 0.0
        %3012 = vmatprep.subr.mxu0 0.0
        %3013 = vmatpush1.msra.mxu0 0.0
        %3014 = vmatprep.subr.mxu0 0.0
        %3015 = vmatpush1.msra.mxu0 0.0
        %3016 = vmatprep.subr.mxu0 0.0
        %3017 = vmatpush1.msra.mxu0 0.0
        %3018 = vmatprep.subr.mxu0 0.0
        %3019 = vmatpush1.msra.mxu0 0.0
        %3020 = vmatprep.subr.mxu0 0.0
        %3021 = vmatpush1.msra.mxu0 0.0
        %3022 = vmatprep.subr.mxu0 0.0
        %3023 = vmatpush1.msra.mxu0 0.0
        %3024 = vmatprep.subr.mxu0 0.0
        %3025 = vmatpush1.msra.mxu0 0.0
        %3026 = vmatprep.subr.mxu0 0.0
        %3027 = vmatpush1.msra.mxu0 0.0
        %3028 = vmatprep.subr.mxu0 0.0
        %3029 = vmatpush1.msra.mxu0 0.0
        %3030 = vmatprep.subr.mxu0 0.0
        %3031 = vmatpush1.msra.mxu0 0.0
        %3032 = vmatprep.subr.mxu0 0.0
        %3033 = vmatpush1.msra.mxu0 0.0
        %3034 = vmatprep.subr.mxu0 0.0
        %3035 = vmatpush1.msra.mxu0 0.0
        %3036 = vmatprep.mubr.f32.mxu0 0.0
        %v3037 = vand.u32 %v2789, 4294901760
        %v3038 = vsub.f32 %v2789, %v3037
        %3039 = vmatmul.mubr.f32.gmra.mrb[0].mxu0 %v3038
        %v3040 = vpop.f32.mrb[0].mxu0
        %v3041 = vadd.f32 %v2959, %v3040
        %v3042 = vpop.f32.mrb[0].mxu0
        %3043 = vmatprep.mubr.f32.mxu0 0.0
        %v3044 = vand.u32 %v2792, 4294901760
        %v3045 = vsub.f32 %v2792, %v3044
        %3046 = vmatmul.mubr.f32.gmra.mrb[0].mxu0 %v3045
        %v3047 = vpop.f32.mrb[0].mxu0
        %v3048 = vadd.f32 %v2965, %v3047
        %v3049 = vpop.f32.mrb[0].mxu0
        %3050 = vdwg.mxu0
        %3051 = vmatprep.subr.mxu0 0.0
        %v3052 = vand.u32 %v210, 4294901760
        %3053 = vmatpush1.msra.mxu0 %v3052
        %3054 = vmatprep.subr.mxu0 0.0
        %v3055 = vand.u32 %v211, 4294901760
        %3056 = vmatpush1.msra.mxu0 %v3055
        %3057 = vmatprep.subr.mxu0 0.0
        %3058 = vmatpush1.msra.mxu0 0.0
        %3059 = vmatprep.subr.mxu0 0.0
        %3060 = vmatpush1.msra.mxu0 0.0
        %3061 = vmatprep.subr.mxu0 0.0
        %3062 = vmatpush1.msra.mxu0 0.0
        %3063 = vmatprep.subr.mxu0 0.0
        %3064 = vmatpush1.msra.mxu0 0.0
        %3065 = vmatprep.subr.mxu0 0.0
        %3066 = vmatpush1.msra.mxu0 0.0
        %3067 = vmatprep.subr.mxu0 0.0
        %3068 = vmatpush1.msra.mxu0 0.0
        %3069 = vmatprep.subr.mxu0 0.0
        %3070 = vmatpush1.msra.mxu0 0.0
        %3071 = vmatprep.subr.mxu0 0.0
        %3072 = vmatpush1.msra.mxu0 0.0
        %3073 = vmatprep.subr.mxu0 0.0
        %3074 = vmatpush1.msra.mxu0 0.0
        %3075 = vmatprep.subr.mxu0 0.0
        %3076 = vmatpush1.msra.mxu0 0.0
        %3077 = vmatprep.subr.mxu0 0.0
        %3078 = vmatpush1.msra.mxu0 0.0
        %3079 = vmatprep.subr.mxu0 0.0
        %3080 = vmatpush1.msra.mxu0 0.0
        %3081 = vmatprep.subr.mxu0 0.0
        %3082 = vmatpush1.msra.mxu0 0.0
        %3083 = vmatprep.subr.mxu0 0.0
        %3084 = vmatpush1.msra.mxu0 0.0
        %3085 = vmatprep.subr.mxu0 0.0
        %3086 = vmatpush1.msra.mxu0 0.0
        %3087 = vmatprep.subr.mxu0 0.0
        %3088 = vmatpush1.msra.mxu0 0.0
        %3089 = vmatprep.subr.mxu0 0.0
        %3090 = vmatpush1.msra.mxu0 0.0
        %3091 = vmatprep.subr.mxu0 0.0
        %3092 = vmatpush1.msra.mxu0 0.0
        %3093 = vmatprep.subr.mxu0 0.0
        %3094 = vmatpush1.msra.mxu0 0.0
        %3095 = vmatprep.subr.mxu0 0.0
        %3096 = vmatpush1.msra.mxu0 0.0
        %3097 = vmatprep.subr.mxu0 0.0
        %3098 = vmatpush1.msra.mxu0 0.0
        %3099 = vmatprep.subr.mxu0 0.0
        %3100 = vmatpush1.msra.mxu0 0.0
        %3101 = vmatprep.subr.mxu0 0.0
        %3102 = vmatpush1.msra.mxu0 0.0
        %3103 = vmatprep.subr.mxu0 0.0
        %3104 = vmatpush1.msra.mxu0 0.0
        %3105 = vmatprep.subr.mxu0 0.0
        %3106 = vmatpush1.msra.mxu0 0.0
        %3107 = vmatprep.subr.mxu0 0.0
        %3108 = vmatpush1.msra.mxu0 0.0
        %3109 = vmatprep.subr.mxu0 0.0
        %3110 = vmatpush1.msra.mxu0 0.0
        %3111 = vmatprep.subr.mxu0 0.0
        %3112 = vmatpush1.msra.mxu0 0.0
        %3113 = vmatprep.subr.mxu0 0.0
        %3114 = vmatpush1.msra.mxu0 0.0
        %3115 = vmatprep.subr.mxu0 0.0
        %3116 = vmatpush1.msra.mxu0 0.0
        %3117 = vmatprep.mubr.f32.mxu0 0.0
        %v3118 = vand.u32 %v2789, 4294901760
        %v3119 = vsub.f32 %v2789, %v3118
        %v3120 = vand.u32 %v3119, 4294901760
        %3121 = vmatmul.mubr.f32.gmra.mrb[0].mxu0 %v3120
        %v3122 = vpop.f32.mrb[0].mxu0
        %v3123 = vadd.f32 %v3041, %v3122
        %v3124 = vpop.f32.mrb[0].mxu0
        %3125 = vmatprep.mubr.f32.mxu0 0.0
        %v3126 = vand.u32 %v2792, 4294901760
        %v3127 = vsub.f32 %v2792, %v3126
        %v3128 = vand.u32 %v3127, 4294901760
        %3129 = vmatmul.mubr.f32.gmra.mrb[0].mxu0 %v3128
        %v3130 = vpop.f32.mrb[0].mxu0
        %v3131 = vadd.f32 %v3048, %v3130
        %v3132 = vpop.f32.mrb[0].mxu0
        %3133 = vdwg.mxu0
        %3134 = vmatprep.subr.mxu0 0.0
        %v3135 = vand.u32 %v210, 4294901760
        %v3136 = vsub.f32 %v210, %v3135
        %v3137 = vand.u32 %v3136, 4294901760
        %3138 = vmatpush1.msra.mxu0 %v3137
        %3139 = vmatprep.subr.mxu0 0.0
        %v3140 = vand.u32 %v211, 4294901760
        %v3141 = vsub.f32 %v211, %v3140
        %v3142 = vand.u32 %v3141, 4294901760
        %3143 = vmatpush1.msra.mxu0 %v3142
        %3144 = vmatprep.subr.mxu0 0.0
        %3145 = vmatpush1.msra.mxu0 0.0
        %3146 = vmatprep.subr.mxu0 0.0
        %3147 = vmatpush1.msra.mxu0 0.0
        %3148 = vmatprep.subr.mxu0 0.0
        %3149 = vmatpush1.msra.mxu0 0.0
        %3150 = vmatprep.subr.mxu0 0.0
        %3151 = vmatpush1.msra.mxu0 0.0
        %3152 = vmatprep.subr.mxu0 0.0
        %3153 = vmatpush1.msra.mxu0 0.0
        %3154 = vmatprep.subr.mxu0 0.0
        %3155 = vmatpush1.msra.mxu0 0.0
        %3156 = vmatprep.subr.mxu0 0.0
        %3157 = vmatpush1.msra.mxu0 0.0
        %3158 = vmatprep.subr.mxu0 0.0
        %3159 = vmatpush1.msra.mxu0 0.0
        %3160 = vmatprep.subr.mxu0 0.0
        %3161 = vmatpush1.msra.mxu0 0.0
        %3162 = vmatprep.subr.mxu0 0.0
        %3163 = vmatpush1.msra.mxu0 0.0
        %3164 = vmatprep.subr.mxu0 0.0
        %3165 = vmatpush1.msra.mxu0 0.0
        %3166 = vmatprep.subr.mxu0 0.0
        %3167 = vmatpush1.msra.mxu0 0.0
        %3168 = vmatprep.subr.mxu0 0.0
        %3169 = vmatpush1.msra.mxu0 0.0
        %3170 = vmatprep.subr.mxu0 0.0
        %3171 = vmatpush1.msra.mxu0 0.0
        %3172 = vmatprep.subr.mxu0 0.0
        %3173 = vmatpush1.msra.mxu0 0.0
        %3174 = vmatprep.subr.mxu0 0.0
        %3175 = vmatpush1.msra.mxu0 0.0
        %3176 = vmatprep.subr.mxu0 0.0
        %3177 = vmatpush1.msra.mxu0 0.0
        %3178 = vmatprep.subr.mxu0 0.0
        %3179 = vmatpush1.msra.mxu0 0.0
        %3180 = vmatprep.subr.mxu0 0.0
        %3181 = vmatpush1.msra.mxu0 0.0
        %3182 = vmatprep.subr.mxu0 0.0
        %3183 = vmatpush1.msra.mxu0 0.0
        %3184 = vmatprep.subr.mxu0 0.0
        %3185 = vmatpush1.msra.mxu0 0.0
        %3186 = vmatprep.subr.mxu0 0.0
        %3187 = vmatpush1.msra.mxu0 0.0
        %3188 = vmatprep.subr.mxu0 0.0
        %3189 = vmatpush1.msra.mxu0 0.0
        %3190 = vmatprep.subr.mxu0 0.0
        %3191 = vmatpush1.msra.mxu0 0.0
        %3192 = vmatprep.subr.mxu0 0.0
        %3193 = vmatpush1.msra.mxu0 0.0
        %3194 = vmatprep.subr.mxu0 0.0
        %3195 = vmatpush1.msra.mxu0 0.0
        %3196 = vmatprep.subr.mxu0 0.0
        %3197 = vmatpush1.msra.mxu0 0.0
        %3198 = vmatprep.subr.mxu0 0.0
        %3199 = vmatpush1.msra.mxu0 0.0
        %3200 = vmatprep.subr.mxu0 0.0
        %3201 = vmatpush1.msra.mxu0 0.0
        %3202 = vmatprep.subr.mxu0 0.0
        %3203 = vmatpush1.msra.mxu0 0.0
        %3204 = vmatprep.mubr.f32.mxu0 0.0
        %v3205 = vand.u32 %v2789, 4294901760
        %3206 = vmatmul.mubr.f32.gmra.mrb[0].mxu0 %v3205
        %v3207 = vpop.f32.mrb[0].mxu0
        %v3208 = vadd.f32 %v3123, %v3207
        %v3209 = vpop.f32.mrb[0].mxu0
        %3210 = vmatprep.mubr.f32.mxu0 0.0
        %v3211 = vand.u32 %v2792, 4294901760
        %3212 = vmatmul.mubr.f32.gmra.mrb[0].mxu0 %v3211
        %v3213 = vpop.f32.mrb[0].mxu0
        %v3214 = vadd.f32 %v3131, %v3213
        %v3215 = vpop.f32.mrb[0].mxu0
        %3216 = vdwg.mxu0
        %3217 = vmatprep.subr.mxu0 0.0
        %v3218 = vand.u32 %v210, 4294901760
        %3219 = vmatpush1.msra.mxu0 %v3218
        %3220 = vmatprep.subr.mxu0 0.0
        %v3221 = vand.u32 %v211, 4294901760
        %3222 = vmatpush1.msra.mxu0 %v3221
        %3223 = vmatprep.subr.mxu0 0.0
        %3224 = vmatpush1.msra.mxu0 0.0
        %3225 = vmatprep.subr.mxu0 0.0
        %3226 = vmatpush1.msra.mxu0 0.0
        %3227 = vmatprep.subr.mxu0 0.0
        %3228 = vmatpush1.msra.mxu0 0.0
        %3229 = vmatprep.subr.mxu0 0.0
        %3230 = vmatpush1.msra.mxu0 0.0
        %3231 = vmatprep.subr.mxu0 0.0
        %3232 = vmatpush1.msra.mxu0 0.0
        %3233 = vmatprep.subr.mxu0 0.0
        %3234 = vmatpush1.msra.mxu0 0.0
        %3235 = vmatprep.subr.mxu0 0.0
        %3236 = vmatpush1.msra.mxu0 0.0
        %3237 = vmatprep.subr.mxu0 0.0
        %3238 = vmatpush1.msra.mxu0 0.0
        %3239 = vmatprep.subr.mxu0 0.0
        %3240 = vmatpush1.msra.mxu0 0.0
        %3241 = vmatprep.subr.mxu0 0.0
        %3242 = vmatpush1.msra.mxu0 0.0
        %3243 = vmatprep.subr.mxu0 0.0
        %3244 = vmatpush1.msra.mxu0 0.0
        %3245 = vmatprep.subr.mxu0 0.0
        %3246 = vmatpush1.msra.mxu0 0.0
        %3247 = vmatprep.subr.mxu0 0.0
        %3248 = vmatpush1.msra.mxu0 0.0
        %3249 = vmatprep.subr.mxu0 0.0
        %3250 = vmatpush1.msra.mxu0 0.0
        %3251 = vmatprep.subr.mxu0 0.0
        %3252 = vmatpush1.msra.mxu0 0.0
        %3253 = vmatprep.subr.mxu0 0.0
        %3254 = vmatpush1.msra.mxu0 0.0
        %3255 = vmatprep.subr.mxu0 0.0
        %3256 = vmatpush1.msra.mxu0 0.0
        %3257 = vmatprep.subr.mxu0 0.0
        %3258 = vmatpush1.msra.mxu0 0.0
        %3259 = vmatprep.subr.mxu0 0.0
        %3260 = vmatpush1.msra.mxu0 0.0
        %3261 = vmatprep.subr.mxu0 0.0
        %3262 = vmatpush1.msra.mxu0 0.0
        %3263 = vmatprep.subr.mxu0 0.0
        %3264 = vmatpush1.msra.mxu0 0.0
        %3265 = vmatprep.subr.mxu0 0.0
        %3266 = vmatpush1.msra.mxu0 0.0
        %3267 = vmatprep.subr.mxu0 0.0
        %3268 = vmatpush1.msra.mxu0 0.0
        %3269 = vmatprep.subr.mxu0 0.0
        %3270 = vmatpush1.msra.mxu0 0.0
        %3271 = vmatprep.subr.mxu0 0.0
        %3272 = vmatpush1.msra.mxu0 0.0
        %3273 = vmatprep.subr.mxu0 0.0
        %3274 = vmatpush1.msra.mxu0 0.0
        %3275 = vmatprep.subr.mxu0 0.0
        %3276 = vmatpush1.msra.mxu0 0.0
        %3277 = vmatprep.subr.mxu0 0.0
        %3278 = vmatpush1.msra.mxu0 0.0
        %3279 = vmatprep.subr.mxu0 0.0
        %3280 = vmatpush1.msra.mxu0 0.0
        %3281 = vmatprep.subr.mxu0 0.0
        %3282 = vmatpush1.msra.mxu0 0.0
        %3283 = vmatprep.mubr.f32.mxu0 0.0
        %v3284 = vand.u32 %v2789, 4294901760
        %3285 = vmatmul.mubr.f32.gmra.mrb[0].mxu0 %v3284
        %v3286 = vpop.f32.mrb[0].mxu0
        %v3287 = vadd.f32 %v3208, %v3286
        %v3288 = vpop.f32.mrb[0].mxu0
        %3289 = vmatprep.mubr.f32.mxu0 0.0
        %v3290 = vand.u32 %v2792, 4294901760
        %3291 = vmatmul.mubr.f32.gmra.mrb[0].mxu0 %v3290
        %v3292 = vpop.f32.mrb[0].mxu0
        %v3293 = vadd.f32 %v3214, %v3292
        %v3294 = vpop.f32.mrb[0].mxu0
        %3295 = vdwg.mxu0
        %s3296 = scalar_lea.vmem %s178, 64 [#allocation5]
        %3297 = vst.msk [vmem:[%s3296] sm:$0xff] %vm209, %v3287
        %3299 = vrot.lane.b32.xlu0 %v3287, 120
        %v3300 = vpop.permute.xlu0 %3299
        %s3302 = scalar_lea.vmem %s178, 72 [#allocation5]
        %3303 = vst.msk [vmem:[%s3302] sm:$0xff] %vm209, %v3300
        %s3304 = scalar_lea.vmem %s178, 80 [#allocation5]
        %3305 = vst.msk [vmem:[%s3304] sm:$0xff] %vm209, %v3293
        %3307 = vrot.lane.b32.xlu0 %v3293, 120
        %v3308 = vpop.permute.xlu0 %3307
        %s3310 = scalar_lea.vmem %s178, 88 [#allocation5]
        %3311 = vst.msk [vmem:[%s3310] sm:$0xff] %vm209, %v3308
        %s3312 = scalar_lea.vmem %s160, 48 [#allocation2]
        %v3313 = vld [vmem:[%s3312] sm:$0xff]
        %v3314 = vld [vmem:[%s3312 + $0x8] sm:$0xff]
        %3315 = vmatprep.subr.mxu0 0.0
        %v3316 = vand.u32 %v3313, 4294901760
        %3317 = vmatpush1.msra.mxu0 %v3316
        %3318 = vmatprep.subr.mxu0 0.0
        %v3319 = vand.u32 %v3314, 4294901760
        %3320 = vmatpush1.msra.mxu0 %v3319
        %3321 = vmatprep.subr.mxu0 0.0
        %3322 = vmatpush1.msra.mxu0 0.0
        %3323 = vmatprep.subr.mxu0 0.0
        %3324 = vmatpush1.msra.mxu0 0.0
        %3325 = vmatprep.subr.mxu0 0.0
        %3326 = vmatpush1.msra.mxu0 0.0
        %3327 = vmatprep.subr.mxu0 0.0
        %3328 = vmatpush1.msra.mxu0 0.0
        %3329 = vmatprep.subr.mxu0 0.0
        %3330 = vmatpush1.msra.mxu0 0.0
        %3331 = vmatprep.subr.mxu0 0.0
        %3332 = vmatpush1.msra.mxu0 0.0
        %3333 = vmatprep.subr.mxu0 0.0
        %3334 = vmatpush1.msra.mxu0 0.0
        %3335 = vmatprep.subr.mxu0 0.0
        %3336 = vmatpush1.msra.mxu0 0.0
        %3337 = vmatprep.subr.mxu0 0.0
        %3338 = vmatpush1.msra.mxu0 0.0
        %3339 = vmatprep.subr.mxu0 0.0
        %3340 = vmatpush1.msra.mxu0 0.0
        %3341 = vmatprep.subr.mxu0 0.0
        %3342 = vmatpush1.msra.mxu0 0.0
        %3343 = vmatprep.subr.mxu0 0.0
        %3344 = vmatpush1.msra.mxu0 0.0
        %3345 = vmatprep.subr.mxu0 0.0
        %3346 = vmatpush1.msra.mxu0 0.0
        %3347 = vmatprep.subr.mxu0 0.0
        %3348 = vmatpush1.msra.mxu0 0.0
        %3349 = vmatprep.subr.mxu0 0.0
        %3350 = vmatpush1.msra.mxu0 0.0
        %3351 = vmatprep.subr.mxu0 0.0
        %3352 = vmatpush1.msra.mxu0 0.0
        %3353 = vmatprep.subr.mxu0 0.0
        %3354 = vmatpush1.msra.mxu0 0.0
        %3355 = vmatprep.subr.mxu0 0.0
        %3356 = vmatpush1.msra.mxu0 0.0
        %3357 = vmatprep.subr.mxu0 0.0
        %3358 = vmatpush1.msra.mxu0 0.0
        %3359 = vmatprep.subr.mxu0 0.0
        %3360 = vmatpush1.msra.mxu0 0.0
        %3361 = vmatprep.subr.mxu0 0.0
        %3362 = vmatpush1.msra.mxu0 0.0
        %3363 = vmatprep.subr.mxu0 0.0
        %3364 = vmatpush1.msra.mxu0 0.0
        %3365 = vmatprep.subr.mxu0 0.0
        %3366 = vmatpush1.msra.mxu0 0.0
        %3367 = vmatprep.subr.mxu0 0.0
        %3368 = vmatpush1.msra.mxu0 0.0
        %3369 = vmatprep.subr.mxu0 0.0
        %3370 = vmatpush1.msra.mxu0 0.0
        %3371 = vmatprep.subr.mxu0 0.0
        %3372 = vmatpush1.msra.mxu0 0.0
        %3373 = vmatprep.subr.mxu0 0.0
        %3374 = vmatpush1.msra.mxu0 0.0
        %3375 = vmatprep.subr.mxu0 0.0
        %3376 = vmatpush1.msra.mxu0 0.0
        %3377 = vmatprep.subr.mxu0 0.0
        %3378 = vmatpush1.msra.mxu0 0.0
        %3379 = vmatprep.subr.mxu0 0.0
        %3380 = vmatpush1.msra.mxu0 0.0
        %3381 = vmatprep.mubr.f32.mxu0 0.0
        %v3382 = vand.u32 %v224, 4294901760
        %v3383 = vsub.f32 %v224, %v3382
        %v3384 = vand.u32 %v3383, 4294901760
        %v3385 = vsub.f32 %v3383, %v3384
        %v3386 = vand.u32 %v3385, 4294901760
        %3387 = vmatmul.mubr.f32.gmra.mrb[0].mxu0 %v3386
        %v3388 = vpop.f32.mrb[0].mxu0
        %v3389 = vadd.f32 0.0, %v3388
        %v3390 = vpop.f32.mrb[0].mxu0
        %3391 = vmatprep.mubr.f32.mxu0 0.0
        %v3392 = vand.u32 %v227, 4294901760
        %v3393 = vsub.f32 %v227, %v3392
        %v3394 = vand.u32 %v3393, 4294901760
        %v3395 = vsub.f32 %v3393, %v3394
        %v3396 = vand.u32 %v3395, 4294901760
        %3397 = vmatmul.mubr.f32.gmra.mrb[0].mxu0 %v3396
        %v3398 = vpop.f32.mrb[0].mxu0
        %v3399 = vadd.f32 0.0, %v3398
        %v3400 = vpop.f32.mrb[0].mxu0
        %3401 = vdwg.mxu0
        %3402 = vmatprep.subr.mxu0 0.0
        %v3403 = vand.u32 %v3313, 4294901760
        %v3404 = vsub.f32 %v3313, %v3403
        %v3405 = vand.u32 %v3404, 4294901760
        %v3406 = vsub.f32 %v3404, %v3405
        %v3407 = vand.u32 %v3406, 4294901760
        %3408 = vmatpush1.msra.mxu0 %v3407
        %3409 = vmatprep.subr.mxu0 0.0
        %v3410 = vand.u32 %v3314, 4294901760
        %v3411 = vsub.f32 %v3314, %v3410
        %v3412 = vand.u32 %v3411, 4294901760
        %v3413 = vsub.f32 %v3411, %v3412
        %v3414 = vand.u32 %v3413, 4294901760
        %3415 = vmatpush1.msra.mxu0 %v3414
        %3416 = vmatprep.subr.mxu0 0.0
        %3417 = vmatpush1.msra.mxu0 0.0
        %3418 = vmatprep.subr.mxu0 0.0
        %3419 = vmatpush1.msra.mxu0 0.0
        %3420 = vmatprep.subr.mxu0 0.0
        %3421 = vmatpush1.msra.mxu0 0.0
        %3422 = vmatprep.subr.mxu0 0.0
        %3423 = vmatpush1.msra.mxu0 0.0
        %3424 = vmatprep.subr.mxu0 0.0
        %3425 = vmatpush1.msra.mxu0 0.0
        %3426 = vmatprep.subr.mxu0 0.0
        %3427 = vmatpush1.msra.mxu0 0.0
        %3428 = vmatprep.subr.mxu0 0.0
        %3429 = vmatpush1.msra.mxu0 0.0
        %3430 = vmatprep.subr.mxu0 0.0
        %3431 = vmatpush1.msra.mxu0 0.0
        %3432 = vmatprep.subr.mxu0 0.0
        %3433 = vmatpush1.msra.mxu0 0.0
        %3434 = vmatprep.subr.mxu0 0.0
        %3435 = vmatpush1.msra.mxu0 0.0
        %3436 = vmatprep.subr.mxu0 0.0
        %3437 = vmatpush1.msra.mxu0 0.0
        %3438 = vmatprep.subr.mxu0 0.0
        %3439 = vmatpush1.msra.mxu0 0.0
        %3440 = vmatprep.subr.mxu0 0.0
        %3441 = vmatpush1.msra.mxu0 0.0
        %3442 = vmatprep.subr.mxu0 0.0
        %3443 = vmatpush1.msra.mxu0 0.0
        %3444 = vmatprep.subr.mxu0 0.0
        %3445 = vmatpush1.msra.mxu0 0.0
        %3446 = vmatprep.subr.mxu0 0.0
        %3447 = vmatpush1.msra.mxu0 0.0
        %3448 = vmatprep.subr.mxu0 0.0
        %3449 = vmatpush1.msra.mxu0 0.0
        %3450 = vmatprep.subr.mxu0 0.0
        %3451 = vmatpush1.msra.mxu0 0.0
        %3452 = vmatprep.subr.mxu0 0.0
        %3453 = vmatpush1.msra.mxu0 0.0
        %3454 = vmatprep.subr.mxu0 0.0
        %3455 = vmatpush1.msra.mxu0 0.0
        %3456 = vmatprep.subr.mxu0 0.0
        %3457 = vmatpush1.msra.mxu0 0.0
        %3458 = vmatprep.subr.mxu0 0.0
        %3459 = vmatpush1.msra.mxu0 0.0
        %3460 = vmatprep.subr.mxu0 0.0
        %3461 = vmatpush1.msra.mxu0 0.0
        %3462 = vmatprep.subr.mxu0 0.0
        %3463 = vmatpush1.msra.mxu0 0.0
        %3464 = vmatprep.subr.mxu0 0.0
        %3465 = vmatpush1.msra.mxu0 0.0
        %3466 = vmatprep.subr.mxu0 0.0
        %3467 = vmatpush1.msra.mxu0 0.0
        %3468 = vmatprep.subr.mxu0 0.0
        %3469 = vmatpush1.msra.mxu0 0.0
        %3470 = vmatprep.subr.mxu0 0.0
        %3471 = vmatpush1.msra.mxu0 0.0
        %3472 = vmatprep.subr.mxu0 0.0
        %3473 = vmatpush1.msra.mxu0 0.0
        %3474 = vmatprep.subr.mxu0 0.0
        %3475 = vmatpush1.msra.mxu0 0.0
        %3476 = vmatprep.mubr.f32.mxu0 0.0
        %v3477 = vand.u32 %v224, 4294901760
        %3478 = vmatmul.mubr.f32.gmra.mrb[0].mxu0 %v3477
        %v3479 = vpop.f32.mrb[0].mxu0
        %v3480 = vadd.f32 %v3389, %v3479
        %v3481 = vpop.f32.mrb[0].mxu0
        %3482 = vmatprep.mubr.f32.mxu0 0.0
        %v3483 = vand.u32 %v227, 4294901760
        %3484 = vmatmul.mubr.f32.gmra.mrb[0].mxu0 %v3483
        %v3485 = vpop.f32.mrb[0].mxu0
        %v3486 = vadd.f32 %v3399, %v3485
        %v3487 = vpop.f32.mrb[0].mxu0
        %3488 = vdwg.mxu0
        %3489 = vmatprep.subr.mxu0 0.0
        %v3490 = vand.u32 %v3313, 4294901760
        %v3491 = vsub.f32 %v3313, %v3490
        %3492 = vmatpush1.msra.mxu0 %v3491
        %3493 = vmatprep.subr.mxu0 0.0
        %v3494 = vand.u32 %v3314, 4294901760
        %v3495 = vsub.f32 %v3314, %v3494
        %3496 = vmatpush1.msra.mxu0 %v3495
        %3497 = vmatprep.subr.mxu0 0.0
        %3498 = vmatpush1.msra.mxu0 0.0
        %3499 = vmatprep.subr.mxu0 0.0
        %3500 = vmatpush1.msra.mxu0 0.0
        %3501 = vmatprep.subr.mxu0 0.0
        %3502 = vmatpush1.msra.mxu0 0.0
        %3503 = vmatprep.subr.mxu0 0.0
        %3504 = vmatpush1.msra.mxu0 0.0
        %3505 = vmatprep.subr.mxu0 0.0
        %3506 = vmatpush1.msra.mxu0 0.0
        %3507 = vmatprep.subr.mxu0 0.0
        %3508 = vmatpush1.msra.mxu0 0.0
        %3509 = vmatprep.subr.mxu0 0.0
        %3510 = vmatpush1.msra.mxu0 0.0
        %3511 = vmatprep.subr.mxu0 0.0
        %3512 = vmatpush1.msra.mxu0 0.0
        %3513 = vmatprep.subr.mxu0 0.0
        %3514 = vmatpush1.msra.mxu0 0.0
        %3515 = vmatprep.subr.mxu0 0.0
        %3516 = vmatpush1.msra.mxu0 0.0
        %3517 = vmatprep.subr.mxu0 0.0
        %3518 = vmatpush1.msra.mxu0 0.0
        %3519 = vmatprep.subr.mxu0 0.0
        %3520 = vmatpush1.msra.mxu0 0.0
        %3521 = vmatprep.subr.mxu0 0.0
        %3522 = vmatpush1.msra.mxu0 0.0
        %3523 = vmatprep.subr.mxu0 0.0
        %3524 = vmatpush1.msra.mxu0 0.0
        %3525 = vmatprep.subr.mxu0 0.0
        %3526 = vmatpush1.msra.mxu0 0.0
        %3527 = vmatprep.subr.mxu0 0.0
        %3528 = vmatpush1.msra.mxu0 0.0
        %3529 = vmatprep.subr.mxu0 0.0
        %3530 = vmatpush1.msra.mxu0 0.0
        %3531 = vmatprep.subr.mxu0 0.0
        %3532 = vmatpush1.msra.mxu0 0.0
        %3533 = vmatprep.subr.mxu0 0.0
        %3534 = vmatpush1.msra.mxu0 0.0
        %3535 = vmatprep.subr.mxu0 0.0
        %3536 = vmatpush1.msra.mxu0 0.0
        %3537 = vmatprep.subr.mxu0 0.0
        %3538 = vmatpush1.msra.mxu0 0.0
        %3539 = vmatprep.subr.mxu0 0.0
        %3540 = vmatpush1.msra.mxu0 0.0
        %3541 = vmatprep.subr.mxu0 0.0
        %3542 = vmatpush1.msra.mxu0 0.0
        %3543 = vmatprep.subr.mxu0 0.0
        %3544 = vmatpush1.msra.mxu0 0.0
        %3545 = vmatprep.subr.mxu0 0.0
        %3546 = vmatpush1.msra.mxu0 0.0
        %3547 = vmatprep.subr.mxu0 0.0
        %3548 = vmatpush1.msra.mxu0 0.0
        %3549 = vmatprep.subr.mxu0 0.0
        %3550 = vmatpush1.msra.mxu0 0.0
        %3551 = vmatprep.subr.mxu0 0.0
        %3552 = vmatpush1.msra.mxu0 0.0
        %3553 = vmatprep.subr.mxu0 0.0
        %3554 = vmatpush1.msra.mxu0 0.0
        %3555 = vmatprep.subr.mxu0 0.0
        %3556 = vmatpush1.msra.mxu0 0.0
        %3557 = vmatprep.mubr.f32.mxu0 0.0
        %v3558 = vand.u32 %v224, 4294901760
        %v3559 = vsub.f32 %v224, %v3558
        %3560 = vmatmul.mubr.f32.gmra.mrb[0].mxu0 %v3559
        %v3561 = vpop.f32.mrb[0].mxu0
        %v3562 = vadd.f32 %v3480, %v3561
        %v3563 = vpop.f32.mrb[0].mxu0
        %3564 = vmatprep.mubr.f32.mxu0 0.0
        %v3565 = vand.u32 %v227, 4294901760
        %v3566 = vsub.f32 %v227, %v3565
        %3567 = vmatmul.mubr.f32.gmra.mrb[0].mxu0 %v3566
        %v3568 = vpop.f32.mrb[0].mxu0
        %v3569 = vadd.f32 %v3486, %v3568
        %v3570 = vpop.f32.mrb[0].mxu0
        %3571 = vdwg.mxu0
        %3572 = vmatprep.subr.mxu0 0.0
        %v3573 = vand.u32 %v3313, 4294901760
        %3574 = vmatpush1.msra.mxu0 %v3573
        %3575 = vmatprep.subr.mxu0 0.0
        %v3576 = vand.u32 %v3314, 4294901760
        %3577 = vmatpush1.msra.mxu0 %v3576
        %3578 = vmatprep.subr.mxu0 0.0
        %3579 = vmatpush1.msra.mxu0 0.0
        %3580 = vmatprep.subr.mxu0 0.0
        %3581 = vmatpush1.msra.mxu0 0.0
        %3582 = vmatprep.subr.mxu0 0.0
        %3583 = vmatpush1.msra.mxu0 0.0
        %3584 = vmatprep.subr.mxu0 0.0
        %3585 = vmatpush1.msra.mxu0 0.0
        %3586 = vmatprep.subr.mxu0 0.0
        %3587 = vmatpush1.msra.mxu0 0.0
        %3588 = vmatprep.subr.mxu0 0.0
        %3589 = vmatpush1.msra.mxu0 0.0
        %3590 = vmatprep.subr.mxu0 0.0
        %3591 = vmatpush1.msra.mxu0 0.0
        %3592 = vmatprep.subr.mxu0 0.0
        %3593 = vmatpush1.msra.mxu0 0.0
        %3594 = vmatprep.subr.mxu0 0.0
        %3595 = vmatpush1.msra.mxu0 0.0
        %3596 = vmatprep.subr.mxu0 0.0
        %3597 = vmatpush1.msra.mxu0 0.0
        %3598 = vmatprep.subr.mxu0 0.0
        %3599 = vmatpush1.msra.mxu0 0.0
        %3600 = vmatprep.subr.mxu0 0.0
        %3601 = vmatpush1.msra.mxu0 0.0
        %3602 = vmatprep.subr.mxu0 0.0
        %3603 = vmatpush1.msra.mxu0 0.0
        %3604 = vmatprep.subr.mxu0 0.0
        %3605 = vmatpush1.msra.mxu0 0.0
        %3606 = vmatprep.subr.mxu0 0.0
        %3607 = vmatpush1.msra.mxu0 0.0
        %3608 = vmatprep.subr.mxu0 0.0
        %3609 = vmatpush1.msra.mxu0 0.0
        %3610 = vmatprep.subr.mxu0 0.0
        %3611 = vmatpush1.msra.mxu0 0.0
        %3612 = vmatprep.subr.mxu0 0.0
        %3613 = vmatpush1.msra.mxu0 0.0
        %3614 = vmatprep.subr.mxu0 0.0
        %3615 = vmatpush1.msra.mxu0 0.0
        %3616 = vmatprep.subr.mxu0 0.0
        %3617 = vmatpush1.msra.mxu0 0.0
        %3618 = vmatprep.subr.mxu0 0.0
        %3619 = vmatpush1.msra.mxu0 0.0
        %3620 = vmatprep.subr.mxu0 0.0
        %3621 = vmatpush1.msra.mxu0 0.0
        %3622 = vmatprep.subr.mxu0 0.0
        %3623 = vmatpush1.msra.mxu0 0.0
        %3624 = vmatprep.subr.mxu0 0.0
        %3625 = vmatpush1.msra.mxu0 0.0
        %3626 = vmatprep.subr.mxu0 0.0
        %3627 = vmatpush1.msra.mxu0 0.0
        %3628 = vmatprep.subr.mxu0 0.0
        %3629 = vmatpush1.msra.mxu0 0.0
        %3630 = vmatprep.subr.mxu0 0.0
        %3631 = vmatpush1.msra.mxu0 0.0
        %3632 = vmatprep.subr.mxu0 0.0
        %3633 = vmatpush1.msra.mxu0 0.0
        %3634 = vmatprep.subr.mxu0 0.0
        %3635 = vmatpush1.msra.mxu0 0.0
        %3636 = vmatprep.subr.mxu0 0.0
        %3637 = vmatpush1.msra.mxu0 0.0
        %3638 = vmatprep.mubr.f32.mxu0 0.0
        %v3639 = vand.u32 %v224, 4294901760
        %v3640 = vsub.f32 %v224, %v3639
        %v3641 = vand.u32 %v3640, 4294901760
        %3642 = vmatmul.mubr.f32.gmra.mrb[0].mxu0 %v3641
        %v3643 = vpop.f32.mrb[0].mxu0
        %v3644 = vadd.f32 %v3562, %v3643
        %v3645 = vpop.f32.mrb[0].mxu0
        %3646 = vmatprep.mubr.f32.mxu0 0.0
        %v3647 = vand.u32 %v227, 4294901760
        %v3648 = vsub.f32 %v227, %v3647
        %v3649 = vand.u32 %v3648, 4294901760
        %3650 = vmatmul.mubr.f32.gmra.mrb[0].mxu0 %v3649
        %v3651 = vpop.f32.mrb[0].mxu0
        %v3652 = vadd.f32 %v3569, %v3651
        %v3653 = vpop.f32.mrb[0].mxu0
        %3654 = vdwg.mxu0
        %3655 = vmatprep.subr.mxu0 0.0
        %v3656 = vand.u32 %v3313, 4294901760
        %v3657 = vsub.f32 %v3313, %v3656
        %v3658 = vand.u32 %v3657, 4294901760
        %3659 = vmatpush1.msra.mxu0 %v3658
        %3660 = vmatprep.subr.mxu0 0.0
        %v3661 = vand.u32 %v3314, 4294901760
        %v3662 = vsub.f32 %v3314, %v3661
        %v3663 = vand.u32 %v3662, 4294901760
        %3664 = vmatpush1.msra.mxu0 %v3663
        %3665 = vmatprep.subr.mxu0 0.0
        %3666 = vmatpush1.msra.mxu0 0.0
        %3667 = vmatprep.subr.mxu0 0.0
        %3668 = vmatpush1.msra.mxu0 0.0
        %3669 = vmatprep.subr.mxu0 0.0
        %3670 = vmatpush1.msra.mxu0 0.0
        %3671 = vmatprep.subr.mxu0 0.0
        %3672 = vmatpush1.msra.mxu0 0.0
        %3673 = vmatprep.subr.mxu0 0.0
        %3674 = vmatpush1.msra.mxu0 0.0
        %3675 = vmatprep.subr.mxu0 0.0
        %3676 = vmatpush1.msra.mxu0 0.0
        %3677 = vmatprep.subr.mxu0 0.0
        %3678 = vmatpush1.msra.mxu0 0.0
        %3679 = vmatprep.subr.mxu0 0.0
        %3680 = vmatpush1.msra.mxu0 0.0
        %3681 = vmatprep.subr.mxu0 0.0
        %3682 = vmatpush1.msra.mxu0 0.0
        %3683 = vmatprep.subr.mxu0 0.0
        %3684 = vmatpush1.msra.mxu0 0.0
        %3685 = vmatprep.subr.mxu0 0.0
        %3686 = vmatpush1.msra.mxu0 0.0
        %3687 = vmatprep.subr.mxu0 0.0
        %3688 = vmatpush1.msra.mxu0 0.0
        %3689 = vmatprep.subr.mxu0 0.0
        %3690 = vmatpush1.msra.mxu0 0.0
        %3691 = vmatprep.subr.mxu0 0.0
        %3692 = vmatpush1.msra.mxu0 0.0
        %3693 = vmatprep.subr.mxu0 0.0
        %3694 = vmatpush1.msra.mxu0 0.0
        %3695 = vmatprep.subr.mxu0 0.0
        %3696 = vmatpush1.msra.mxu0 0.0
        %3697 = vmatprep.subr.mxu0 0.0
        %3698 = vmatpush1.msra.mxu0 0.0
        %3699 = vmatprep.subr.mxu0 0.0
        %3700 = vmatpush1.msra.mxu0 0.0
        %3701 = vmatprep.subr.mxu0 0.0
        %3702 = vmatpush1.msra.mxu0 0.0
        %3703 = vmatprep.subr.mxu0 0.0
        %3704 = vmatpush1.msra.mxu0 0.0
        %3705 = vmatprep.subr.mxu0 0.0
        %3706 = vmatpush1.msra.mxu0 0.0
        %3707 = vmatprep.subr.mxu0 0.0
        %3708 = vmatpush1.msra.mxu0 0.0
        %3709 = vmatprep.subr.mxu0 0.0
        %3710 = vmatpush1.msra.mxu0 0.0
        %3711 = vmatprep.subr.mxu0 0.0
        %3712 = vmatpush1.msra.mxu0 0.0
        %3713 = vmatprep.subr.mxu0 0.0
        %3714 = vmatpush1.msra.mxu0 0.0
        %3715 = vmatprep.subr.mxu0 0.0
        %3716 = vmatpush1.msra.mxu0 0.0
        %3717 = vmatprep.subr.mxu0 0.0
        %3718 = vmatpush1.msra.mxu0 0.0
        %3719 = vmatprep.subr.mxu0 0.0
        %3720 = vmatpush1.msra.mxu0 0.0
        %3721 = vmatprep.subr.mxu0 0.0
        %3722 = vmatpush1.msra.mxu0 0.0
        %3723 = vmatprep.subr.mxu0 0.0
        %3724 = vmatpush1.msra.mxu0 0.0
        %3725 = vmatprep.mubr.f32.mxu0 0.0
        %v3726 = vand.u32 %v224, 4294901760
        %3727 = vmatmul.mubr.f32.gmra.mrb[0].mxu0 %v3726
        %v3728 = vpop.f32.mrb[0].mxu0
        %v3729 = vadd.f32 %v3644, %v3728
        %v3730 = vpop.f32.mrb[0].mxu0
        %3731 = vmatprep.mubr.f32.mxu0 0.0
        %v3732 = vand.u32 %v227, 4294901760
        %3733 = vmatmul.mubr.f32.gmra.mrb[0].mxu0 %v3732
        %v3734 = vpop.f32.mrb[0].mxu0
        %v3735 = vadd.f32 %v3652, %v3734
        %v3736 = vpop.f32.mrb[0].mxu0
        %3737 = vdwg.mxu0
        %3738 = vmatprep.subr.mxu0 0.0
        %v3739 = vand.u32 %v3313, 4294901760
        %3740 = vmatpush1.msra.mxu0 %v3739
        %3741 = vmatprep.subr.mxu0 0.0
        %v3742 = vand.u32 %v3314, 4294901760
        %3743 = vmatpush1.msra.mxu0 %v3742
        %3744 = vmatprep.subr.mxu0 0.0
        %3745 = vmatpush1.msra.mxu0 0.0
        %3746 = vmatprep.subr.mxu0 0.0
        %3747 = vmatpush1.msra.mxu0 0.0
        %3748 = vmatprep.subr.mxu0 0.0
        %3749 = vmatpush1.msra.mxu0 0.0
        %3750 = vmatprep.subr.mxu0 0.0
        %3751 = vmatpush1.msra.mxu0 0.0
        %3752 = vmatprep.subr.mxu0 0.0
        %3753 = vmatpush1.msra.mxu0 0.0
        %3754 = vmatprep.subr.mxu0 0.0
        %3755 = vmatpush1.msra.mxu0 0.0
        %3756 = vmatprep.subr.mxu0 0.0
        %3757 = vmatpush1.msra.mxu0 0.0
        %3758 = vmatprep.subr.mxu0 0.0
        %3759 = vmatpush1.msra.mxu0 0.0
        %3760 = vmatprep.subr.mxu0 0.0
        %3761 = vmatpush1.msra.mxu0 0.0
        %3762 = vmatprep.subr.mxu0 0.0
        %3763 = vmatpush1.msra.mxu0 0.0
        %3764 = vmatprep.subr.mxu0 0.0
        %3765 = vmatpush1.msra.mxu0 0.0
        %3766 = vmatprep.subr.mxu0 0.0
        %3767 = vmatpush1.msra.mxu0 0.0
        %3768 = vmatprep.subr.mxu0 0.0
        %3769 = vmatpush1.msra.mxu0 0.0
        %3770 = vmatprep.subr.mxu0 0.0
        %3771 = vmatpush1.msra.mxu0 0.0
        %3772 = vmatprep.subr.mxu0 0.0
        %3773 = vmatpush1.msra.mxu0 0.0
        %3774 = vmatprep.subr.mxu0 0.0
        %3775 = vmatpush1.msra.mxu0 0.0
        %3776 = vmatprep.subr.mxu0 0.0
        %3777 = vmatpush1.msra.mxu0 0.0
        %3778 = vmatprep.subr.mxu0 0.0
        %3779 = vmatpush1.msra.mxu0 0.0
        %3780 = vmatprep.subr.mxu0 0.0
        %3781 = vmatpush1.msra.mxu0 0.0
        %3782 = vmatprep.subr.mxu0 0.0
        %3783 = vmatpush1.msra.mxu0 0.0
        %3784 = vmatprep.subr.mxu0 0.0
        %3785 = vmatpush1.msra.mxu0 0.0
        %3786 = vmatprep.subr.mxu0 0.0
        %3787 = vmatpush1.msra.mxu0 0.0
        %3788 = vmatprep.subr.mxu0 0.0
        %3789 = vmatpush1.msra.mxu0 0.0
        %3790 = vmatprep.subr.mxu0 0.0
        %3791 = vmatpush1.msra.mxu0 0.0
        %3792 = vmatprep.subr.mxu0 0.0
        %3793 = vmatpush1.msra.mxu0 0.0
        %3794 = vmatprep.subr.mxu0 0.0
        %3795 = vmatpush1.msra.mxu0 0.0
        %3796 = vmatprep.subr.mxu0 0.0
        %3797 = vmatpush1.msra.mxu0 0.0
        %3798 = vmatprep.subr.mxu0 0.0
        %3799 = vmatpush1.msra.mxu0 0.0
        %3800 = vmatprep.subr.mxu0 0.0
        %3801 = vmatpush1.msra.mxu0 0.0
        %3802 = vmatprep.subr.mxu0 0.0
        %3803 = vmatpush1.msra.mxu0 0.0
        %3804 = vmatprep.mubr.f32.mxu0 0.0
        %v3805 = vand.u32 %v224, 4294901760
        %3806 = vmatmul.mubr.f32.gmra.mrb[0].mxu0 %v3805
        %v3807 = vpop.f32.mrb[0].mxu0
        %v3808 = vadd.f32 %v3729, %v3807
        %v3809 = vpop.f32.mrb[0].mxu0
        %3810 = vmatprep.mubr.f32.mxu0 0.0
        %v3811 = vand.u32 %v227, 4294901760
        %3812 = vmatmul.mubr.f32.gmra.mrb[0].mxu0 %v3811
        %v3813 = vpop.f32.mrb[0].mxu0
        %v3814 = vadd.f32 %v3735, %v3813
        %v3815 = vpop.f32.mrb[0].mxu0
        %3816 = vdwg.mxu0
        %v3818 = vsel %vm222, %v3808, 0
        %v3821 = vsel %vm222, %v3814, 0
        %3823 = vmatprep.subr.mxu0 0.0
        %v3824 = vand.u32 %v210, 4294901760
        %3825 = vmatpush1.msra.mxu0 %v3824
        %3826 = vmatprep.subr.mxu0 0.0
        %v3827 = vand.u32 %v211, 4294901760
        %3828 = vmatpush1.msra.mxu0 %v3827
        %3829 = vmatprep.subr.mxu0 0.0
        %3830 = vmatpush1.msra.mxu0 0.0
        %3831 = vmatprep.subr.mxu0 0.0
        %3832 = vmatpush1.msra.mxu0 0.0
        %3833 = vmatprep.subr.mxu0 0.0
        %3834 = vmatpush1.msra.mxu0 0.0
        %3835 = vmatprep.subr.mxu0 0.0
        %3836 = vmatpush1.msra.mxu0 0.0
        %3837 = vmatprep.subr.mxu0 0.0
        %3838 = vmatpush1.msra.mxu0 0.0
        %3839 = vmatprep.subr.mxu0 0.0
        %3840 = vmatpush1.msra.mxu0 0.0
        %3841 = vmatprep.subr.mxu0 0.0
        %3842 = vmatpush1.msra.mxu0 0.0
        %3843 = vmatprep.subr.mxu0 0.0
        %3844 = vmatpush1.msra.mxu0 0.0
        %3845 = vmatprep.subr.mxu0 0.0
        %3846 = vmatpush1.msra.mxu0 0.0
        %3847 = vmatprep.subr.mxu0 0.0
        %3848 = vmatpush1.msra.mxu0 0.0
        %3849 = vmatprep.subr.mxu0 0.0
        %3850 = vmatpush1.msra.mxu0 0.0
        %3851 = vmatprep.subr.mxu0 0.0
        %3852 = vmatpush1.msra.mxu0 0.0
        %3853 = vmatprep.subr.mxu0 0.0
        %3854 = vmatpush1.msra.mxu0 0.0
        %3855 = vmatprep.subr.mxu0 0.0
        %3856 = vmatpush1.msra.mxu0 0.0
        %3857 = vmatprep.subr.mxu0 0.0
        %3858 = vmatpush1.msra.mxu0 0.0
        %3859 = vmatprep.subr.mxu0 0.0
        %3860 = vmatpush1.msra.mxu0 0.0
        %3861 = vmatprep.subr.mxu0 0.0
        %3862 = vmatpush1.msra.mxu0 0.0
        %3863 = vmatprep.subr.mxu0 0.0
        %3864 = vmatpush1.msra.mxu0 0.0
        %3865 = vmatprep.subr.mxu0 0.0
        %3866 = vmatpush1.msra.mxu0 0.0
        %3867 = vmatprep.subr.mxu0 0.0
        %3868 = vmatpush1.msra.mxu0 0.0
        %3869 = vmatprep.subr.mxu0 0.0
        %3870 = vmatpush1.msra.mxu0 0.0
        %3871 = vmatprep.subr.mxu0 0.0
        %3872 = vmatpush1.msra.mxu0 0.0
        %3873 = vmatprep.subr.mxu0 0.0
        %3874 = vmatpush1.msra.mxu0 0.0
        %3875 = vmatprep.subr.mxu0 0.0
        %3876 = vmatpush1.msra.mxu0 0.0
        %3877 = vmatprep.subr.mxu0 0.0
        %3878 = vmatpush1.msra.mxu0 0.0
        %3879 = vmatprep.subr.mxu0 0.0
        %3880 = vmatpush1.msra.mxu0 0.0
        %3881 = vmatprep.subr.mxu0 0.0
        %3882 = vmatpush1.msra.mxu0 0.0
        %3883 = vmatprep.subr.mxu0 0.0
        %3884 = vmatpush1.msra.mxu0 0.0
        %3885 = vmatprep.subr.mxu0 0.0
        %3886 = vmatpush1.msra.mxu0 0.0
        %3887 = vmatprep.subr.mxu0 0.0
        %3888 = vmatpush1.msra.mxu0 0.0
        %3889 = vmatprep.mubr.f32.mxu0 0.0
        %v3890 = vand.u32 %v3818, 4294901760
        %v3891 = vsub.f32 %v3818, %v3890
        %v3892 = vand.u32 %v3891, 4294901760
        %v3893 = vsub.f32 %v3891, %v3892
        %v3894 = vand.u32 %v3893, 4294901760
        %3895 = vmatmul.mubr.f32.gmra.mrb[0].mxu0 %v3894
        %v3896 = vpop.f32.mrb[0].mxu0
        %v3897 = vadd.f32 0.0, %v3896
        %v3898 = vpop.f32.mrb[0].mxu0
        %3899 = vmatprep.mubr.f32.mxu0 0.0
        %v3900 = vand.u32 %v3821, 4294901760
        %v3901 = vsub.f32 %v3821, %v3900
        %v3902 = vand.u32 %v3901, 4294901760
        %v3903 = vsub.f32 %v3901, %v3902
        %v3904 = vand.u32 %v3903, 4294901760
        %3905 = vmatmul.mubr.f32.gmra.mrb[0].mxu0 %v3904
        %v3906 = vpop.f32.mrb[0].mxu0
        %v3907 = vadd.f32 0.0, %v3906
        %v3908 = vpop.f32.mrb[0].mxu0
        %3909 = vdwg.mxu0
        %3910 = vmatprep.subr.mxu0 0.0
        %v3911 = vand.u32 %v210, 4294901760
        %v3912 = vsub.f32 %v210, %v3911
        %v3913 = vand.u32 %v3912, 4294901760
        %v3914 = vsub.f32 %v3912, %v3913
        %v3915 = vand.u32 %v3914, 4294901760
        %3916 = vmatpush1.msra.mxu0 %v3915
        %3917 = vmatprep.subr.mxu0 0.0
        %v3918 = vand.u32 %v211, 4294901760
        %v3919 = vsub.f32 %v211, %v3918
        %v3920 = vand.u32 %v3919, 4294901760
        %v3921 = vsub.f32 %v3919, %v3920
        %v3922 = vand.u32 %v3921, 4294901760
        %3923 = vmatpush1.msra.mxu0 %v3922
        %3924 = vmatprep.subr.mxu0 0.0
        %3925 = vmatpush1.msra.mxu0 0.0
        %3926 = vmatprep.subr.mxu0 0.0
        %3927 = vmatpush1.msra.mxu0 0.0
        %3928 = vmatprep.subr.mxu0 0.0
        %3929 = vmatpush1.msra.mxu0 0.0
        %3930 = vmatprep.subr.mxu0 0.0
        %3931 = vmatpush1.msra.mxu0 0.0
        %3932 = vmatprep.subr.mxu0 0.0
        %3933 = vmatpush1.msra.mxu0 0.0
        %3934 = vmatprep.subr.mxu0 0.0
        %3935 = vmatpush1.msra.mxu0 0.0
        %3936 = vmatprep.subr.mxu0 0.0
        %3937 = vmatpush1.msra.mxu0 0.0
        %3938 = vmatprep.subr.mxu0 0.0
        %3939 = vmatpush1.msra.mxu0 0.0
        %3940 = vmatprep.subr.mxu0 0.0
        %3941 = vmatpush1.msra.mxu0 0.0
        %3942 = vmatprep.subr.mxu0 0.0
        %3943 = vmatpush1.msra.mxu0 0.0
        %3944 = vmatprep.subr.mxu0 0.0
        %3945 = vmatpush1.msra.mxu0 0.0
        %3946 = vmatprep.subr.mxu0 0.0
        %3947 = vmatpush1.msra.mxu0 0.0
        %3948 = vmatprep.subr.mxu0 0.0
        %3949 = vmatpush1.msra.mxu0 0.0
        %3950 = vmatprep.subr.mxu0 0.0
        %3951 = vmatpush1.msra.mxu0 0.0
        %3952 = vmatprep.subr.mxu0 0.0
        %3953 = vmatpush1.msra.mxu0 0.0
        %3954 = vmatprep.subr.mxu0 0.0
        %3955 = vmatpush1.msra.mxu0 0.0
        %3956 = vmatprep.subr.mxu0 0.0
        %3957 = vmatpush1.msra.mxu0 0.0
        %3958 = vmatprep.subr.mxu0 0.0
        %3959 = vmatpush1.msra.mxu0 0.0
        %3960 = vmatprep.subr.mxu0 0.0
        %3961 = vmatpush1.msra.mxu0 0.0
        %3962 = vmatprep.subr.mxu0 0.0
        %3963 = vmatpush1.msra.mxu0 0.0
        %3964 = vmatprep.subr.mxu0 0.0
        %3965 = vmatpush1.msra.mxu0 0.0
        %3966 = vmatprep.subr.mxu0 0.0
        %3967 = vmatpush1.msra.mxu0 0.0
        %3968 = vmatprep.subr.mxu0 0.0
        %3969 = vmatpush1.msra.mxu0 0.0
        %3970 = vmatprep.subr.mxu0 0.0
        %3971 = vmatpush1.msra.mxu0 0.0
        %3972 = vmatprep.subr.mxu0 0.0
        %3973 = vmatpush1.msra.mxu0 0.0
        %3974 = vmatprep.subr.mxu0 0.0
        %3975 = vmatpush1.msra.mxu0 0.0
        %3976 = vmatprep.subr.mxu0 0.0
        %3977 = vmatpush1.msra.mxu0 0.0
        %3978 = vmatprep.subr.mxu0 0.0
        %3979 = vmatpush1.msra.mxu0 0.0
        %3980 = vmatprep.subr.mxu0 0.0
        %3981 = vmatpush1.msra.mxu0 0.0
        %3982 = vmatprep.subr.mxu0 0.0
        %3983 = vmatpush1.msra.mxu0 0.0
        %3984 = vmatprep.mubr.f32.mxu0 0.0
        %v3985 = vand.u32 %v3818, 4294901760
        %3986 = vmatmul.mubr.f32.gmra.mrb[0].mxu0 %v3985
        %v3987 = vpop.f32.mrb[0].mxu0
        %v3988 = vadd.f32 %v3897, %v3987
        %v3989 = vpop.f32.mrb[0].mxu0
        %3990 = vmatprep.mubr.f32.mxu0 0.0
        %v3991 = vand.u32 %v3821, 4294901760
        %3992 = vmatmul.mubr.f32.gmra.mrb[0].mxu0 %v3991
        %v3993 = vpop.f32.mrb[0].mxu0
        %v3994 = vadd.f32 %v3907, %v3993
        %v3995 = vpop.f32.mrb[0].mxu0
        %3996 = vdwg.mxu0
        %3997 = vmatprep.subr.mxu0 0.0
        %v3998 = vand.u32 %v210, 4294901760
        %v3999 = vsub.f32 %v210, %v3998
        %4000 = vmatpush1.msra.mxu0 %v3999
        %4001 = vmatprep.subr.mxu0 0.0
        %v4002 = vand.u32 %v211, 4294901760
        %v4003 = vsub.f32 %v211, %v4002
        %4004 = vmatpush1.msra.mxu0 %v4003
        %4005 = vmatprep.subr.mxu0 0.0
        %4006 = vmatpush1.msra.mxu0 0.0
        %4007 = vmatprep.subr.mxu0 0.0
        %4008 = vmatpush1.msra.mxu0 0.0
        %4009 = vmatprep.subr.mxu0 0.0
        %4010 = vmatpush1.msra.mxu0 0.0
        %4011 = vmatprep.subr.mxu0 0.0
        %4012 = vmatpush1.msra.mxu0 0.0
        %4013 = vmatprep.subr.mxu0 0.0
        %4014 = vmatpush1.msra.mxu0 0.0
        %4015 = vmatprep.subr.mxu0 0.0
        %4016 = vmatpush1.msra.mxu0 0.0
        %4017 = vmatprep.subr.mxu0 0.0
        %4018 = vmatpush1.msra.mxu0 0.0
        %4019 = vmatprep.subr.mxu0 0.0
        %4020 = vmatpush1.msra.mxu0 0.0
        %4021 = vmatprep.subr.mxu0 0.0
        %4022 = vmatpush1.msra.mxu0 0.0
        %4023 = vmatprep.subr.mxu0 0.0
        %4024 = vmatpush1.msra.mxu0 0.0
        %4025 = vmatprep.subr.mxu0 0.0
        %4026 = vmatpush1.msra.mxu0 0.0
        %4027 = vmatprep.subr.mxu0 0.0
        %4028 = vmatpush1.msra.mxu0 0.0
        %4029 = vmatprep.subr.mxu0 0.0
        %4030 = vmatpush1.msra.mxu0 0.0
        %4031 = vmatprep.subr.mxu0 0.0
        %4032 = vmatpush1.msra.mxu0 0.0
        %4033 = vmatprep.subr.mxu0 0.0
        %4034 = vmatpush1.msra.mxu0 0.0
        %4035 = vmatprep.subr.mxu0 0.0
        %4036 = vmatpush1.msra.mxu0 0.0
        %4037 = vmatprep.subr.mxu0 0.0
        %4038 = vmatpush1.msra.mxu0 0.0
        %4039 = vmatprep.subr.mxu0 0.0
        %4040 = vmatpush1.msra.mxu0 0.0
        %4041 = vmatprep.subr.mxu0 0.0
        %4042 = vmatpush1.msra.mxu0 0.0
        %4043 = vmatprep.subr.mxu0 0.0
        %4044 = vmatpush1.msra.mxu0 0.0
        %4045 = vmatprep.subr.mxu0 0.0
        %4046 = vmatpush1.msra.mxu0 0.0
        %4047 = vmatprep.subr.mxu0 0.0
        %4048 = vmatpush1.msra.mxu0 0.0
        %4049 = vmatprep.subr.mxu0 0.0
        %4050 = vmatpush1.msra.mxu0 0.0
        %4051 = vmatprep.subr.mxu0 0.0
        %4052 = vmatpush1.msra.mxu0 0.0
        %4053 = vmatprep.subr.mxu0 0.0
        %4054 = vmatpush1.msra.mxu0 0.0
        %4055 = vmatprep.subr.mxu0 0.0
        %4056 = vmatpush1.msra.mxu0 0.0
        %4057 = vmatprep.subr.mxu0 0.0
        %4058 = vmatpush1.msra.mxu0 0.0
        %4059 = vmatprep.subr.mxu0 0.0
        %4060 = vmatpush1.msra.mxu0 0.0
        %4061 = vmatprep.subr.mxu0 0.0
        %4062 = vmatpush1.msra.mxu0 0.0
        %4063 = vmatprep.subr.mxu0 0.0
        %4064 = vmatpush1.msra.mxu0 0.0
        %4065 = vmatprep.mubr.f32.mxu0 0.0
        %v4066 = vand.u32 %v3818, 4294901760
        %v4067 = vsub.f32 %v3818, %v4066
        %4068 = vmatmul.mubr.f32.gmra.mrb[0].mxu0 %v4067
        %v4069 = vpop.f32.mrb[0].mxu0
        %v4070 = vadd.f32 %v3988, %v4069
        %v4071 = vpop.f32.mrb[0].mxu0
        %4072 = vmatprep.mubr.f32.mxu0 0.0
        %v4073 = vand.u32 %v3821, 4294901760
        %v4074 = vsub.f32 %v3821, %v4073
        %4075 = vmatmul.mubr.f32.gmra.mrb[0].mxu0 %v4074
        %v4076 = vpop.f32.mrb[0].mxu0
        %v4077 = vadd.f32 %v3994, %v4076
        %v4078 = vpop.f32.mrb[0].mxu0
        %4079 = vdwg.mxu0
        %4080 = vmatprep.subr.mxu0 0.0
        %v4081 = vand.u32 %v210, 4294901760
        %4082 = vmatpush1.msra.mxu0 %v4081
        %4083 = vmatprep.subr.mxu0 0.0
        %v4084 = vand.u32 %v211, 4294901760
        %4085 = vmatpush1.msra.mxu0 %v4084
        %4086 = vmatprep.subr.mxu0 0.0
        %4087 = vmatpush1.msra.mxu0 0.0
        %4088 = vmatprep.subr.mxu0 0.0
        %4089 = vmatpush1.msra.mxu0 0.0
        %4090 = vmatprep.subr.mxu0 0.0
        %4091 = vmatpush1.msra.mxu0 0.0
        %4092 = vmatprep.subr.mxu0 0.0
        %4093 = vmatpush1.msra.mxu0 0.0
        %4094 = vmatprep.subr.mxu0 0.0
        %4095 = vmatpush1.msra.mxu0 0.0
        %4096 = vmatprep.subr.mxu0 0.0
        %4097 = vmatpush1.msra.mxu0 0.0
        %4098 = vmatprep.subr.mxu0 0.0
        %4099 = vmatpush1.msra.mxu0 0.0
        %4100 = vmatprep.subr.mxu0 0.0
        %4101 = vmatpush1.msra.mxu0 0.0
        %4102 = vmatprep.subr.mxu0 0.0
        %4103 = vmatpush1.msra.mxu0 0.0
        %4104 = vmatprep.subr.mxu0 0.0
        %4105 = vmatpush1.msra.mxu0 0.0
        %4106 = vmatprep.subr.mxu0 0.0
        %4107 = vmatpush1.msra.mxu0 0.0
        %4108 = vmatprep.subr.mxu0 0.0
        %4109 = vmatpush1.msra.mxu0 0.0
        %4110 = vmatprep.subr.mxu0 0.0
        %4111 = vmatpush1.msra.mxu0 0.0
        %4112 = vmatprep.subr.mxu0 0.0
        %4113 = vmatpush1.msra.mxu0 0.0
        %4114 = vmatprep.subr.mxu0 0.0
        %4115 = vmatpush1.msra.mxu0 0.0
        %4116 = vmatprep.subr.mxu0 0.0
        %4117 = vmatpush1.msra.mxu0 0.0
        %4118 = vmatprep.subr.mxu0 0.0
        %4119 = vmatpush1.msra.mxu0 0.0
        %4120 = vmatprep.subr.mxu0 0.0
        %4121 = vmatpush1.msra.mxu0 0.0
        %4122 = vmatprep.subr.mxu0 0.0
        %4123 = vmatpush1.msra.mxu0 0.0
        %4124 = vmatprep.subr.mxu0 0.0
        %4125 = vmatpush1.msra.mxu0 0.0
        %4126 = vmatprep.subr.mxu0 0.0
        %4127 = vmatpush1.msra.mxu0 0.0
        %4128 = vmatprep.subr.mxu0 0.0
        %4129 = vmatpush1.msra.mxu0 0.0
        %4130 = vmatprep.subr.mxu0 0.0
        %4131 = vmatpush1.msra.mxu0 0.0
        %4132 = vmatprep.subr.mxu0 0.0
        %4133 = vmatpush1.msra.mxu0 0.0
        %4134 = vmatprep.subr.mxu0 0.0
        %4135 = vmatpush1.msra.mxu0 0.0
        %4136 = vmatprep.subr.mxu0 0.0
        %4137 = vmatpush1.msra.mxu0 0.0
        %4138 = vmatprep.subr.mxu0 0.0
        %4139 = vmatpush1.msra.mxu0 0.0
        %4140 = vmatprep.subr.mxu0 0.0
        %4141 = vmatpush1.msra.mxu0 0.0
        %4142 = vmatprep.subr.mxu0 0.0
        %4143 = vmatpush1.msra.mxu0 0.0
        %4144 = vmatprep.subr.mxu0 0.0
        %4145 = vmatpush1.msra.mxu0 0.0
        %4146 = vmatprep.mubr.f32.mxu0 0.0
        %v4147 = vand.u32 %v3818, 4294901760
        %v4148 = vsub.f32 %v3818, %v4147
        %v4149 = vand.u32 %v4148, 4294901760
        %4150 = vmatmul.mubr.f32.gmra.mrb[0].mxu0 %v4149
        %v4151 = vpop.f32.mrb[0].mxu0
        %v4152 = vadd.f32 %v4070, %v4151
        %v4153 = vpop.f32.mrb[0].mxu0
        %4154 = vmatprep.mubr.f32.mxu0 0.0
        %v4155 = vand.u32 %v3821, 4294901760
        %v4156 = vsub.f32 %v3821, %v4155
        %v4157 = vand.u32 %v4156, 4294901760
        %4158 = vmatmul.mubr.f32.gmra.mrb[0].mxu0 %v4157
        %v4159 = vpop.f32.mrb[0].mxu0
        %v4160 = vadd.f32 %v4077, %v4159
        %v4161 = vpop.f32.mrb[0].mxu0
        %4162 = vdwg.mxu0
        %4163 = vmatprep.subr.mxu0 0.0
        %v4164 = vand.u32 %v210, 4294901760
        %v4165 = vsub.f32 %v210, %v4164
        %v4166 = vand.u32 %v4165, 4294901760
        %4167 = vmatpush1.msra.mxu0 %v4166
        %4168 = vmatprep.subr.mxu0 0.0
        %v4169 = vand.u32 %v211, 4294901760
        %v4170 = vsub.f32 %v211, %v4169
        %v4171 = vand.u32 %v4170, 4294901760
        %4172 = vmatpush1.msra.mxu0 %v4171
        %4173 = vmatprep.subr.mxu0 0.0
        %4174 = vmatpush1.msra.mxu0 0.0
        %4175 = vmatprep.subr.mxu0 0.0
        %4176 = vmatpush1.msra.mxu0 0.0
        %4177 = vmatprep.subr.mxu0 0.0
        %4178 = vmatpush1.msra.mxu0 0.0
        %4179 = vmatprep.subr.mxu0 0.0
        %4180 = vmatpush1.msra.mxu0 0.0
        %4181 = vmatprep.subr.mxu0 0.0
        %4182 = vmatpush1.msra.mxu0 0.0
        %4183 = vmatprep.subr.mxu0 0.0
        %4184 = vmatpush1.msra.mxu0 0.0
        %4185 = vmatprep.subr.mxu0 0.0
        %4186 = vmatpush1.msra.mxu0 0.0
        %4187 = vmatprep.subr.mxu0 0.0
        %4188 = vmatpush1.msra.mxu0 0.0
        %4189 = vmatprep.subr.mxu0 0.0
        %4190 = vmatpush1.msra.mxu0 0.0
        %4191 = vmatprep.subr.mxu0 0.0
        %4192 = vmatpush1.msra.mxu0 0.0
        %4193 = vmatprep.subr.mxu0 0.0
        %4194 = vmatpush1.msra.mxu0 0.0
        %4195 = vmatprep.subr.mxu0 0.0
        %4196 = vmatpush1.msra.mxu0 0.0
        %4197 = vmatprep.subr.mxu0 0.0
        %4198 = vmatpush1.msra.mxu0 0.0
        %4199 = vmatprep.subr.mxu0 0.0
        %4200 = vmatpush1.msra.mxu0 0.0
        %4201 = vmatprep.subr.mxu0 0.0
        %4202 = vmatpush1.msra.mxu0 0.0
        %4203 = vmatprep.subr.mxu0 0.0
        %4204 = vmatpush1.msra.mxu0 0.0
        %4205 = vmatprep.subr.mxu0 0.0
        %4206 = vmatpush1.msra.mxu0 0.0
        %4207 = vmatprep.subr.mxu0 0.0
        %4208 = vmatpush1.msra.mxu0 0.0
        %4209 = vmatprep.subr.mxu0 0.0
        %4210 = vmatpush1.msra.mxu0 0.0
        %4211 = vmatprep.subr.mxu0 0.0
        %4212 = vmatpush1.msra.mxu0 0.0
        %4213 = vmatprep.subr.mxu0 0.0
        %4214 = vmatpush1.msra.mxu0 0.0
        %4215 = vmatprep.subr.mxu0 0.0
        %4216 = vmatpush1.msra.mxu0 0.0
        %4217 = vmatprep.subr.mxu0 0.0
        %4218 = vmatpush1.msra.mxu0 0.0
        %4219 = vmatprep.subr.mxu0 0.0
        %4220 = vmatpush1.msra.mxu0 0.0
        %4221 = vmatprep.subr.mxu0 0.0
        %4222 = vmatpush1.msra.mxu0 0.0
        %4223 = vmatprep.subr.mxu0 0.0
        %4224 = vmatpush1.msra.mxu0 0.0
        %4225 = vmatprep.subr.mxu0 0.0
        %4226 = vmatpush1.msra.mxu0 0.0
        %4227 = vmatprep.subr.mxu0 0.0
        %4228 = vmatpush1.msra.mxu0 0.0
        %4229 = vmatprep.subr.mxu0 0.0
        %4230 = vmatpush1.msra.mxu0 0.0
        %4231 = vmatprep.subr.mxu0 0.0
        %4232 = vmatpush1.msra.mxu0 0.0
        %4233 = vmatprep.mubr.f32.mxu0 0.0
        %v4234 = vand.u32 %v3818, 4294901760
        %4235 = vmatmul.mubr.f32.gmra.mrb[0].mxu0 %v4234
        %v4236 = vpop.f32.mrb[0].mxu0
        %v4237 = vadd.f32 %v4152, %v4236
        %v4238 = vpop.f32.mrb[0].mxu0
        %4239 = vmatprep.mubr.f32.mxu0 0.0
        %v4240 = vand.u32 %v3821, 4294901760
        %4241 = vmatmul.mubr.f32.gmra.mrb[0].mxu0 %v4240
        %v4242 = vpop.f32.mrb[0].mxu0
        %v4243 = vadd.f32 %v4160, %v4242
        %v4244 = vpop.f32.mrb[0].mxu0
        %4245 = vdwg.mxu0
        %4246 = vmatprep.subr.mxu0 0.0
        %v4247 = vand.u32 %v210, 4294901760
        %4248 = vmatpush1.msra.mxu0 %v4247
        %4249 = vmatprep.subr.mxu0 0.0
        %v4250 = vand.u32 %v211, 4294901760
        %4251 = vmatpush1.msra.mxu0 %v4250
        %4252 = vmatprep.subr.mxu0 0.0
        %4253 = vmatpush1.msra.mxu0 0.0
        %4254 = vmatprep.subr.mxu0 0.0
        %4255 = vmatpush1.msra.mxu0 0.0
        %4256 = vmatprep.subr.mxu0 0.0
        %4257 = vmatpush1.msra.mxu0 0.0
        %4258 = vmatprep.subr.mxu0 0.0
        %4259 = vmatpush1.msra.mxu0 0.0
        %4260 = vmatprep.subr.mxu0 0.0
        %4261 = vmatpush1.msra.mxu0 0.0
        %4262 = vmatprep.subr.mxu0 0.0
        %4263 = vmatpush1.msra.mxu0 0.0
        %4264 = vmatprep.subr.mxu0 0.0
        %4265 = vmatpush1.msra.mxu0 0.0
        %4266 = vmatprep.subr.mxu0 0.0
        %4267 = vmatpush1.msra.mxu0 0.0
        %4268 = vmatprep.subr.mxu0 0.0
        %4269 = vmatpush1.msra.mxu0 0.0
        %4270 = vmatprep.subr.mxu0 0.0
        %4271 = vmatpush1.msra.mxu0 0.0
        %4272 = vmatprep.subr.mxu0 0.0
        %4273 = vmatpush1.msra.mxu0 0.0
        %4274 = vmatprep.subr.mxu0 0.0
        %4275 = vmatpush1.msra.mxu0 0.0
        %4276 = vmatprep.subr.mxu0 0.0
        %4277 = vmatpush1.msra.mxu0 0.0
        %4278 = vmatprep.subr.mxu0 0.0
        %4279 = vmatpush1.msra.mxu0 0.0
        %4280 = vmatprep.subr.mxu0 0.0
        %4281 = vmatpush1.msra.mxu0 0.0
        %4282 = vmatprep.subr.mxu0 0.0
        %4283 = vmatpush1.msra.mxu0 0.0
        %4284 = vmatprep.subr.mxu0 0.0
        %4285 = vmatpush1.msra.mxu0 0.0
        %4286 = vmatprep.subr.mxu0 0.0
        %4287 = vmatpush1.msra.mxu0 0.0
        %4288 = vmatprep.subr.mxu0 0.0
        %4289 = vmatpush1.msra.mxu0 0.0
        %4290 = vmatprep.subr.mxu0 0.0
        %4291 = vmatpush1.msra.mxu0 0.0
        %4292 = vmatprep.subr.mxu0 0.0
        %4293 = vmatpush1.msra.mxu0 0.0
        %4294 = vmatprep.subr.mxu0 0.0
        %4295 = vmatpush1.msra.mxu0 0.0
        %4296 = vmatprep.subr.mxu0 0.0
        %4297 = vmatpush1.msra.mxu0 0.0
        %4298 = vmatprep.subr.mxu0 0.0
        %4299 = vmatpush1.msra.mxu0 0.0
        %4300 = vmatprep.subr.mxu0 0.0
        %4301 = vmatpush1.msra.mxu0 0.0
        %4302 = vmatprep.subr.mxu0 0.0
        %4303 = vmatpush1.msra.mxu0 0.0
        %4304 = vmatprep.subr.mxu0 0.0
        %4305 = vmatpush1.msra.mxu0 0.0
        %4306 = vmatprep.subr.mxu0 0.0
        %4307 = vmatpush1.msra.mxu0 0.0
        %4308 = vmatprep.subr.mxu0 0.0
        %4309 = vmatpush1.msra.mxu0 0.0
        %4310 = vmatprep.subr.mxu0 0.0
        %4311 = vmatpush1.msra.mxu0 0.0
        %4312 = vmatprep.mubr.f32.mxu0 0.0
        %v4313 = vand.u32 %v3818, 4294901760
        %4314 = vmatmul.mubr.f32.gmra.mrb[0].mxu0 %v4313
        %v4315 = vpop.f32.mrb[0].mxu0
        %v4316 = vadd.f32 %v4237, %v4315
        %v4317 = vpop.f32.mrb[0].mxu0
        %4318 = vmatprep.mubr.f32.mxu0 0.0
        %v4319 = vand.u32 %v3821, 4294901760
        %4320 = vmatmul.mubr.f32.gmra.mrb[0].mxu0 %v4319
        %v4321 = vpop.f32.mrb[0].mxu0
        %v4322 = vadd.f32 %v4243, %v4321
        %v4323 = vpop.f32.mrb[0].mxu0
        %4324 = vdwg.mxu0
        %s4325 = scalar_lea.vmem %s178, 96 [#allocation5]
        %4326 = vst.msk [vmem:[%s4325] sm:$0xff] %vm209, %v4316
        %4328 = vrot.lane.b32.xlu0 %v4316, 120
        %v4329 = vpop.permute.xlu0 %4328
        %s4331 = scalar_lea.vmem %s178, 104 [#allocation5]
        %4332 = vst.msk [vmem:[%s4331] sm:$0xff] %vm209, %v4329
        %s4333 = scalar_lea.vmem %s178, 112 [#allocation5]
        %4334 = vst.msk [vmem:[%s4333] sm:$0xff] %vm209, %v4322
        %4336 = vrot.lane.b32.xlu0 %v4322, 120
        %v4337 = vpop.permute.xlu0 %4336
        %s4339 = scalar_lea.vmem %s178, 120 [#allocation5]
        %4340 = vst.msk [vmem:[%s4339] sm:$0xff] %vm209, %v4337
        %s4341 = sand.u32 %s90, 1
        %s4342 = scalar_lea.sflag [#allocation4], %s4341
        %s4343 = sand.u32 %s90, 1
        %s4344 = smul.addr %s4343, 128
        %s4345 = scalar_lea.vmem [#allocation5], %s4344
        // Predicated region
        $region29: #{tpu_custom_call.1} parent=23 // pred_check
          %p4346 = pneg %p100
        $region30: #{tpu_custom_call.1} parent=23 // pred_check_branch
          %4348 = sbr.rel (%p4346) target = $region32
        $region31: #{tpu_custom_call.1} parent=23 // pred_region
          %s4349 = smul.u32 4, %s25
          %s4351 = ssub.s32 2048, 2048
          %4352 = vsyncadd %s4342, %s4351
          %s4353 = sadd.s32 %s27, %s26
          %s4354 = smul.addr %s4349, 4
          %s4355 = sadd.s32 %s4353, %s4354
          %s4356 = smul.addr %s24, 16
          %s4357 = sadd.s32 %s4355, %s4356
          %s4358 = smul.addr %s4357, 128
          %s4359 = scalar_lea.hbm %s1, %s4358
          %s4360 = sshll.u32 %s4345, 4
          %s4361 = int_to_ptr.vmem [resolvable:$true] %s4360
          %4366 = dma.vmem_to_hbm [thread:$0]  %s4361, 2048, %s4359, %s4342, 128, 128, 8
        $region32: #{tpu_custom_call.1} parent=23 // pred_fallthru
          _
      $region24: #{tpu_custom_call.1} parent=5 // pred_fallthru
        _
      %p4367 = scmp.le.s32.totalorder 2, %s13
      // Predicated region
      $region33: #{tpu_custom_call.1} parent=5 // pred_check
        %p4368 = pneg %p4367
      $region34: #{tpu_custom_call.1} parent=5 // pred_check_branch
        %4370 = sbr.rel (%p4368) target = $region36
      $region35: #{tpu_custom_call.1} parent=5 // pred_region
        %s4371 = ssub.s32 %s13, 2
        // Predicated region
        $region37: #{tpu_custom_call.1} parent=35 // pred_check
          %p4372 = pneg %p106
        $region38: #{tpu_custom_call.1} parent=35 // pred_check_branch
          %4374 = sbr.rel (%p4372) target = $region40
        $region39: #{tpu_custom_call.1} parent=35 // pred_region
          %s4375 = sand.u32 %s91, 1
          %s4376 = scalar_lea.sflag [#allocation4], %s4375
          %s4377 = sand.u32 %s91, 1
          %s4378 = smul.addr %s4377, 128
          %s4379 = scalar_lea.vmem [#allocation5], %s4378
          %4380 = dma.done %s4376, 2048
        $region40: #{tpu_custom_call.1} parent=35 // pred_fallthru
          _
      $region36: #{tpu_custom_call.1} parent=5 // pred_fallthru
        _
    $region6: #{tpu_custom_call.1} parent=1 // loop_footer
      %s17 = sadd.s32 1, %s13
    $region7: #{tpu_custom_call.1} parent=1 // loop_footer_branch
      %12 = sbr.rel target = $region3
    $region8: #{tpu_custom_call.1} parent=1 // loop_exit
      _
    %4381 = vsyncpa [#allocation3], 1
    %s4382 = scalar_lea.sflag [#allocation3], 1
    %4383 = vsyncpa %s4382, 1
    %4384 = vsyncpa [#allocation4], 1
    %s4385 = scalar_lea.sflag [#allocation4], 1
    %4386 = vsyncpa %s4385, 1

</llo_original>
